<compile_context>
chip_gen: v5e
topology: v5e:2x2
jax: 0.10.0
libtpu: 0.0.40
codegen_flags: <defaults>
</compile_context>

<pallas_src>
import functools
import math

import jax
import jax.numpy as jnp
from jax.experimental import pallas as pl
from jax.experimental.pallas import tpu as pltpu


def rp_gaussian_pooling_kernel(x_ref, w_ref, o_ref, *, n_rank, n_basis,
                               use_normalization, chunk):
    nb = n_basis
    nb2 = nb * nb
    n_e = n_rank * nb2

    x = x_ref[...]                                    # (D, Tt) f32
    t_tile = x.shape[1]

    # One fused MXU matmul for everything:
    #   rows [0, n_e):              row r*nb2 + i*nb + j = (ce_r*cf_r/n_rank) * E_r[:, i]
    #   rows [n_e, n_e+n_rank*nb):  row n_e + r*nb + j   = F_r[:, j]
    y = jnp.dot(w_ref[...], x,
                preferred_element_type=jnp.float32,
                precision=jax.lax.Precision.HIGHEST)  # (n_e + n_rank*nb, Tt)

    # Lane-chunked accumulate: each output element is written exactly once.
    for c0 in range(0, t_tile, chunk):
        z = jnp.zeros((nb2, chunk), jnp.float32)
        for r in range(n_rank):                       # static unroll, n_rank small
            a = y[r * nb2:(r + 1) * nb2, c0:c0 + chunk]            # (nb2, chunk)
            b = y[n_e + r * nb:n_e + (r + 1) * nb, c0:c0 + chunk]  # (nb, chunk)
            # Tile F rows along the major (sublane-group) axis: vreg copies only.
            z = z + a * jnp.tile(b, (nb, 1))
        if use_normalization:                         # static Python flag
            z = jnp.sign(z) * (jnp.sqrt(jnp.abs(z) + 0.01) - math.sqrt(0.01))
            max_vals = jnp.max(jnp.abs(z), axis=0, keepdims=True)  # (1, chunk)
            z = z * (1.0 / (max_vals + 1e-5))         # one exact reciprocal row
        o_ref[:, c0:c0 + chunk] = z.astype(o_ref.dtype)


def _pick_t_tile(B, T):
    """Largest lane-aligned time tile <= 2048, with >=2 grid steps when possible."""
    t_pad = pl.cdiv(T, 128) * 128
    t_tile = 128
    for cand in (2048, 1024, 512, 256, 128):
        if cand <= t_pad:
            t_tile = cand
            break
    # v7x has 2 TensorCores fed via the "parallel" axes: avoid a (1, 1) grid.
    if B * pl.cdiv(T, t_tile) < 2 and t_tile > 128:
        half = pl.cdiv(pl.cdiv(T, 2), 128) * 128
        t_tile = max(128, min(t_tile, half))
    return t_tile


@functools.partial(jax.jit, static_argnames=("use_normalization",))
def rp_gaussian_pooling(x, E, F, sigma, rho, use_normalization=False):
    """x: (B, D, T) f32 -> (B, n_basis**2, T) f32."""
    B, D, T = x.shape
    n_rank, D2, nb = E.shape
    assert D2 == D and F.shape == E.shape
    nb2 = nb * nb

    t_tile = _pick_t_tile(B, T)
    chunk = min(256, t_tile)

    # Fold per-rank scales, 1/n_rank AND the outer-product row replication into
    # one stacked projection weight.
    sqrt_d = math.sqrt(D)
    ce = sqrt_d / (1e-5 + jnp.abs(sigma))                    # (n_rank,)
    cf = sqrt_d / (1e-5 + jnp.abs(rho))                      # (n_rank,)
    c = (ce * cf / float(n_rank))[:, None, None]             # (n_rank, 1, 1)
    et = jnp.swapaxes(E, 1, 2) * c                           # (n_rank, nb, D)
    e_rep = jnp.repeat(et, nb, axis=1)                       # (n_rank, nb*nb, D)
    ft = jnp.swapaxes(F, 1, 2)                               # (n_rank, nb, D)
    w = jnp.concatenate(
        [e_rep.reshape(n_rank * nb2, D), ft.reshape(n_rank * nb, D)], axis=0)
    w_rows = n_rank * (nb2 + nb)

    kernel = functools.partial(
        rp_gaussian_pooling_kernel,
        n_rank=n_rank, n_basis=nb,
        use_normalization=use_normalization, chunk=chunk)

    # Advisory cost estimate (matmul + elementwise; sqrt counts as transcendental).
    flops = 2 * w_rows * D * T * B + 2 * n_rank * nb2 * T * B
    bytes_accessed = (D + nb2) * T * B * 4 + w_rows * D * 4
    transcendentals = nb2 * T * B if use_normalization else 0

    return pl.pallas_call(
        kernel,
        out_shape=jax.ShapeDtypeStruct((B, nb2, T), jnp.float32),
        grid_spec=pltpu.PrefetchScalarGridSpec(
            num_scalar_prefetch=0,
            grid=(B, pl.cdiv(T, t_tile)),          # ragged last time tile is masked
            in_specs=[
                pl.BlockSpec((pl.Squeezed(), D, t_tile), lambda b, t: (b, 0, t)),
                pl.BlockSpec((w_rows, D), lambda b, t: (0, 0)),
            ],
            out_specs=pl.BlockSpec((pl.Squeezed(), nb2, t_tile),
                                   lambda b, t: (b, 0, t)),
        ),
        compiler_params=pltpu.CompilerParams(
            dimension_semantics=("parallel", "parallel")),
        cost_estimate=pl.CostEstimate(flops=flops,
                                      transcendentals=transcendentals,
                                      bytes_accessed=bytes_accessed),
    )(x, w)


# ---------------- pure-JAX reference (direct transcription of the PyTorch code)
def reference(x, E, F, sigma, rho, use_normalization=False):
    B, D, T = x.shape
    n_rank, _, nb = E.shape
    sqrt_d = math.sqrt(D)
    xt = jnp.transpose(x, (0, 2, 1))                          # (B, T, D)
    z = jnp.zeros((B, nb * nb, T), jnp.float32)
    for r in range(n_rank):
        Er = sqrt_d / (1e-5 + jnp.abs(sigma[r])) * E[r]
        Fr = sqrt_d / (1e-5 + jnp.abs(rho[r])) * F[r]
        xer = jnp.matmul(xt, Er, precision=jax.lax.Precision.HIGHEST)[..., :, None]
        xfr = jnp.matmul(xt, Fr, precision=jax.lax.Precision.HIGHEST)[..., None, :]
        zr = (xer * xfr).reshape(B, T, nb * nb)
        z = z + jnp.transpose(zr, (0, 2, 1))
    out = z / float(n_rank)
    if use_normalization:
        out = jnp.sign(out) * (jnp.sqrt(jnp.abs(out) + 0.01) - math.sqrt(0.01))
        max_vals = jnp.max(jnp.abs(out), axis=1, keepdims=True)
        out = out / (max_vals + 1e-5)
    return out


def init_params(key, n_rank, in_dim, n_basis, init_sigma=None):
    # Mirrors the PyTorch __init__: orthonormal columns via QR, sigma/rho = sqrt(in_dim).
    if init_sigma is None:
        init_sigma = math.sqrt(in_dim)
    kE, kF = jax.random.split(key)
    GE = jax.random.normal(kE, (n_rank, in_dim, in_dim), jnp.float32)
    GF = jax.random.normal(kF, (n_rank, in_dim, in_dim), jnp.float32)
    QE, _ = jnp.linalg.qr(GE)
    QF, _ = jnp.linalg.qr(GF)
    E = QE[:, :, :n_basis]
    F = QF[:, :, :n_basis]
    sigma = jnp.full((n_rank,), init_sigma, jnp.float32)
    rho = jnp.full((n_rank,), init_sigma, jnp.float32)
    return E, F, sigma, rho


if __name__ == "__main__":
    # T deliberately not a multiple of the chosen time tile (exercises the cdiv
    # grid + masked ragged last block).
    B, in_dim, T = 2, 64, 384
    n_rank, n_basis = 4, 8

    key = jax.random.PRNGKey(0)
    kx, kp, ks = jax.random.split(key, 3)
    x = jax.random.normal(kx, (B, in_dim, T), jnp.float32)
    E, F, sigma, rho = init_params(kp, n_rank, in_dim, n_basis)
    # Perturb the learnable scale parameters so the sigma/rho path is exercised.
    sigma = sigma * (1.0 + 0.2 * jax.random.normal(jax.random.fold_in(ks, 0), (n_rank,)))
    rho = rho * (1.0 + 0.2 * jax.random.normal(jax.random.fold_in(ks, 1), (n_rank,)))

    # Validate BOTH normalization branches against the reference.
    for use_norm in (False, True):
        out = jax.block_until_ready(
            rp_gaussian_pooling(x, E, F, sigma, rho, use_normalization=use_norm))
        ref = reference(x, E, F, sigma, rho, use_normalization=use_norm)
        assert out.shape == (B, n_basis ** 2, T)
        assert jnp.allclose(out, ref, atol=2e-4, rtol=2e-4), \
            f"mismatch vs reference (use_normalization={use_norm})"

    print("KERNEL_OK")
</pallas_src>

<mosaic_0001>
module attributes {stable_mosaic.version = 11 : i64} {
  func.func @rp_gaussian_pooling_kernel(%arg0: i32, %arg1: i32, %arg2: memref<1x64x256xf32, #tpu.memory_space<vmem>>, %arg3: memref<288x64xf32, #tpu.memory_space<vmem>>, %arg4: memref<1x64x256xf32, #tpu.memory_space<vmem>>) attributes {dimension_semantics = [#tpu.dimension_semantics<parallel>, #tpu.dimension_semantics<parallel>], iteration_bounds = array<i64: 2, 2>, scalar_prefetch = 0 : i64, scratch_operands = 0 : i64, tpu.core_type = #tpu.core_type<tc>, window_params = [{transform_indices = @transform_0, window_bounds = array<i64: 1, 64, 256>}, {pipeline_mode = #tpu.pipeline_mode<synchronous>, transform_indices = @transform_1, window_bounds = array<i64: 288, 64>}, {transform_indices = @transform_2, window_bounds = array<i64: 1, 64, 256>}]} {
    %c0 = arith.constant 0 : index
    %c0_0 = arith.constant 0 : index
    %c0_1 = arith.constant 0 : index
    %0 = vector.load %arg2[%c0, %c0_0, %c0_1] : memref<1x64x256xf32, #tpu.memory_space<vmem>>, vector<1x64x256xf32>
    %1 = vector.shape_cast %0 : vector<1x64x256xf32> to vector<64x256xf32>
    %c0_2 = arith.constant 0 : index
    %c0_3 = arith.constant 0 : index
    %2 = vector.load %arg3[%c0_2, %c0_3] : memref<288x64xf32, #tpu.memory_space<vmem>>, vector<288x64xf32>
    %cst = arith.constant dense<0.000000e+00> : vector<288x256xf32>
    %3 = tpu.matmul %2, %1, %cst {dimension_numbers = #tpu.dot_dimension_numbers<[1], [0], [0], [1], [0, 0, 1, 1], [], []>, precision = #tpu.contract_precision<fp32>} : vector<288x64xf32>, vector<64x256xf32>, vector<288x256xf32> -> vector<288x256xf32>
    %cst_4 = arith.constant 0.000000e+00 : f32
    %4 = vector.broadcast %cst_4 : f32 to vector<64x256xf32>
    %5 = vector.extract_strided_slice %3 {offsets = [0, 0], sizes = [64, 256], strides = [1, 1]} : vector<288x256xf32> to vector<64x256xf32>
    %6 = vector.extract_strided_slice %3 {offsets = [256, 0], sizes = [8, 256], strides = [1, 1]} : vector<288x256xf32> to vector<8x256xf32>
    %7 = tpu.concatenate %6, %6, %6, %6, %6, %6, %6, %6 in 0 : vector<8x256xf32>, vector<8x256xf32>, vector<8x256xf32>, vector<8x256xf32>, vector<8x256xf32>, vector<8x256xf32>, vector<8x256xf32>, vector<8x256xf32> -> vector<64x256xf32>
    %8 = arith.mulf %5, %7 : vector<64x256xf32>
    %9 = arith.addf %4, %8 : vector<64x256xf32>
    %10 = vector.extract_strided_slice %3 {offsets = [64, 0], sizes = [64, 256], strides = [1, 1]} : vector<288x256xf32> to vector<64x256xf32>
    %11 = vector.extract_strided_slice %3 {offsets = [264, 0], sizes = [8, 256], strides = [1, 1]} : vector<288x256xf32> to vector<8x256xf32>
    %12 = tpu.concatenate %11, %11, %11, %11, %11, %11, %11, %11 in 0 : vector<8x256xf32>, vector<8x256xf32>, vector<8x256xf32>, vector<8x256xf32>, vector<8x256xf32>, vector<8x256xf32>, vector<8x256xf32>, vector<8x256xf32> -> vector<64x256xf32>
    %13 = arith.mulf %10, %12 : vector<64x256xf32>
    %14 = arith.addf %9, %13 : vector<64x256xf32>
    %15 = vector.extract_strided_slice %3 {offsets = [128, 0], sizes = [64, 256], strides = [1, 1]} : vector<288x256xf32> to vector<64x256xf32>
    %16 = vector.extract_strided_slice %3 {offsets = [272, 0], sizes = [8, 256], strides = [1, 1]} : vector<288x256xf32> to vector<8x256xf32>
    %17 = tpu.concatenate %16, %16, %16, %16, %16, %16, %16, %16 in 0 : vector<8x256xf32>, vector<8x256xf32>, vector<8x256xf32>, vector<8x256xf32>, vector<8x256xf32>, vector<8x256xf32>, vector<8x256xf32>, vector<8x256xf32> -> vector<64x256xf32>
    %18 = arith.mulf %15, %17 : vector<64x256xf32>
    %19 = arith.addf %14, %18 : vector<64x256xf32>
    %20 = vector.extract_strided_slice %3 {offsets = [192, 0], sizes = [64, 256], strides = [1, 1]} : vector<288x256xf32> to vector<64x256xf32>
    %21 = vector.extract_strided_slice %3 {offsets = [280, 0], sizes = [8, 256], strides = [1, 1]} : vector<288x256xf32> to vector<8x256xf32>
    %22 = tpu.concatenate %21, %21, %21, %21, %21, %21, %21, %21 in 0 : vector<8x256xf32>, vector<8x256xf32>, vector<8x256xf32>, vector<8x256xf32>, vector<8x256xf32>, vector<8x256xf32>, vector<8x256xf32>, vector<8x256xf32> -> vector<64x256xf32>
    %23 = arith.mulf %20, %22 : vector<64x256xf32>
    %24 = arith.addf %19, %23 : vector<64x256xf32>
    %c0_5 = arith.constant 0 : index
    %c0_6 = arith.constant 0 : index
    %c0_7 = arith.constant 0 : index
    %25 = vector.load %arg4[%c0_5, %c0_6, %c0_7] : memref<1x64x256xf32, #tpu.memory_space<vmem>>, vector<1x64x256xf32>
    %26 = vector.shape_cast %25 : vector<1x64x256xf32> to vector<64x256xf32>
    %27 = vector.shape_cast %24 : vector<64x256xf32> to vector<1x64x256xf32>
    tpu.vector_store %arg4[%c0_5, %c0_6, %c0_7], %27 {strides = array<i32>} : memref<1x64x256xf32, #tpu.memory_space<vmem>>, vector<1x64x256xf32>,
    return
  }
  func.func @transform_0(%arg0: i32, %arg1: i32) -> (i32, i32, i32) {
    %c0_i32 = arith.constant 0 : i32
    %c0_i32_0 = arith.constant 0 : i32
    return %arg0, %c0_i32, %arg1 : i32, i32, i32
  }
  func.func @transform_1(%arg0: i32, %arg1: i32) -> (i32, i32) {
    %c0_i32 = arith.constant 0 : i32
    %c0_i32_0 = arith.constant 0 : i32
    %c0_i32_1 = arith.constant 0 : i32
    return %c0_i32, %c0_i32_0 : i32, i32
  }
  func.func @transform_2(%arg0: i32, %arg1: i32) -> (i32, i32, i32) {
    %c0_i32 = arith.constant 0 : i32
    %c0_i32_0 = arith.constant 0 : i32
    return %arg0, %c0_i32, %arg1 : i32, i32, i32
  }
}

</mosaic_0001>

<llo_original>
// kernel: rp_gaussian_pooling.1
$region0: #{rp_gaussian_pooling.1}
  #allocation0 [shape = 'u32[]', space=smem, size = 0x4, offset = 0x4, fixed_abs, tag = 'smem constant byte address 0x4 - core index']
  #allocation1 [shape = 'u32[72,128]{1,0:T(1,128)}', space=vmem, size = 0x9000, scoped, tag = 'internal scratch']
  %s0 = inlined_call_operand.vmem [shape: f32[2,64,384], index: 0, kind: input, shape index: {}]
  %s1 = inlined_call_operand.vmem [shape: f32[288,64], index: 1, kind: input, shape index: {}]
  %s2 = inlined_call_operand.hbm [shape: f32[2,64,384], index: 2, kind: output, shape index: {}]
  %s3 = sld [smem:[#allocation0]]
  $region107: #{rp_gaussian_pooling.1} parent=0
    _
  %s5 = ssub.s32 1, %s3
  %s6 = scalar_select 0, %s5, %s3
  $region1: #{rp_gaussian_pooling.1} parent=0
    #allocation2 [shape = 'u8[131072]{0}', space=vmem, size = 0x20000, scoped, tag = 'input window, operand 0']
    #allocation3 [shape = 'u8[131072]{0}', space=vmem, size = 0x20000, scoped, tag = 'output window, operand 0']
    #allocation4 [shape = 's32[2]{0}', space=sflag, size = 0x8, scoped, tag = 'scoped memory for rp_gaussian_pooling.1']
    %7 = vsyncpa [#allocation4], 0
    %s8 = scalar_lea.sflag [#allocation4], 1
    %9 = vsyncpa %s8, 0
    loop: start=0, step=1, limit=6
    $region2: #{rp_gaussian_pooling.1} parent=1 // loop_pre_header
      _
    $region3: #{rp_gaussian_pooling.1} parent=1 // loop_header
      %s11 = sphi 0, %s15
      %p12 = scmp.ge.s32.totalorder %s11, 6
      %s18 = sphi 0, %s30
      %s19 = sphi 0, %s26
      %s20 = sphi 0, %s18
      %s21 = sphi 0, %s19
      %s22 = sphi 0, %s20
      %s23 = sphi 0, %s21
      %s35 = sphi 0, %s37
      %s38 = sphi 0, %s35
      %s39 = sphi 0, %s38
      %s55 = sphi 0, %s39
      %s59 = sphi 0, %s59
      %s61 = sphi 0, %s59
      %s62 = sphi 0, %s61
      %s76 = sphi 0, %s62
      %s84 = sphi 0, %s86
      %s87 = sphi 0, %s84
      %s88 = sphi 0, %s87
      %s104 = sphi 0, %s88
    $region4: #{rp_gaussian_pooling.1} parent=1 // loop_header_branch
      %14 = sbr.rel (%p12) target = $region8
    $region5: #{rp_gaussian_pooling.1} parent=1 // loop_body
      %s16 = ssub.s32 %s11, 1
      %s17 = ssub.s32 %s11, 2
      %s24 = sadd.s32 1, %s19
      %p25 = scmp.ge.s32.totalorder %s24, 2
      %s26 = scalar_select %p25, 0, %s24
      %s27 = sadd.s32 1, %s18
      %s28 = scalar_select %p25, %s27, %s18
      %p29 = scmp.ge.s32.totalorder %s28, 2
      %s30 = scalar_select %p29, 0, %s28
      %s31 = ssub.s32 %s18, %s30
      %s32 = ssub.s32 %s19, %s26
      %s33 = sor.u32 %s31, %s32
      %p34 = scmp.eq.s32.totalorder %s33, 0
      %s36 = sadd.s32 %s35, 1
      %s37 = scalar_select %p34, %s35, %s36
      %p40 = pneg %p34
      %p41 = scmp.eq.s32.totalorder %s11, 3
      %p42 = por %p40, %p41
      %p43 = scmp.ne.s32.totalorder %s35, %s38
      %p44 = scmp.eq.s32.totalorder %s11, 0
      %p45 = por %p43, %p44
      %p46 = scmp.ne.s32.totalorder %s35, %s38
      %p47 = scmp.eq.s32.totalorder %s16, 3
      %p48 = por %p46, %p47
      %p49 = scmp.ne.s32.totalorder %s38, %s39
      %p50 = scmp.eq.s32.totalorder %s16, 0
      %p51 = por %p49, %p50
      %p52 = scmp.ne.s32.totalorder %s38, %s39
      %p53 = scmp.eq.s32.totalorder %s17, 3
      %p54 = por %p52, %p53
      %p56 = scmp.ne.s32.totalorder %s39, %s55
      %p57 = scmp.eq.s32.totalorder %s17, 0
      %p58 = por %p56, %p57
      %s60 = sadd.s32 %s59, 1
      %p63 = scmp.eq.s32.totalorder %s11, 3
      %p64 = scmp.ne.s32.totalorder %s59, %s61
      %p65 = scmp.eq.s32.totalorder %s11, 0
      %p66 = por %p64, %p65
      %p67 = scmp.ne.s32.totalorder %s59, %s61
      %p68 = scmp.eq.s32.totalorder %s16, 3
      %p69 = por %p67, %p68
      %p70 = scmp.ne.s32.totalorder %s61, %s62
      %p71 = scmp.eq.s32.totalorder %s16, 0
      %p72 = por %p70, %p71
      %p73 = scmp.ne.s32.totalorder %s61, %s62
      %p74 = scmp.eq.s32.totalorder %s17, 3
      %p75 = por %p73, %p74
      %p77 = scmp.ne.s32.totalorder %s62, %s76
      %p78 = scmp.eq.s32.totalorder %s17, 0
      %p79 = por %p77, %p78
      %s80 = ssub.s32 %s18, %s30
      %s81 = ssub.s32 %s19, %s26
      %s82 = sor.u32 %s80, %s81
      %p83 = scmp.eq.s32.totalorder %s82, 0
      %s85 = sadd.s32 %s84, 1
      %s86 = scalar_select %p83, %s84, %s85
      %p89 = pneg %p83
      %p90 = scmp.eq.s32.totalorder %s11, 3
      %p91 = por %p89, %p90
      %p92 = scmp.ne.s32.totalorder %s84, %s87
      %p93 = scmp.eq.s32.totalorder %s11, 0
      %p94 = por %p92, %p93
      %p95 = scmp.ne.s32.totalorder %s84, %s87
      %p96 = scmp.eq.s32.totalorder %s16, 3
      %p97 = por %p95, %p96
      %p98 = scmp.ne.s32.totalorder %s87, %s88
      %p99 = scmp.eq.s32.totalorder %s16, 0
      %p100 = por %p98, %p99
      %p101 = scmp.ne.s32.totalorder %s87, %s88
      %p102 = scmp.eq.s32.totalorder %s17, 3
      %p103 = por %p101, %p102
      %p105 = scmp.ne.s32.totalorder %s88, %s104
      %p106 = scmp.eq.s32.totalorder %s17, 0
      %p107 = por %p105, %p106
      %p108 = scmp.le.s32.totalorder 1, %s11
      %p109 = scmp.lt.s32.totalorder %s11, 5
      %p110 = pnand %p108, %p109
      %p111 = pneg %p110
      // Predicated region
      $region9: #{rp_gaussian_pooling.1} parent=5 // pred_check
        _
      $region10: #{rp_gaussian_pooling.1} parent=5 // pred_check_branch
        %113 = sbr.rel (%p110) target = $region12
      $region11: #{rp_gaussian_pooling.1} parent=5 // pred_region
        %s114 = ssub.s32 %s11, 1
        // Predicated region
        $region13: #{rp_gaussian_pooling.1} parent=11 // pred_check
          %p115 = pneg %p72
        $region14: #{rp_gaussian_pooling.1} parent=11 // pred_check_branch
          %117 = sbr.rel (%p115) target = $region16
        $region15: #{rp_gaussian_pooling.1} parent=11 // pred_region
          _
        $region16: #{rp_gaussian_pooling.1} parent=11 // pred_fallthru
          _
      $region12: #{rp_gaussian_pooling.1} parent=5 // pred_fallthru
        _
      %p118 = scmp.lt.s32.totalorder %s11, 4
      // Predicated region
      $region17: #{rp_gaussian_pooling.1} parent=5 // pred_check
        %p119 = pneg %p118
      $region18: #{rp_gaussian_pooling.1} parent=5 // pred_check_branch
        %121 = sbr.rel (%p119) target = $region20
      $region19: #{rp_gaussian_pooling.1} parent=5 // pred_region
        // Predicated region
        $region21: #{rp_gaussian_pooling.1} parent=19 // pred_check
          %p122 = pneg %p45
        $region22: #{rp_gaussian_pooling.1} parent=19 // pred_check_branch
          %124 = sbr.rel (%p122) target = $region24
        $region23: #{rp_gaussian_pooling.1} parent=19 // pred_region
          %s125 = sand.u32 %s35, 1
          %s126 = sand.u32 %s35, 1
          %s127 = smul.addr %s126, 128
          %s128 = scalar_lea.vmem [#allocation2], %s127
          %s129 = smul.u32 2, %s19
          %s130 = ssub.s32 3, %s129
          %p131 = scmp.lt.s32.totalorder %s130, 2
          %s132 = scalar_select %p131, %s130, 2
          %s133 = smul.u32 64, %s132
          %p134 = scmp.ne.s32.totalorder 0, %s133
          %s135 = smul.addr %s18, 24
          %s136 = sadd.s32 %s129, %s135
          %s137 = smul.addr %s136, 8
          %s138 = scalar_lea.vmem %s0, %s137
          %s139 = smul.u32 %s132, 8
          // Predicated region
          $region25: #{rp_gaussian_pooling.1} parent=23 // pred_check
            %p140 = pneg %p134
          $region26: #{rp_gaussian_pooling.1} parent=23 // pred_check_branch
            %142 = sbr.rel (%p140) target = $region28
          $region27: #{rp_gaussian_pooling.1} parent=23 // pred_region
            %p143 = scmp.lt.u32.totalorder %s139, 8
            %p144 = pneg %p143
            // Predicated region
            $region29: #{rp_gaussian_pooling.1} parent=27 // pred_check
              _
            $region30: #{rp_gaussian_pooling.1} parent=27 // pred_check_branch
              %146 = sbr.rel (%p143) target = $region32
            $region31: #{rp_gaussian_pooling.1} parent=27 // pred_region
              %s176 = sand.u32 %s139, 7
              %p177 = scmp.eq.s32.totalorder %s176, 0
              // Predicated region
              $region44: #{rp_gaussian_pooling.1} parent=31 // pred_check
                %p178 = pneg %p177
              $region45: #{rp_gaussian_pooling.1} parent=31 // pred_check_branch
                %180 = sbr.rel (%p178) target = $region47
              $region46: #{rp_gaussian_pooling.1} parent=31 // pred_region
                %s181 = sshrl.u32 %s139, 3
                %s182 = sshrl.u32 %s181, 2
                // While loop
                $region48: #{rp_gaussian_pooling.1} parent=46 // loop_pre_header
                  _
                $region49: #{rp_gaussian_pooling.1} parent=46 // loop_header
                  %s184 = sphi 0, %s186
                  %p185 = scmp.ge.s32.totalorder %s184, %s182
                  %s189 = sphi 0, %s258
                  %s190 = sphi %s138, %s261
                  %s191 = sphi %s128, %s262
                $region50: #{rp_gaussian_pooling.1} parent=46 // loop_header_branch
                  %188 = sbr.rel (%p185) target = $region54
                $region51: #{rp_gaussian_pooling.1} parent=46 // loop_body
                  %v192 = vld [vmem:[%s190] sm:$0xff]
                  %193 = vst [vmem:[%s191] sm:$0xff] %v192
                  %v194 = vld [vmem:[%s190 + $0x8] sm:$0xff]
                  %195 = vst [vmem:[%s191 + $0x8] sm:$0xff] %v194
                  %v196 = vld [vmem:[%s190 + $0x10] sm:$0xff]
                  %197 = vst [vmem:[%s191 + $0x10] sm:$0xff] %v196
                  %v198 = vld [vmem:[%s190 + $0x18] sm:$0xff]
                  %199 = vst [vmem:[%s191 + $0x18] sm:$0xff] %v198
                  %v200 = vld [vmem:[%s190 + $0x18] sm:$0xff]
                  %201 = vst [vmem:[%s191 + $0x10] sm:$0xff] %v200
                  %v202 = vld [vmem:[%s190 + $0x20] sm:$0xff]
                  %203 = vst [vmem:[%s191 + $0x18] sm:$0xff] %v202
                  %v204 = vld [vmem:[%s190 + $0x28] sm:$0xff]
                  %205 = vst [vmem:[%s191 + $0x20] sm:$0xff] %v204
                  %v206 = vld [vmem:[%s190 + $0x30] sm:$0xff]
                  %207 = vst [vmem:[%s191 + $0x28] sm:$0xff] %v206
                  %v208 = vld [vmem:[%s190 + $0x30] sm:$0xff]
                  %209 = vst [vmem:[%s191 + $0x20] sm:$0xff] %v208
                  %v210 = vld [vmem:[%s190 + $0x38] sm:$0xff]
                  %211 = vst [vmem:[%s191 + $0x28] sm:$0xff] %v210
                  %v212 = vld [vmem:[%s190 + $0x40] sm:$0xff]
                  %213 = vst [vmem:[%s191 + $0x30] sm:$0xff] %v212
                  %v214 = vld [vmem:[%s190 + $0x48] sm:$0xff]
                  %215 = vst [vmem:[%s191 + $0x38] sm:$0xff] %v214
                  %v216 = vld [vmem:[%s190 + $0x48] sm:$0xff]
                  %217 = vst [vmem:[%s191 + $0x30] sm:$0xff] %v216
                  %v218 = vld [vmem:[%s190 + $0x50] sm:$0xff]
                  %219 = vst [vmem:[%s191 + $0x38] sm:$0xff] %v218
                  %v220 = vld [vmem:[%s190 + $0x58] sm:$0xff]
                  %221 = vst [vmem:[%s191 + $0x40] sm:$0xff] %v220
                  %v222 = vld [vmem:[%s190 + $0x60] sm:$0xff]
                  %223 = vst [vmem:[%s191 + $0x48] sm:$0xff] %v222
                  %v224 = vld [vmem:[%s190 + $0x60] sm:$0xff]
                  %225 = vst [vmem:[%s191 + $0x40] sm:$0xff] %v224
                  %v226 = vld [vmem:[%s190 + $0x68] sm:$0xff]
                  %227 = vst [vmem:[%s191 + $0x48] sm:$0xff] %v226
                  %v228 = vld [vmem:[%s190 + $0x70] sm:$0xff]
                  %229 = vst [vmem:[%s191 + $0x50] sm:$0xff] %v228
                  %v230 = vld [vmem:[%s190 + $0x78] sm:$0xff]
                  %231 = vst [vmem:[%s191 + $0x58] sm:$0xff] %v230
                  %v232 = vld [vmem:[%s190 + $0x78] sm:$0xff]
                  %233 = vst [vmem:[%s191 + $0x50] sm:$0xff] %v232
                  %v234 = vld [vmem:[%s190 + $0x80] sm:$0xff]
                  %235 = vst [vmem:[%s191 + $0x58] sm:$0xff] %v234
                  %v236 = vld [vmem:[%s190 + $0x88] sm:$0xff]
                  %237 = vst [vmem:[%s191 + $0x60] sm:$0xff] %v236
                  %v238 = vld [vmem:[%s190 + $0x90] sm:$0xff]
                  %239 = vst [vmem:[%s191 + $0x68] sm:$0xff] %v238
                  %v240 = vld [vmem:[%s190 + $0x90] sm:$0xff]
                  %241 = vst [vmem:[%s191 + $0x60] sm:$0xff] %v240
                  %v242 = vld [vmem:[%s190 + $0x98] sm:$0xff]
                  %243 = vst [vmem:[%s191 + $0x68] sm:$0xff] %v242
                  %v244 = vld [vmem:[%s190 + $0xa0] sm:$0xff]
                  %245 = vst [vmem:[%s191 + $0x70] sm:$0xff] %v244
                  %v246 = vld [vmem:[%s190 + $0xa8] sm:$0xff]
                  %247 = vst [vmem:[%s191 + $0x78] sm:$0xff] %v246
                  %v248 = vld [vmem:[%s190 + $0xa8] sm:$0xff]
                  %249 = vst [vmem:[%s191 + $0x70] sm:$0xff] %v248
                  %v250 = vld [vmem:[%s190 + $0xb0] sm:$0xff]
                  %251 = vst [vmem:[%s191 + $0x78] sm:$0xff] %v250
                  %v252 = vld [vmem:[%s190 + $0xb8] sm:$0xff]
                  %253 = vst [vmem:[%s191 + $0x80] sm:$0xff] %v252
                  %v254 = vld [vmem:[%s190 + $0xc0] sm:$0xff]
                  %255 = vst [vmem:[%s191 + $0x88] sm:$0xff] %v254
                  %s256 = sadd.s32 1, %s189
                  %p257 = scmp.ge.s32.totalorder %s256, %s182
                  %s258 = scalar_select %p257, 0, %s256
                  %s259 = smul.u32 %s258, 32
                  %s260 = smul.u32 %s258, 32
                  %s261 = scalar_lea.vmem %s138, %s259
                  %s262 = scalar_lea.vmem %s128, %s260 [#allocation2]
                $region52: #{rp_gaussian_pooling.1} parent=46 // loop_footer
                  %s186 = sadd.s32 %s184, 1
                $region53: #{rp_gaussian_pooling.1} parent=46 // loop_footer_branch
                  %183 = sbr.rel target = $region49
                $region54: #{rp_gaussian_pooling.1} parent=46 // loop_exit
                  _
                %s263 = sshrl.u32 %s181, 2
                %s264 = sand.u32 %s181, 3
                %s265 = smul.u32 %s263, 4
                %s266 = smul.u32 8, %s265
                %s267 = scalar_lea.vmem %s138, %s266
                %s268 = smul.u32 8, %s265
                %s269 = scalar_lea.vmem %s128, %s268 [#allocation2]
                // While loop
                $region55: #{rp_gaussian_pooling.1} parent=46 // loop_pre_header
                  _
                $region56: #{rp_gaussian_pooling.1} parent=46 // loop_header
                  %s271 = sphi 0, %s273
                  %p272 = scmp.ge.s32.totalorder %s271, %s264
                  %s276 = sphi 0, %s297
                  %s277 = sphi %s267, %s300
                  %s278 = sphi %s269, %s301
                $region57: #{rp_gaussian_pooling.1} parent=46 // loop_header_branch
                  %275 = sbr.rel (%p272) target = $region61
                $region58: #{rp_gaussian_pooling.1} parent=46 // loop_body
                  %v279 = vld [vmem:[%s277] sm:$0xff]
                  %280 = vst [vmem:[%s278] sm:$0xff] %v279
                  %v281 = vld [vmem:[%s277 + $0x18] sm:$0xff]
                  %282 = vst [vmem:[%s278 + $0x10] sm:$0xff] %v281
                  %v283 = vld [vmem:[%s277 + $0x30] sm:$0xff]
                  %284 = vst [vmem:[%s278 + $0x20] sm:$0xff] %v283
                  %v285 = vld [vmem:[%s277 + $0x48] sm:$0xff]
                  %286 = vst [vmem:[%s278 + $0x30] sm:$0xff] %v285
                  %v287 = vld [vmem:[%s277 + $0x60] sm:$0xff]
                  %288 = vst [vmem:[%s278 + $0x40] sm:$0xff] %v287
                  %v289 = vld [vmem:[%s277 + $0x78] sm:$0xff]
                  %290 = vst [vmem:[%s278 + $0x50] sm:$0xff] %v289
                  %v291 = vld [vmem:[%s277 + $0x90] sm:$0xff]
                  %292 = vst [vmem:[%s278 + $0x60] sm:$0xff] %v291
                  %v293 = vld [vmem:[%s277 + $0xa8] sm:$0xff]
                  %294 = vst [vmem:[%s278 + $0x70] sm:$0xff] %v293
                  %s295 = sadd.s32 1, %s276
                  %p296 = scmp.ge.s32.totalorder %s295, %s264
                  %s297 = scalar_select %p296, 0, %s295
                  %s298 = smul.u32 %s297, 8
                  %s299 = smul.u32 %s297, 8
                  %s300 = scalar_lea.vmem %s267, %s298
                  %s301 = scalar_lea.vmem %s269, %s299 [#allocation2]
                $region59: #{rp_gaussian_pooling.1} parent=46 // loop_footer
                  %s273 = sadd.s32 %s271, 1
                $region60: #{rp_gaussian_pooling.1} parent=46 // loop_footer_branch
                  %270 = sbr.rel target = $region56
                $region61: #{rp_gaussian_pooling.1} parent=46 // loop_exit
                  _
              $region47: #{rp_gaussian_pooling.1} parent=31 // pred_fallthru
                _
              %p302 = pneg %p177
              // Predicated region
              $region62: #{rp_gaussian_pooling.1} parent=31 // pred_check
                _
              $region63: #{rp_gaussian_pooling.1} parent=31 // pred_check_branch
                %304 = sbr.rel (%p177) target = $region65
              $region64: #{rp_gaussian_pooling.1} parent=31 // pred_region
                %s305 = sand.u32 %s139, 7
                %s306 = ssub.s32 %s139, %s305
                %s307 = scalar_lea.vmem %s138, %s306
                %s308 = ssub.s32 %s139, %s305
                %s309 = scalar_lea.vmem %s128, %s308 [#allocation2]
                %s310 = sshrl.u32 %s139, 3
                %s311 = sshrl.u32 %s310, 2
                // While loop
                $region66: #{rp_gaussian_pooling.1} parent=64 // loop_pre_header
                  _
                $region67: #{rp_gaussian_pooling.1} parent=64 // loop_header
                  %s313 = sphi 0, %s315
                  %p314 = scmp.ge.s32.totalorder %s313, %s311
                  %s318 = sphi 0, %s387
                  %s319 = sphi %s138, %s390
                  %s320 = sphi %s128, %s391
                $region68: #{rp_gaussian_pooling.1} parent=64 // loop_header_branch
                  %317 = sbr.rel (%p314) target = $region72
                $region69: #{rp_gaussian_pooling.1} parent=64 // loop_body
                  %v321 = vld [vmem:[%s319] sm:$0xff]
                  %322 = vst [vmem:[%s320] sm:$0xff] %v321
                  %v323 = vld [vmem:[%s319 + $0x8] sm:$0xff]
                  %324 = vst [vmem:[%s320 + $0x8] sm:$0xff] %v323
                  %v325 = vld [vmem:[%s319 + $0x10] sm:$0xff]
                  %326 = vst [vmem:[%s320 + $0x10] sm:$0xff] %v325
                  %v327 = vld [vmem:[%s319 + $0x18] sm:$0xff]
                  %328 = vst [vmem:[%s320 + $0x18] sm:$0xff] %v327
                  %v329 = vld [vmem:[%s319 + $0x18] sm:$0xff]
                  %330 = vst [vmem:[%s320 + $0x10] sm:$0xff] %v329
                  %v331 = vld [vmem:[%s319 + $0x20] sm:$0xff]
                  %332 = vst [vmem:[%s320 + $0x18] sm:$0xff] %v331
                  %v333 = vld [vmem:[%s319 + $0x28] sm:$0xff]
                  %334 = vst [vmem:[%s320 + $0x20] sm:$0xff] %v333
                  %v335 = vld [vmem:[%s319 + $0x30] sm:$0xff]
                  %336 = vst [vmem:[%s320 + $0x28] sm:$0xff] %v335
                  %v337 = vld [vmem:[%s319 + $0x30] sm:$0xff]
                  %338 = vst [vmem:[%s320 + $0x20] sm:$0xff] %v337
                  %v339 = vld [vmem:[%s319 + $0x38] sm:$0xff]
                  %340 = vst [vmem:[%s320 + $0x28] sm:$0xff] %v339
                  %v341 = vld [vmem:[%s319 + $0x40] sm:$0xff]
                  %342 = vst [vmem:[%s320 + $0x30] sm:$0xff] %v341
                  %v343 = vld [vmem:[%s319 + $0x48] sm:$0xff]
                  %344 = vst [vmem:[%s320 + $0x38] sm:$0xff] %v343
                  %v345 = vld [vmem:[%s319 + $0x48] sm:$0xff]
                  %346 = vst [vmem:[%s320 + $0x30] sm:$0xff] %v345
                  %v347 = vld [vmem:[%s319 + $0x50] sm:$0xff]
                  %348 = vst [vmem:[%s320 + $0x38] sm:$0xff] %v347
                  %v349 = vld [vmem:[%s319 + $0x58] sm:$0xff]
                  %350 = vst [vmem:[%s320 + $0x40] sm:$0xff] %v349
                  %v351 = vld [vmem:[%s319 + $0x60] sm:$0xff]
                  %352 = vst [vmem:[%s320 + $0x48] sm:$0xff] %v351
                  %v353 = vld [vmem:[%s319 + $0x60] sm:$0xff]
                  %354 = vst [vmem:[%s320 + $0x40] sm:$0xff] %v353
                  %v355 = vld [vmem:[%s319 + $0x68] sm:$0xff]
                  %356 = vst [vmem:[%s320 + $0x48] sm:$0xff] %v355
                  %v357 = vld [vmem:[%s319 + $0x70] sm:$0xff]
                  %358 = vst [vmem:[%s320 + $0x50] sm:$0xff] %v357
                  %v359 = vld [vmem:[%s319 + $0x78] sm:$0xff]
                  %360 = vst [vmem:[%s320 + $0x58] sm:$0xff] %v359
                  %v361 = vld [vmem:[%s319 + $0x78] sm:$0xff]
                  %362 = vst [vmem:[%s320 + $0x50] sm:$0xff] %v361
                  %v363 = vld [vmem:[%s319 + $0x80] sm:$0xff]
                  %364 = vst [vmem:[%s320 + $0x58] sm:$0xff] %v363
                  %v365 = vld [vmem:[%s319 + $0x88] sm:$0xff]
                  %366 = vst [vmem:[%s320 + $0x60] sm:$0xff] %v365
                  %v367 = vld [vmem:[%s319 + $0x90] sm:$0xff]
                  %368 = vst [vmem:[%s320 + $0x68] sm:$0xff] %v367
                  %v369 = vld [vmem:[%s319 + $0x90] sm:$0xff]
                  %370 = vst [vmem:[%s320 + $0x60] sm:$0xff] %v369
                  %v371 = vld [vmem:[%s319 + $0x98] sm:$0xff]
                  %372 = vst [vmem:[%s320 + $0x68] sm:$0xff] %v371
                  %v373 = vld [vmem:[%s319 + $0xa0] sm:$0xff]
                  %374 = vst [vmem:[%s320 + $0x70] sm:$0xff] %v373
                  %v375 = vld [vmem:[%s319 + $0xa8] sm:$0xff]
                  %376 = vst [vmem:[%s320 + $0x78] sm:$0xff] %v375
                  %v377 = vld [vmem:[%s319 + $0xa8] sm:$0xff]
                  %378 = vst [vmem:[%s320 + $0x70] sm:$0xff] %v377
                  %v379 = vld [vmem:[%s319 + $0xb0] sm:$0xff]
                  %380 = vst [vmem:[%s320 + $0x78] sm:$0xff] %v379
                  %v381 = vld [vmem:[%s319 + $0xb8] sm:$0xff]
                  %382 = vst [vmem:[%s320 + $0x80] sm:$0xff] %v381
                  %v383 = vld [vmem:[%s319 + $0xc0] sm:$0xff]
                  %384 = vst [vmem:[%s320 + $0x88] sm:$0xff] %v383
                  %s385 = sadd.s32 1, %s318
                  %p386 = scmp.ge.s32.totalorder %s385, %s311
                  %s387 = scalar_select %p386, 0, %s385
                  %s388 = smul.u32 %s387, 32
                  %s389 = smul.u32 %s387, 32
                  %s390 = scalar_lea.vmem %s138, %s388
                  %s391 = scalar_lea.vmem %s128, %s389 [#allocation2]
                $region70: #{rp_gaussian_pooling.1} parent=64 // loop_footer
                  %s315 = sadd.s32 %s313, 1
                $region71: #{rp_gaussian_pooling.1} parent=64 // loop_footer_branch
                  %312 = sbr.rel target = $region67
                $region72: #{rp_gaussian_pooling.1} parent=64 // loop_exit
                  _
                %s392 = sshrl.u32 %s310, 2
                %s393 = sand.u32 %s310, 3
                %s394 = smul.u32 %s392, 4
                %s395 = smul.u32 8, %s394
                %s396 = scalar_lea.vmem %s138, %s395
                %s397 = smul.u32 8, %s394
                %s398 = scalar_lea.vmem %s128, %s397 [#allocation2]
                // While loop
                $region73: #{rp_gaussian_pooling.1} parent=64 // loop_pre_header
                  _
                $region74: #{rp_gaussian_pooling.1} parent=64 // loop_header
                  %s400 = sphi 0, %s402
                  %p401 = scmp.ge.s32.totalorder %s400, %s393
                  %s405 = sphi 0, %s426
                  %s406 = sphi %s396, %s429
                  %s407 = sphi %s398, %s430
                $region75: #{rp_gaussian_pooling.1} parent=64 // loop_header_branch
                  %404 = sbr.rel (%p401) target = $region79
                $region76: #{rp_gaussian_pooling.1} parent=64 // loop_body
                  %v408 = vld [vmem:[%s406] sm:$0xff]
                  %409 = vst [vmem:[%s407] sm:$0xff] %v408
                  %v410 = vld [vmem:[%s406 + $0x18] sm:$0xff]
                  %411 = vst [vmem:[%s407 + $0x10] sm:$0xff] %v410
                  %v412 = vld [vmem:[%s406 + $0x30] sm:$0xff]
                  %413 = vst [vmem:[%s407 + $0x20] sm:$0xff] %v412
                  %v414 = vld [vmem:[%s406 + $0x48] sm:$0xff]
                  %415 = vst [vmem:[%s407 + $0x30] sm:$0xff] %v414
                  %v416 = vld [vmem:[%s406 + $0x60] sm:$0xff]
                  %417 = vst [vmem:[%s407 + $0x40] sm:$0xff] %v416
                  %v418 = vld [vmem:[%s406 + $0x78] sm:$0xff]
                  %419 = vst [vmem:[%s407 + $0x50] sm:$0xff] %v418
                  %v420 = vld [vmem:[%s406 + $0x90] sm:$0xff]
                  %421 = vst [vmem:[%s407 + $0x60] sm:$0xff] %v420
                  %v422 = vld [vmem:[%s406 + $0xa8] sm:$0xff]
                  %423 = vst [vmem:[%s407 + $0x70] sm:$0xff] %v422
                  %s424 = sadd.s32 1, %s405
                  %p425 = scmp.ge.s32.totalorder %s424, %s393
                  %s426 = scalar_select %p425, 0, %s424
                  %s427 = smul.u32 %s426, 8
                  %s428 = smul.u32 %s426, 8
                  %s429 = scalar_lea.vmem %s396, %s427
                  %s430 = scalar_lea.vmem %s398, %s428 [#allocation2]
                $region77: #{rp_gaussian_pooling.1} parent=64 // loop_footer
                  %s402 = sadd.s32 %s400, 1
                $region78: #{rp_gaussian_pooling.1} parent=64 // loop_footer_branch
                  %399 = sbr.rel target = $region74
                $region79: #{rp_gaussian_pooling.1} parent=64 // loop_exit
                  _
                %s431 = sshll.u32 1, %s305
                %s432 = ssub.s32 %s431, 1
                loop: start=0, step=1, limit=1
                $region80: #{rp_gaussian_pooling.1} parent=64 // loop_pre_header
                  _
                $region81: #{rp_gaussian_pooling.1} parent=64 // loop_header
                  %s434 = sphi 0, %s438
                  %p435 = scmp.ge.s32.totalorder %s434, 1
                  %s439 = sphi %s307, %s307
                  %s440 = sphi %s309, %s309
                $region82: #{rp_gaussian_pooling.1} parent=64 // loop_header_branch
                  %437 = sbr.rel (%p435) target = $region86
                $region83: #{rp_gaussian_pooling.1} parent=64 // loop_body
                  %v441 = vld [vmem:[%s439] sm:%s432]
                  %442 = vst [vmem:[%s440] sm:%s432] %v441
                  %v443 = vld [vmem:[%s439 + $0x18] sm:%s432]
                  %444 = vst [vmem:[%s440 + $0x10] sm:%s432] %v443
                  %v445 = vld [vmem:[%s439 + $0x30] sm:%s432]
                  %446 = vst [vmem:[%s440 + $0x20] sm:%s432] %v445
                  %v447 = vld [vmem:[%s439 + $0x48] sm:%s432]
                  %448 = vst [vmem:[%s440 + $0x30] sm:%s432] %v447
                  %v449 = vld [vmem:[%s439 + $0x60] sm:%s432]
                  %450 = vst [vmem:[%s440 + $0x40] sm:%s432] %v449
                  %v451 = vld [vmem:[%s439 + $0x78] sm:%s432]
                  %452 = vst [vmem:[%s440 + $0x50] sm:%s432] %v451
                  %v453 = vld [vmem:[%s439 + $0x90] sm:%s432]
                  %454 = vst [vmem:[%s440 + $0x60] sm:%s432] %v453
                  %v455 = vld [vmem:[%s439 + $0xa8] sm:%s432]
                  %456 = vst [vmem:[%s440 + $0x70] sm:%s432] %v455
                $region84: #{rp_gaussian_pooling.1} parent=64 // loop_footer
                  %s438 = sadd.s32 1, %s434
                $region85: #{rp_gaussian_pooling.1} parent=64 // loop_footer_branch
                  %433 = sbr.rel target = $region81
                $region86: #{rp_gaussian_pooling.1} parent=64 // loop_exit
                  _
              $region65: #{rp_gaussian_pooling.1} parent=31 // pred_fallthru
                _
            $region32: #{rp_gaussian_pooling.1} parent=27 // pred_fallthru
              _
            // Predicated region
            $region33: #{rp_gaussian_pooling.1} parent=27 // pred_check
              %p147 = pneg %p143
            $region34: #{rp_gaussian_pooling.1} parent=27 // pred_check_branch
              %149 = sbr.rel (%p147) target = $region36
            $region35: #{rp_gaussian_pooling.1} parent=27 // pred_region
              %s150 = sshll.u32 1, %s139
              %s151 = ssub.s32 %s150, 1
              loop: start=0, step=1, limit=1
              $region37: #{rp_gaussian_pooling.1} parent=35 // loop_pre_header
                _
              $region38: #{rp_gaussian_pooling.1} parent=35 // loop_header
                %s153 = sphi 0, %s157
                %p154 = scmp.ge.s32.totalorder %s153, 1
                %s158 = sphi %s138, %s138
                %s159 = sphi %s128, %s128
              $region39: #{rp_gaussian_pooling.1} parent=35 // loop_header_branch
                %156 = sbr.rel (%p154) target = $region43
              $region40: #{rp_gaussian_pooling.1} parent=35 // loop_body
                %v160 = vld [vmem:[%s158] sm:%s151]
                %161 = vst [vmem:[%s159] sm:%s151] %v160
                %v162 = vld [vmem:[%s158 + $0x18] sm:%s151]
                %163 = vst [vmem:[%s159 + $0x10] sm:%s151] %v162
                %v164 = vld [vmem:[%s158 + $0x30] sm:%s151]
                %165 = vst [vmem:[%s159 + $0x20] sm:%s151] %v164
                %v166 = vld [vmem:[%s158 + $0x48] sm:%s151]
                %167 = vst [vmem:[%s159 + $0x30] sm:%s151] %v166
                %v168 = vld [vmem:[%s158 + $0x60] sm:%s151]
                %169 = vst [vmem:[%s159 + $0x40] sm:%s151] %v168
                %v170 = vld [vmem:[%s158 + $0x78] sm:%s151]
                %171 = vst [vmem:[%s159 + $0x50] sm:%s151] %v170
                %v172 = vld [vmem:[%s158 + $0x90] sm:%s151]
                %173 = vst [vmem:[%s159 + $0x60] sm:%s151] %v172
                %v174 = vld [vmem:[%s158 + $0xa8] sm:%s151]
                %175 = vst [vmem:[%s159 + $0x70] sm:%s151] %v174
              $region41: #{rp_gaussian_pooling.1} parent=35 // loop_footer
                %s157 = sadd.s32 1, %s153
              $region42: #{rp_gaussian_pooling.1} parent=35 // loop_footer_branch
                %152 = sbr.rel target = $region38
              $region43: #{rp_gaussian_pooling.1} parent=35 // loop_exit
                _
            $region36: #{rp_gaussian_pooling.1} parent=27 // pred_fallthru
              _
          $region28: #{rp_gaussian_pooling.1} parent=23 // pred_fallthru
            _
          %457 = vnop
        $region24: #{rp_gaussian_pooling.1} parent=19 // pred_fallthru
          _
      $region20: #{rp_gaussian_pooling.1} parent=5 // pred_fallthru
        _
      %p458 = scmp.le.s32.totalorder 1, %s11
      %p459 = scmp.lt.s32.totalorder %s11, 5
      %p460 = pnand %p458, %p459
      %p461 = pneg %p460
      // Predicated region
      $region87: #{rp_gaussian_pooling.1} parent=5 // pred_check
        _
      $region88: #{rp_gaussian_pooling.1} parent=5 // pred_check_branch
        %463 = sbr.rel (%p460) target = $region90
      $region89: #{rp_gaussian_pooling.1} parent=5 // pred_region
        %s464 = ssub.s32 %s11, 1
        %s465 = sand.u32 %s38, 1
        %s466 = sand.u32 %s38, 1
        %s467 = smul.addr %s466, 128
        %s468 = scalar_lea.vmem [#allocation2], %s467
        // Predicated region
        $region91: #{rp_gaussian_pooling.1} parent=89 // pred_check
          %p469 = pneg %p51
        $region92: #{rp_gaussian_pooling.1} parent=89 // pred_check_branch
          %471 = sbr.rel (%p469) target = $region94
        $region93: #{rp_gaussian_pooling.1} parent=89 // pred_region
          _
        $region94: #{rp_gaussian_pooling.1} parent=89 // pred_fallthru
          _
        %s472 = sand.u32 %s38, 1
        %s473 = sand.u32 %s38, 1
        %s474 = smul.addr %s473, 128
        %s475 = scalar_lea.vmem [#allocation2], %s474
        %p476 = pneg %p51
        %p477 = pneg %p48
        %p478 = pneg %p72
        %p479 = pneg %p69
        %p480 = pneg %p100
        %p481 = pneg %p97
        %s482 = sand.u32 %s87, 1
        %s483 = scalar_lea.sflag [#allocation4], %s482
        %s484 = sand.u32 %s87, 1
        %s485 = smul.addr %s484, 128
        %s486 = scalar_lea.vmem [#allocation3], %s485
        %s487 = smul.u32 2, %s21
        %s488 = ssub.s32 3, %s487
        %p489 = scmp.lt.s32.totalorder %s488, 2
        %s490 = scalar_select %p489, %s488, 2
        %s491 = smul.u32 64, %s490
        %s492 = smul.u32 2, %s21
        %s493 = ssub.s32 3, %s492
        %p494 = scmp.lt.s32.totalorder %s493, 2
        %s495 = scalar_select %p494, %s493, 2
        %s496 = smul.u32 64, %s495
        %v497 = vld [vmem:[%s468] sm:$0xff]
        %v498 = vld [vmem:[%s468 + $0x8] sm:$0xff]
        %v499 = vld [vmem:[%s468 + $0x10] sm:$0xff]
        %v500 = vld [vmem:[%s468 + $0x18] sm:$0xff]
        %v501 = vld [vmem:[%s468 + $0x20] sm:$0xff]
        %v502 = vld [vmem:[%s468 + $0x28] sm:$0xff]
        %v503 = vld [vmem:[%s468 + $0x30] sm:$0xff]
        %v504 = vld [vmem:[%s468 + $0x38] sm:$0xff]
        %v505 = vld [vmem:[%s468 + $0x40] sm:$0xff]
        %v506 = vld [vmem:[%s468 + $0x48] sm:$0xff]
        %v507 = vld [vmem:[%s468 + $0x50] sm:$0xff]
        %v508 = vld [vmem:[%s468 + $0x58] sm:$0xff]
        %v509 = vld [vmem:[%s468 + $0x60] sm:$0xff]
        %v510 = vld [vmem:[%s468 + $0x68] sm:$0xff]
        %v511 = vld [vmem:[%s468 + $0x70] sm:$0xff]
        %v512 = vld [vmem:[%s468 + $0x78] sm:$0xff]
        %v513 = vld [vmem:[%s1] sm:$0xff]
        %v514 = vld [vmem:[%s1 + $0x8] sm:$0xff]
        %v515 = vld [vmem:[%s1 + $0x10] sm:$0xff]
        %v516 = vld [vmem:[%s1 + $0x18] sm:$0xff]
        %v517 = vld [vmem:[%s1 + $0x20] sm:$0xff]
        %v518 = vld [vmem:[%s1 + $0x28] sm:$0xff]
        %v519 = vld [vmem:[%s1 + $0x30] sm:$0xff]
        %v520 = vld [vmem:[%s1 + $0x38] sm:$0xff]
        %v521 = vld [vmem:[%s1 + $0x40] sm:$0xff]
        %v522 = vld [vmem:[%s1 + $0x48] sm:$0xff]
        %v523 = vld [vmem:[%s1 + $0x50] sm:$0xff]
        %v524 = vld [vmem:[%s1 + $0x58] sm:$0xff]
        %v525 = vld [vmem:[%s1 + $0x60] sm:$0xff]
        %v526 = vld [vmem:[%s1 + $0x68] sm:$0xff]
        %v527 = vld [vmem:[%s1 + $0x70] sm:$0xff]
        %v528 = vld [vmem:[%s1 + $0x78] sm:$0xff]
        %v529 = vld [vmem:[%s1 + $0x80] sm:$0xff]
        %v530 = vld [vmem:[%s1 + $0x88] sm:$0xff]
        %v531 = vld [vmem:[%s1 + $0x90] sm:$0xff]
        %v532 = vld [vmem:[%s1 + $0x98] sm:$0xff]
        %v533 = vld [vmem:[%s1 + $0xa0] sm:$0xff]
        %v534 = vld [vmem:[%s1 + $0xa8] sm:$0xff]
        %v535 = vld [vmem:[%s1 + $0xb0] sm:$0xff]
        %v536 = vld [vmem:[%s1 + $0xb8] sm:$0xff]
        %v537 = vld [vmem:[%s1 + $0xc0] sm:$0xff]
        %v538 = vld [vmem:[%s1 + $0xc8] sm:$0xff]
        %v539 = vld [vmem:[%s1 + $0xd0] sm:$0xff]
        %v540 = vld [vmem:[%s1 + $0xd8] sm:$0xff]
        %v541 = vld [vmem:[%s1 + $0xe0] sm:$0xff]
        %v542 = vld [vmem:[%s1 + $0xe8] sm:$0xff]
        %v543 = vld [vmem:[%s1 + $0xf0] sm:$0xff]
        %v544 = vld [vmem:[%s1 + $0xf8] sm:$0xff]
        %v545 = vld [vmem:[%s1 + $0x100] sm:$0xff]
        %v546 = vld [vmem:[%s1 + $0x108] sm:$0xff]
        %v547 = vld [vmem:[%s1 + $0x110] sm:$0xff]
        %v548 = vld [vmem:[%s1 + $0x118] sm:$0xff]
        %vm549 = vcmask 523264
        %v551 = vsel %vm549, %v513, 0
        %v554 = vsel %vm549, %v514, 0
        %v557 = vsel %vm549, %v515, 0
        %v560 = vsel %vm549, %v516, 0
        %v563 = vsel %vm549, %v517, 0
        %v566 = vsel %vm549, %v518, 0
        %v569 = vsel %vm549, %v519, 0
        %v572 = vsel %vm549, %v520, 0
        %v575 = vsel %vm549, %v521, 0
        %v578 = vsel %vm549, %v522, 0
        %v581 = vsel %vm549, %v523, 0
        %v584 = vsel %vm549, %v524, 0
        %v587 = vsel %vm549, %v525, 0
        %v590 = vsel %vm549, %v526, 0
        %v593 = vsel %vm549, %v527, 0
        %v596 = vsel %vm549, %v528, 0
        %v599 = vsel %vm549, %v529, 0
        %v602 = vsel %vm549, %v530, 0
        %v605 = vsel %vm549, %v531, 0
        %v608 = vsel %vm549, %v532, 0
        %v611 = vsel %vm549, %v533, 0
        %v614 = vsel %vm549, %v534, 0
        %v617 = vsel %vm549, %v535, 0
        %v620 = vsel %vm549, %v536, 0
        %v623 = vsel %vm549, %v537, 0
        %v626 = vsel %vm549, %v538, 0
        %v629 = vsel %vm549, %v539, 0
        %v632 = vsel %vm549, %v540, 0
        %v635 = vsel %vm549, %v541, 0
        %v638 = vsel %vm549, %v542, 0
        %v641 = vsel %vm549, %v543, 0
        %v644 = vsel %vm549, %v544, 0
        %v647 = vsel %vm549, %v545, 0
        %v650 = vsel %vm549, %v546, 0
        %v653 = vsel %vm549, %v547, 0
        %v656 = vsel %vm549, %v548, 0
        %658 = vmatpush.msra.mxu0 0.0
        %659 = vmatpush.msra.mxu0 0.0
        %660 = vmatpush.msra.mxu0 0.0
        %661 = vmatpush.msra.mxu0 0.0
        %662 = vmatpush.msra.mxu0 0.0
        %663 = vmatpush.msra.mxu0 0.0
        %664 = vmatpush.msra.mxu0 0.0
        %665 = vmatpush.msra.mxu0 0.0
        %v666 = vand.u32 %v511, 4294901760
        %667 = vmatpush.msra.mxu0 %v666
        %v668 = vand.u32 %v509, 4294901760
        %669 = vmatpush.msra.mxu0 %v668
        %v670 = vand.u32 %v507, 4294901760
        %671 = vmatpush.msra.mxu0 %v670
        %v672 = vand.u32 %v505, 4294901760
        %673 = vmatpush.msra.mxu0 %v672
        %v674 = vand.u32 %v503, 4294901760
        %675 = vmatpush.msra.mxu0 %v674
        %v676 = vand.u32 %v501, 4294901760
        %677 = vmatpush.msra.mxu0 %v676
        %v678 = vand.u32 %v499, 4294901760
        %679 = vmatpush.msra.mxu0 %v678
        %v680 = vand.u32 %v497, 4294901760
        %681 = vmatpush.msra.mxu0 %v680
        %v682 = vand.u32 %v551, 4294901760
        %v683 = vsub.f32 %v551, %v682
        %v684 = vand.u32 %v683, 4294901760
        %v685 = vsub.f32 %v683, %v684
        %v686 = vand.u32 %v685, 4294901760
        %687 = vmatmul.f32.gmra.mxu0 %v686
        %v688 = vpop.f32.mrf.mxu0
        %v689 = vadd.f32 0.0, %v688
        %v690 = vand.u32 %v554, 4294901760
        %v691 = vsub.f32 %v554, %v690
        %v692 = vand.u32 %v691, 4294901760
        %v693 = vsub.f32 %v691, %v692
        %v694 = vand.u32 %v693, 4294901760
        %695 = vmatmul.f32.gmra.mxu0 %v694
        %v696 = vpop.f32.mrf.mxu0
        %v697 = vadd.f32 0.0, %v696
        %v698 = vand.u32 %v557, 4294901760
        %v699 = vsub.f32 %v557, %v698
        %v700 = vand.u32 %v699, 4294901760
        %v701 = vsub.f32 %v699, %v700
        %v702 = vand.u32 %v701, 4294901760
        %703 = vmatmul.f32.gmra.mxu0 %v702
        %v704 = vpop.f32.mrf.mxu0
        %v705 = vadd.f32 0.0, %v704
        %v706 = vand.u32 %v560, 4294901760
        %v707 = vsub.f32 %v560, %v706
        %v708 = vand.u32 %v707, 4294901760
        %v709 = vsub.f32 %v707, %v708
        %v710 = vand.u32 %v709, 4294901760
        %711 = vmatmul.f32.gmra.mxu0 %v710
        %v712 = vpop.f32.mrf.mxu0
        %v713 = vadd.f32 0.0, %v712
        %v714 = vand.u32 %v563, 4294901760
        %v715 = vsub.f32 %v563, %v714
        %v716 = vand.u32 %v715, 4294901760
        %v717 = vsub.f32 %v715, %v716
        %v718 = vand.u32 %v717, 4294901760
        %719 = vmatmul.f32.gmra.mxu0 %v718
        %v720 = vpop.f32.mrf.mxu0
        %v721 = vadd.f32 0.0, %v720
        %v722 = vand.u32 %v566, 4294901760
        %v723 = vsub.f32 %v566, %v722
        %v724 = vand.u32 %v723, 4294901760
        %v725 = vsub.f32 %v723, %v724
        %v726 = vand.u32 %v725, 4294901760
        %727 = vmatmul.f32.gmra.mxu0 %v726
        %v728 = vpop.f32.mrf.mxu0
        %v729 = vadd.f32 0.0, %v728
        %v730 = vand.u32 %v569, 4294901760
        %v731 = vsub.f32 %v569, %v730
        %v732 = vand.u32 %v731, 4294901760
        %v733 = vsub.f32 %v731, %v732
        %v734 = vand.u32 %v733, 4294901760
        %735 = vmatmul.f32.gmra.mxu0 %v734
        %v736 = vpop.f32.mrf.mxu0
        %v737 = vadd.f32 0.0, %v736
        %v738 = vand.u32 %v572, 4294901760
        %v739 = vsub.f32 %v572, %v738
        %v740 = vand.u32 %v739, 4294901760
        %v741 = vsub.f32 %v739, %v740
        %v742 = vand.u32 %v741, 4294901760
        %743 = vmatmul.f32.gmra.mxu0 %v742
        %v744 = vpop.f32.mrf.mxu0
        %v745 = vadd.f32 0.0, %v744
        %v746 = vand.u32 %v575, 4294901760
        %v747 = vsub.f32 %v575, %v746
        %v748 = vand.u32 %v747, 4294901760
        %v749 = vsub.f32 %v747, %v748
        %v750 = vand.u32 %v749, 4294901760
        %751 = vmatmul.f32.gmra.mxu0 %v750
        %v752 = vpop.f32.mrf.mxu0
        %v753 = vadd.f32 0.0, %v752
        %v754 = vand.u32 %v578, 4294901760
        %v755 = vsub.f32 %v578, %v754
        %v756 = vand.u32 %v755, 4294901760
        %v757 = vsub.f32 %v755, %v756
        %v758 = vand.u32 %v757, 4294901760
        %759 = vmatmul.f32.gmra.mxu0 %v758
        %v760 = vpop.f32.mrf.mxu0
        %v761 = vadd.f32 0.0, %v760
        %v762 = vand.u32 %v581, 4294901760
        %v763 = vsub.f32 %v581, %v762
        %v764 = vand.u32 %v763, 4294901760
        %v765 = vsub.f32 %v763, %v764
        %v766 = vand.u32 %v765, 4294901760
        %767 = vmatmul.f32.gmra.mxu0 %v766
        %v768 = vpop.f32.mrf.mxu0
        %v769 = vadd.f32 0.0, %v768
        %v770 = vand.u32 %v584, 4294901760
        %v771 = vsub.f32 %v584, %v770
        %v772 = vand.u32 %v771, 4294901760
        %v773 = vsub.f32 %v771, %v772
        %v774 = vand.u32 %v773, 4294901760
        %775 = vmatmul.f32.gmra.mxu0 %v774
        %v776 = vpop.f32.mrf.mxu0
        %v777 = vadd.f32 0.0, %v776
        %v778 = vand.u32 %v587, 4294901760
        %v779 = vsub.f32 %v587, %v778
        %v780 = vand.u32 %v779, 4294901760
        %v781 = vsub.f32 %v779, %v780
        %v782 = vand.u32 %v781, 4294901760
        %783 = vmatmul.f32.gmra.mxu0 %v782
        %v784 = vpop.f32.mrf.mxu0
        %v785 = vadd.f32 0.0, %v784
        %v786 = vand.u32 %v590, 4294901760
        %v787 = vsub.f32 %v590, %v786
        %v788 = vand.u32 %v787, 4294901760
        %v789 = vsub.f32 %v787, %v788
        %v790 = vand.u32 %v789, 4294901760
        %791 = vmatmul.f32.gmra.mxu0 %v790
        %v792 = vpop.f32.mrf.mxu0
        %v793 = vadd.f32 0.0, %v792
        %v794 = vand.u32 %v593, 4294901760
        %v795 = vsub.f32 %v593, %v794
        %v796 = vand.u32 %v795, 4294901760
        %v797 = vsub.f32 %v795, %v796
        %v798 = vand.u32 %v797, 4294901760
        %799 = vmatmul.f32.gmra.mxu0 %v798
        %v800 = vpop.f32.mrf.mxu0
        %v801 = vadd.f32 0.0, %v800
        %v802 = vand.u32 %v596, 4294901760
        %v803 = vsub.f32 %v596, %v802
        %v804 = vand.u32 %v803, 4294901760
        %v805 = vsub.f32 %v803, %v804
        %v806 = vand.u32 %v805, 4294901760
        %807 = vmatmul.f32.gmra.mxu0 %v806
        %v808 = vpop.f32.mrf.mxu0
        %v809 = vadd.f32 0.0, %v808
        %v810 = vand.u32 %v599, 4294901760
        %v811 = vsub.f32 %v599, %v810
        %v812 = vand.u32 %v811, 4294901760
        %v813 = vsub.f32 %v811, %v812
        %v814 = vand.u32 %v813, 4294901760
        %815 = vmatmul.f32.gmra.mxu0 %v814
        %v816 = vpop.f32.mrf.mxu0
        %v817 = vadd.f32 0.0, %v816
        %v818 = vand.u32 %v602, 4294901760
        %v819 = vsub.f32 %v602, %v818
        %v820 = vand.u32 %v819, 4294901760
        %v821 = vsub.f32 %v819, %v820
        %v822 = vand.u32 %v821, 4294901760
        %823 = vmatmul.f32.gmra.mxu0 %v822
        %v824 = vpop.f32.mrf.mxu0
        %v825 = vadd.f32 0.0, %v824
        %v826 = vand.u32 %v605, 4294901760
        %v827 = vsub.f32 %v605, %v826
        %v828 = vand.u32 %v827, 4294901760
        %v829 = vsub.f32 %v827, %v828
        %v830 = vand.u32 %v829, 4294901760
        %831 = vmatmul.f32.gmra.mxu0 %v830
        %v832 = vpop.f32.mrf.mxu0
        %v833 = vadd.f32 0.0, %v832
        %v834 = vand.u32 %v608, 4294901760
        %v835 = vsub.f32 %v608, %v834
        %v836 = vand.u32 %v835, 4294901760
        %v837 = vsub.f32 %v835, %v836
        %v838 = vand.u32 %v837, 4294901760
        %839 = vmatmul.f32.gmra.mxu0 %v838
        %v840 = vpop.f32.mrf.mxu0
        %v841 = vadd.f32 0.0, %v840
        %v842 = vand.u32 %v611, 4294901760
        %v843 = vsub.f32 %v611, %v842
        %v844 = vand.u32 %v843, 4294901760
        %v845 = vsub.f32 %v843, %v844
        %v846 = vand.u32 %v845, 4294901760
        %847 = vmatmul.f32.gmra.mxu0 %v846
        %v848 = vpop.f32.mrf.mxu0
        %v849 = vadd.f32 0.0, %v848
        %v850 = vand.u32 %v614, 4294901760
        %v851 = vsub.f32 %v614, %v850
        %v852 = vand.u32 %v851, 4294901760
        %v853 = vsub.f32 %v851, %v852
        %v854 = vand.u32 %v853, 4294901760
        %855 = vmatmul.f32.gmra.mxu0 %v854
        %v856 = vpop.f32.mrf.mxu0
        %v857 = vadd.f32 0.0, %v856
        %v858 = vand.u32 %v617, 4294901760
        %v859 = vsub.f32 %v617, %v858
        %v860 = vand.u32 %v859, 4294901760
        %v861 = vsub.f32 %v859, %v860
        %v862 = vand.u32 %v861, 4294901760
        %863 = vmatmul.f32.gmra.mxu0 %v862
        %v864 = vpop.f32.mrf.mxu0
        %v865 = vadd.f32 0.0, %v864
        %v866 = vand.u32 %v620, 4294901760
        %v867 = vsub.f32 %v620, %v866
        %v868 = vand.u32 %v867, 4294901760
        %v869 = vsub.f32 %v867, %v868
        %v870 = vand.u32 %v869, 4294901760
        %871 = vmatmul.f32.gmra.mxu0 %v870
        %v872 = vpop.f32.mrf.mxu0
        %v873 = vadd.f32 0.0, %v872
        %v874 = vand.u32 %v623, 4294901760
        %v875 = vsub.f32 %v623, %v874
        %v876 = vand.u32 %v875, 4294901760
        %v877 = vsub.f32 %v875, %v876
        %v878 = vand.u32 %v877, 4294901760
        %879 = vmatmul.f32.gmra.mxu0 %v878
        %v880 = vpop.f32.mrf.mxu0
        %v881 = vadd.f32 0.0, %v880
        %v882 = vand.u32 %v626, 4294901760
        %v883 = vsub.f32 %v626, %v882
        %v884 = vand.u32 %v883, 4294901760
        %v885 = vsub.f32 %v883, %v884
        %v886 = vand.u32 %v885, 4294901760
        %887 = vmatmul.f32.gmra.mxu0 %v886
        %v888 = vpop.f32.mrf.mxu0
        %v889 = vadd.f32 0.0, %v888
        %v890 = vand.u32 %v629, 4294901760
        %v891 = vsub.f32 %v629, %v890
        %v892 = vand.u32 %v891, 4294901760
        %v893 = vsub.f32 %v891, %v892
        %v894 = vand.u32 %v893, 4294901760
        %895 = vmatmul.f32.gmra.mxu0 %v894
        %v896 = vpop.f32.mrf.mxu0
        %v897 = vadd.f32 0.0, %v896
        %v898 = vand.u32 %v632, 4294901760
        %v899 = vsub.f32 %v632, %v898
        %v900 = vand.u32 %v899, 4294901760
        %v901 = vsub.f32 %v899, %v900
        %v902 = vand.u32 %v901, 4294901760
        %903 = vmatmul.f32.gmra.mxu0 %v902
        %v904 = vpop.f32.mrf.mxu0
        %v905 = vadd.f32 0.0, %v904
        %v906 = vand.u32 %v635, 4294901760
        %v907 = vsub.f32 %v635, %v906
        %v908 = vand.u32 %v907, 4294901760
        %v909 = vsub.f32 %v907, %v908
        %v910 = vand.u32 %v909, 4294901760
        %911 = vmatmul.f32.gmra.mxu0 %v910
        %v912 = vpop.f32.mrf.mxu0
        %v913 = vadd.f32 0.0, %v912
        %v914 = vand.u32 %v638, 4294901760
        %v915 = vsub.f32 %v638, %v914
        %v916 = vand.u32 %v915, 4294901760
        %v917 = vsub.f32 %v915, %v916
        %v918 = vand.u32 %v917, 4294901760
        %919 = vmatmul.f32.gmra.mxu0 %v918
        %v920 = vpop.f32.mrf.mxu0
        %v921 = vadd.f32 0.0, %v920
        %v922 = vand.u32 %v641, 4294901760
        %v923 = vsub.f32 %v641, %v922
        %v924 = vand.u32 %v923, 4294901760
        %v925 = vsub.f32 %v923, %v924
        %v926 = vand.u32 %v925, 4294901760
        %927 = vmatmul.f32.gmra.mxu0 %v926
        %v928 = vpop.f32.mrf.mxu0
        %v929 = vadd.f32 0.0, %v928
        %v930 = vand.u32 %v644, 4294901760
        %v931 = vsub.f32 %v644, %v930
        %v932 = vand.u32 %v931, 4294901760
        %v933 = vsub.f32 %v931, %v932
        %v934 = vand.u32 %v933, 4294901760
        %935 = vmatmul.f32.gmra.mxu0 %v934
        %v936 = vpop.f32.mrf.mxu0
        %v937 = vadd.f32 0.0, %v936
        %v938 = vand.u32 %v647, 4294901760
        %v939 = vsub.f32 %v647, %v938
        %v940 = vand.u32 %v939, 4294901760
        %v941 = vsub.f32 %v939, %v940
        %v942 = vand.u32 %v941, 4294901760
        %943 = vmatmul.f32.gmra.mxu0 %v942
        %v944 = vpop.f32.mrf.mxu0
        %v945 = vadd.f32 0.0, %v944
        %v946 = vand.u32 %v650, 4294901760
        %v947 = vsub.f32 %v650, %v946
        %v948 = vand.u32 %v947, 4294901760
        %v949 = vsub.f32 %v947, %v948
        %v950 = vand.u32 %v949, 4294901760
        %951 = vmatmul.f32.gmra.mxu0 %v950
        %v952 = vpop.f32.mrf.mxu0
        %v953 = vadd.f32 0.0, %v952
        %v954 = vand.u32 %v653, 4294901760
        %v955 = vsub.f32 %v653, %v954
        %v956 = vand.u32 %v955, 4294901760
        %v957 = vsub.f32 %v955, %v956
        %v958 = vand.u32 %v957, 4294901760
        %959 = vmatmul.f32.gmra.mxu0 %v958
        %v960 = vpop.f32.mrf.mxu0
        %v961 = vadd.f32 0.0, %v960
        %v962 = vand.u32 %v656, 4294901760
        %v963 = vsub.f32 %v656, %v962
        %v964 = vand.u32 %v963, 4294901760
        %v965 = vsub.f32 %v963, %v964
        %v966 = vand.u32 %v965, 4294901760
        %967 = vmatmul.f32.gmra.mxu0 %v966
        %v968 = vpop.f32.mrf.mxu0
        %v969 = vadd.f32 0.0, %v968
        %970 = vdwg.mxu0
        %971 = vmatpush.msra.mxu0 0.0
        %972 = vmatpush.msra.mxu0 0.0
        %973 = vmatpush.msra.mxu0 0.0
        %974 = vmatpush.msra.mxu0 0.0
        %975 = vmatpush.msra.mxu0 0.0
        %976 = vmatpush.msra.mxu0 0.0
        %977 = vmatpush.msra.mxu0 0.0
        %978 = vmatpush.msra.mxu0 0.0
        %v979 = vand.u32 %v511, 4294901760
        %v980 = vsub.f32 %v511, %v979
        %v981 = vand.u32 %v980, 4294901760
        %v982 = vsub.f32 %v980, %v981
        %v983 = vand.u32 %v982, 4294901760
        %984 = vmatpush.msra.mxu0 %v983
        %v985 = vand.u32 %v509, 4294901760
        %v986 = vsub.f32 %v509, %v985
        %v987 = vand.u32 %v986, 4294901760
        %v988 = vsub.f32 %v986, %v987
        %v989 = vand.u32 %v988, 4294901760
        %990 = vmatpush.msra.mxu0 %v989
        %v991 = vand.u32 %v507, 4294901760
        %v992 = vsub.f32 %v507, %v991
        %v993 = vand.u32 %v992, 4294901760
        %v994 = vsub.f32 %v992, %v993
        %v995 = vand.u32 %v994, 4294901760
        %996 = vmatpush.msra.mxu0 %v995
        %v997 = vand.u32 %v505, 4294901760
        %v998 = vsub.f32 %v505, %v997
        %v999 = vand.u32 %v998, 4294901760
        %v1000 = vsub.f32 %v998, %v999
        %v1001 = vand.u32 %v1000, 4294901760
        %1002 = vmatpush.msra.mxu0 %v1001
        %v1003 = vand.u32 %v503, 4294901760
        %v1004 = vsub.f32 %v503, %v1003
        %v1005 = vand.u32 %v1004, 4294901760
        %v1006 = vsub.f32 %v1004, %v1005
        %v1007 = vand.u32 %v1006, 4294901760
        %1008 = vmatpush.msra.mxu0 %v1007
        %v1009 = vand.u32 %v501, 4294901760
        %v1010 = vsub.f32 %v501, %v1009
        %v1011 = vand.u32 %v1010, 4294901760
        %v1012 = vsub.f32 %v1010, %v1011
        %v1013 = vand.u32 %v1012, 4294901760
        %1014 = vmatpush.msra.mxu0 %v1013
        %v1015 = vand.u32 %v499, 4294901760
        %v1016 = vsub.f32 %v499, %v1015
        %v1017 = vand.u32 %v1016, 4294901760
        %v1018 = vsub.f32 %v1016, %v1017
        %v1019 = vand.u32 %v1018, 4294901760
        %1020 = vmatpush.msra.mxu0 %v1019
        %v1021 = vand.u32 %v497, 4294901760
        %v1022 = vsub.f32 %v497, %v1021
        %v1023 = vand.u32 %v1022, 4294901760
        %v1024 = vsub.f32 %v1022, %v1023
        %v1025 = vand.u32 %v1024, 4294901760
        %1026 = vmatpush.msra.mxu0 %v1025
        %v1027 = vand.u32 %v551, 4294901760
        %1028 = vmatmul.f32.gmra.mxu0 %v1027
        %v1029 = vpop.f32.mrf.mxu0
        %v1030 = vadd.f32 %v689, %v1029
        %v1031 = vand.u32 %v554, 4294901760
        %1032 = vmatmul.f32.gmra.mxu0 %v1031
        %v1033 = vpop.f32.mrf.mxu0
        %v1034 = vadd.f32 %v697, %v1033
        %v1035 = vand.u32 %v557, 4294901760
        %1036 = vmatmul.f32.gmra.mxu0 %v1035
        %v1037 = vpop.f32.mrf.mxu0
        %v1038 = vadd.f32 %v705, %v1037
        %v1039 = vand.u32 %v560, 4294901760
        %1040 = vmatmul.f32.gmra.mxu0 %v1039
        %v1041 = vpop.f32.mrf.mxu0
        %v1042 = vadd.f32 %v713, %v1041
        %v1043 = vand.u32 %v563, 4294901760
        %1044 = vmatmul.f32.gmra.mxu0 %v1043
        %v1045 = vpop.f32.mrf.mxu0
        %v1046 = vadd.f32 %v721, %v1045
        %v1047 = vand.u32 %v566, 4294901760
        %1048 = vmatmul.f32.gmra.mxu0 %v1047
        %v1049 = vpop.f32.mrf.mxu0
        %v1050 = vadd.f32 %v729, %v1049
        %v1051 = vand.u32 %v569, 4294901760
        %1052 = vmatmul.f32.gmra.mxu0 %v1051
        %v1053 = vpop.f32.mrf.mxu0
        %v1054 = vadd.f32 %v737, %v1053
        %v1055 = vand.u32 %v572, 4294901760
        %1056 = vmatmul.f32.gmra.mxu0 %v1055
        %v1057 = vpop.f32.mrf.mxu0
        %v1058 = vadd.f32 %v745, %v1057
        %v1059 = vand.u32 %v575, 4294901760
        %1060 = vmatmul.f32.gmra.mxu0 %v1059
        %v1061 = vpop.f32.mrf.mxu0
        %v1062 = vadd.f32 %v753, %v1061
        %v1063 = vand.u32 %v578, 4294901760
        %1064 = vmatmul.f32.gmra.mxu0 %v1063
        %v1065 = vpop.f32.mrf.mxu0
        %v1066 = vadd.f32 %v761, %v1065
        %v1067 = vand.u32 %v581, 4294901760
        %1068 = vmatmul.f32.gmra.mxu0 %v1067
        %v1069 = vpop.f32.mrf.mxu0
        %v1070 = vadd.f32 %v769, %v1069
        %v1071 = vand.u32 %v584, 4294901760
        %1072 = vmatmul.f32.gmra.mxu0 %v1071
        %v1073 = vpop.f32.mrf.mxu0
        %v1074 = vadd.f32 %v777, %v1073
        %v1075 = vand.u32 %v587, 4294901760
        %1076 = vmatmul.f32.gmra.mxu0 %v1075
        %v1077 = vpop.f32.mrf.mxu0
        %v1078 = vadd.f32 %v785, %v1077
        %v1079 = vand.u32 %v590, 4294901760
        %1080 = vmatmul.f32.gmra.mxu0 %v1079
        %v1081 = vpop.f32.mrf.mxu0
        %v1082 = vadd.f32 %v793, %v1081
        %v1083 = vand.u32 %v593, 4294901760
        %1084 = vmatmul.f32.gmra.mxu0 %v1083
        %v1085 = vpop.f32.mrf.mxu0
        %v1086 = vadd.f32 %v801, %v1085
        %v1087 = vand.u32 %v596, 4294901760
        %1088 = vmatmul.f32.gmra.mxu0 %v1087
        %v1089 = vpop.f32.mrf.mxu0
        %v1090 = vadd.f32 %v809, %v1089
        %v1091 = vand.u32 %v599, 4294901760
        %1092 = vmatmul.f32.gmra.mxu0 %v1091
        %v1093 = vpop.f32.mrf.mxu0
        %v1094 = vadd.f32 %v817, %v1093
        %v1095 = vand.u32 %v602, 4294901760
        %1096 = vmatmul.f32.gmra.mxu0 %v1095
        %v1097 = vpop.f32.mrf.mxu0
        %v1098 = vadd.f32 %v825, %v1097
        %v1099 = vand.u32 %v605, 4294901760
        %1100 = vmatmul.f32.gmra.mxu0 %v1099
        %v1101 = vpop.f32.mrf.mxu0
        %v1102 = vadd.f32 %v833, %v1101
        %v1103 = vand.u32 %v608, 4294901760
        %1104 = vmatmul.f32.gmra.mxu0 %v1103
        %v1105 = vpop.f32.mrf.mxu0
        %v1106 = vadd.f32 %v841, %v1105
        %v1107 = vand.u32 %v611, 4294901760
        %1108 = vmatmul.f32.gmra.mxu0 %v1107
        %v1109 = vpop.f32.mrf.mxu0
        %v1110 = vadd.f32 %v849, %v1109
        %v1111 = vand.u32 %v614, 4294901760
        %1112 = vmatmul.f32.gmra.mxu0 %v1111
        %v1113 = vpop.f32.mrf.mxu0
        %v1114 = vadd.f32 %v857, %v1113
        %v1115 = vand.u32 %v617, 4294901760
        %1116 = vmatmul.f32.gmra.mxu0 %v1115
        %v1117 = vpop.f32.mrf.mxu0
        %v1118 = vadd.f32 %v865, %v1117
        %v1119 = vand.u32 %v620, 4294901760
        %1120 = vmatmul.f32.gmra.mxu0 %v1119
        %v1121 = vpop.f32.mrf.mxu0
        %v1122 = vadd.f32 %v873, %v1121
        %v1123 = vand.u32 %v623, 4294901760
        %1124 = vmatmul.f32.gmra.mxu0 %v1123
        %v1125 = vpop.f32.mrf.mxu0
        %v1126 = vadd.f32 %v881, %v1125
        %v1127 = vand.u32 %v626, 4294901760
        %1128 = vmatmul.f32.gmra.mxu0 %v1127
        %v1129 = vpop.f32.mrf.mxu0
        %v1130 = vadd.f32 %v889, %v1129
        %v1131 = vand.u32 %v629, 4294901760
        %1132 = vmatmul.f32.gmra.mxu0 %v1131
        %v1133 = vpop.f32.mrf.mxu0
        %v1134 = vadd.f32 %v897, %v1133
        %v1135 = vand.u32 %v632, 4294901760
        %1136 = vmatmul.f32.gmra.mxu0 %v1135
        %v1137 = vpop.f32.mrf.mxu0
        %v1138 = vadd.f32 %v905, %v1137
        %v1139 = vand.u32 %v635, 4294901760
        %1140 = vmatmul.f32.gmra.mxu0 %v1139
        %v1141 = vpop.f32.mrf.mxu0
        %v1142 = vadd.f32 %v913, %v1141
        %v1143 = vand.u32 %v638, 4294901760
        %1144 = vmatmul.f32.gmra.mxu0 %v1143
        %v1145 = vpop.f32.mrf.mxu0
        %v1146 = vadd.f32 %v921, %v1145
        %v1147 = vand.u32 %v641, 4294901760
        %1148 = vmatmul.f32.gmra.mxu0 %v1147
        %v1149 = vpop.f32.mrf.mxu0
        %v1150 = vadd.f32 %v929, %v1149
        %v1151 = vand.u32 %v644, 4294901760
        %1152 = vmatmul.f32.gmra.mxu0 %v1151
        %v1153 = vpop.f32.mrf.mxu0
        %v1154 = vadd.f32 %v937, %v1153
        %v1155 = vand.u32 %v647, 4294901760
        %1156 = vmatmul.f32.gmra.mxu0 %v1155
        %v1157 = vpop.f32.mrf.mxu0
        %v1158 = vadd.f32 %v945, %v1157
        %v1159 = vand.u32 %v650, 4294901760
        %1160 = vmatmul.f32.gmra.mxu0 %v1159
        %v1161 = vpop.f32.mrf.mxu0
        %v1162 = vadd.f32 %v953, %v1161
        %v1163 = vand.u32 %v653, 4294901760
        %1164 = vmatmul.f32.gmra.mxu0 %v1163
        %v1165 = vpop.f32.mrf.mxu0
        %v1166 = vadd.f32 %v961, %v1165
        %v1167 = vand.u32 %v656, 4294901760
        %1168 = vmatmul.f32.gmra.mxu0 %v1167
        %v1169 = vpop.f32.mrf.mxu0
        %v1170 = vadd.f32 %v969, %v1169
        %1171 = vdwg.mxu0
        %1172 = vmatpush.msra.mxu0 0.0
        %1173 = vmatpush.msra.mxu0 0.0
        %1174 = vmatpush.msra.mxu0 0.0
        %1175 = vmatpush.msra.mxu0 0.0
        %1176 = vmatpush.msra.mxu0 0.0
        %1177 = vmatpush.msra.mxu0 0.0
        %1178 = vmatpush.msra.mxu0 0.0
        %1179 = vmatpush.msra.mxu0 0.0
        %v1180 = vand.u32 %v511, 4294901760
        %v1181 = vsub.f32 %v511, %v1180
        %1182 = vmatpush.msra.mxu0 %v1181
        %v1183 = vand.u32 %v509, 4294901760
        %v1184 = vsub.f32 %v509, %v1183
        %1185 = vmatpush.msra.mxu0 %v1184
        %v1186 = vand.u32 %v507, 4294901760
        %v1187 = vsub.f32 %v507, %v1186
        %1188 = vmatpush.msra.mxu0 %v1187
        %v1189 = vand.u32 %v505, 4294901760
        %v1190 = vsub.f32 %v505, %v1189
        %1191 = vmatpush.msra.mxu0 %v1190
        %v1192 = vand.u32 %v503, 4294901760
        %v1193 = vsub.f32 %v503, %v1192
        %1194 = vmatpush.msra.mxu0 %v1193
        %v1195 = vand.u32 %v501, 4294901760
        %v1196 = vsub.f32 %v501, %v1195
        %1197 = vmatpush.msra.mxu0 %v1196
        %v1198 = vand.u32 %v499, 4294901760
        %v1199 = vsub.f32 %v499, %v1198
        %1200 = vmatpush.msra.mxu0 %v1199
        %v1201 = vand.u32 %v497, 4294901760
        %v1202 = vsub.f32 %v497, %v1201
        %1203 = vmatpush.msra.mxu0 %v1202
        %v1204 = vand.u32 %v551, 4294901760
        %v1205 = vsub.f32 %v551, %v1204
        %1206 = vmatmul.f32.gmra.mxu0 %v1205
        %v1207 = vpop.f32.mrf.mxu0
        %v1208 = vadd.f32 %v1030, %v1207
        %v1209 = vand.u32 %v554, 4294901760
        %v1210 = vsub.f32 %v554, %v1209
        %1211 = vmatmul.f32.gmra.mxu0 %v1210
        %v1212 = vpop.f32.mrf.mxu0
        %v1213 = vadd.f32 %v1034, %v1212
        %v1214 = vand.u32 %v557, 4294901760
        %v1215 = vsub.f32 %v557, %v1214
        %1216 = vmatmul.f32.gmra.mxu0 %v1215
        %v1217 = vpop.f32.mrf.mxu0
        %v1218 = vadd.f32 %v1038, %v1217
        %v1219 = vand.u32 %v560, 4294901760
        %v1220 = vsub.f32 %v560, %v1219
        %1221 = vmatmul.f32.gmra.mxu0 %v1220
        %v1222 = vpop.f32.mrf.mxu0
        %v1223 = vadd.f32 %v1042, %v1222
        %v1224 = vand.u32 %v563, 4294901760
        %v1225 = vsub.f32 %v563, %v1224
        %1226 = vmatmul.f32.gmra.mxu0 %v1225
        %v1227 = vpop.f32.mrf.mxu0
        %v1228 = vadd.f32 %v1046, %v1227
        %v1229 = vand.u32 %v566, 4294901760
        %v1230 = vsub.f32 %v566, %v1229
        %1231 = vmatmul.f32.gmra.mxu0 %v1230
        %v1232 = vpop.f32.mrf.mxu0
        %v1233 = vadd.f32 %v1050, %v1232
        %v1234 = vand.u32 %v569, 4294901760
        %v1235 = vsub.f32 %v569, %v1234
        %1236 = vmatmul.f32.gmra.mxu0 %v1235
        %v1237 = vpop.f32.mrf.mxu0
        %v1238 = vadd.f32 %v1054, %v1237
        %v1239 = vand.u32 %v572, 4294901760
        %v1240 = vsub.f32 %v572, %v1239
        %1241 = vmatmul.f32.gmra.mxu0 %v1240
        %v1242 = vpop.f32.mrf.mxu0
        %v1243 = vadd.f32 %v1058, %v1242
        %v1244 = vand.u32 %v575, 4294901760
        %v1245 = vsub.f32 %v575, %v1244
        %1246 = vmatmul.f32.gmra.mxu0 %v1245
        %v1247 = vpop.f32.mrf.mxu0
        %v1248 = vadd.f32 %v1062, %v1247
        %v1249 = vand.u32 %v578, 4294901760
        %v1250 = vsub.f32 %v578, %v1249
        %1251 = vmatmul.f32.gmra.mxu0 %v1250
        %v1252 = vpop.f32.mrf.mxu0
        %v1253 = vadd.f32 %v1066, %v1252
        %v1254 = vand.u32 %v581, 4294901760
        %v1255 = vsub.f32 %v581, %v1254
        %1256 = vmatmul.f32.gmra.mxu0 %v1255
        %v1257 = vpop.f32.mrf.mxu0
        %v1258 = vadd.f32 %v1070, %v1257
        %v1259 = vand.u32 %v584, 4294901760
        %v1260 = vsub.f32 %v584, %v1259
        %1261 = vmatmul.f32.gmra.mxu0 %v1260
        %v1262 = vpop.f32.mrf.mxu0
        %v1263 = vadd.f32 %v1074, %v1262
        %v1264 = vand.u32 %v587, 4294901760
        %v1265 = vsub.f32 %v587, %v1264
        %1266 = vmatmul.f32.gmra.mxu0 %v1265
        %v1267 = vpop.f32.mrf.mxu0
        %v1268 = vadd.f32 %v1078, %v1267
        %v1269 = vand.u32 %v590, 4294901760
        %v1270 = vsub.f32 %v590, %v1269
        %1271 = vmatmul.f32.gmra.mxu0 %v1270
        %v1272 = vpop.f32.mrf.mxu0
        %v1273 = vadd.f32 %v1082, %v1272
        %v1274 = vand.u32 %v593, 4294901760
        %v1275 = vsub.f32 %v593, %v1274
        %1276 = vmatmul.f32.gmra.mxu0 %v1275
        %v1277 = vpop.f32.mrf.mxu0
        %v1278 = vadd.f32 %v1086, %v1277
        %v1279 = vand.u32 %v596, 4294901760
        %v1280 = vsub.f32 %v596, %v1279
        %1281 = vmatmul.f32.gmra.mxu0 %v1280
        %v1282 = vpop.f32.mrf.mxu0
        %v1283 = vadd.f32 %v1090, %v1282
        %v1284 = vand.u32 %v599, 4294901760
        %v1285 = vsub.f32 %v599, %v1284
        %1286 = vmatmul.f32.gmra.mxu0 %v1285
        %v1287 = vpop.f32.mrf.mxu0
        %v1288 = vadd.f32 %v1094, %v1287
        %v1289 = vand.u32 %v602, 4294901760
        %v1290 = vsub.f32 %v602, %v1289
        %1291 = vmatmul.f32.gmra.mxu0 %v1290
        %v1292 = vpop.f32.mrf.mxu0
        %v1293 = vadd.f32 %v1098, %v1292
        %v1294 = vand.u32 %v605, 4294901760
        %v1295 = vsub.f32 %v605, %v1294
        %1296 = vmatmul.f32.gmra.mxu0 %v1295
        %v1297 = vpop.f32.mrf.mxu0
        %v1298 = vadd.f32 %v1102, %v1297
        %v1299 = vand.u32 %v608, 4294901760
        %v1300 = vsub.f32 %v608, %v1299
        %1301 = vmatmul.f32.gmra.mxu0 %v1300
        %v1302 = vpop.f32.mrf.mxu0
        %v1303 = vadd.f32 %v1106, %v1302
        %v1304 = vand.u32 %v611, 4294901760
        %v1305 = vsub.f32 %v611, %v1304
        %1306 = vmatmul.f32.gmra.mxu0 %v1305
        %v1307 = vpop.f32.mrf.mxu0
        %v1308 = vadd.f32 %v1110, %v1307
        %v1309 = vand.u32 %v614, 4294901760
        %v1310 = vsub.f32 %v614, %v1309
        %1311 = vmatmul.f32.gmra.mxu0 %v1310
        %v1312 = vpop.f32.mrf.mxu0
        %v1313 = vadd.f32 %v1114, %v1312
        %v1314 = vand.u32 %v617, 4294901760
        %v1315 = vsub.f32 %v617, %v1314
        %1316 = vmatmul.f32.gmra.mxu0 %v1315
        %v1317 = vpop.f32.mrf.mxu0
        %v1318 = vadd.f32 %v1118, %v1317
        %v1319 = vand.u32 %v620, 4294901760
        %v1320 = vsub.f32 %v620, %v1319
        %1321 = vmatmul.f32.gmra.mxu0 %v1320
        %v1322 = vpop.f32.mrf.mxu0
        %v1323 = vadd.f32 %v1122, %v1322
        %v1324 = vand.u32 %v623, 4294901760
        %v1325 = vsub.f32 %v623, %v1324
        %1326 = vmatmul.f32.gmra.mxu0 %v1325
        %v1327 = vpop.f32.mrf.mxu0
        %v1328 = vadd.f32 %v1126, %v1327
        %v1329 = vand.u32 %v626, 4294901760
        %v1330 = vsub.f32 %v626, %v1329
        %1331 = vmatmul.f32.gmra.mxu0 %v1330
        %v1332 = vpop.f32.mrf.mxu0
        %v1333 = vadd.f32 %v1130, %v1332
        %v1334 = vand.u32 %v629, 4294901760
        %v1335 = vsub.f32 %v629, %v1334
        %1336 = vmatmul.f32.gmra.mxu0 %v1335
        %v1337 = vpop.f32.mrf.mxu0
        %v1338 = vadd.f32 %v1134, %v1337
        %v1339 = vand.u32 %v632, 4294901760
        %v1340 = vsub.f32 %v632, %v1339
        %1341 = vmatmul.f32.gmra.mxu0 %v1340
        %v1342 = vpop.f32.mrf.mxu0
        %v1343 = vadd.f32 %v1138, %v1342
        %v1344 = vand.u32 %v635, 4294901760
        %v1345 = vsub.f32 %v635, %v1344
        %1346 = vmatmul.f32.gmra.mxu0 %v1345
        %v1347 = vpop.f32.mrf.mxu0
        %v1348 = vadd.f32 %v1142, %v1347
        %v1349 = vand.u32 %v638, 4294901760
        %v1350 = vsub.f32 %v638, %v1349
        %1351 = vmatmul.f32.gmra.mxu0 %v1350
        %v1352 = vpop.f32.mrf.mxu0
        %v1353 = vadd.f32 %v1146, %v1352
        %v1354 = vand.u32 %v641, 4294901760
        %v1355 = vsub.f32 %v641, %v1354
        %1356 = vmatmul.f32.gmra.mxu0 %v1355
        %v1357 = vpop.f32.mrf.mxu0
        %v1358 = vadd.f32 %v1150, %v1357
        %v1359 = vand.u32 %v644, 4294901760
        %v1360 = vsub.f32 %v644, %v1359
        %1361 = vmatmul.f32.gmra.mxu0 %v1360
        %v1362 = vpop.f32.mrf.mxu0
        %v1363 = vadd.f32 %v1154, %v1362
        %v1364 = vand.u32 %v647, 4294901760
        %v1365 = vsub.f32 %v647, %v1364
        %1366 = vmatmul.f32.gmra.mxu0 %v1365
        %v1367 = vpop.f32.mrf.mxu0
        %v1368 = vadd.f32 %v1158, %v1367
        %v1369 = vand.u32 %v650, 4294901760
        %v1370 = vsub.f32 %v650, %v1369
        %1371 = vmatmul.f32.gmra.mxu0 %v1370
        %v1372 = vpop.f32.mrf.mxu0
        %v1373 = vadd.f32 %v1162, %v1372
        %v1374 = vand.u32 %v653, 4294901760
        %v1375 = vsub.f32 %v653, %v1374
        %1376 = vmatmul.f32.gmra.mxu0 %v1375
        %v1377 = vpop.f32.mrf.mxu0
        %v1378 = vadd.f32 %v1166, %v1377
        %v1379 = vand.u32 %v656, 4294901760
        %v1380 = vsub.f32 %v656, %v1379
        %1381 = vmatmul.f32.gmra.mxu0 %v1380
        %v1382 = vpop.f32.mrf.mxu0
        %v1383 = vadd.f32 %v1170, %v1382
        %1384 = vdwg.mxu0
        %1385 = vmatpush.msra.mxu0 0.0
        %1386 = vmatpush.msra.mxu0 0.0
        %1387 = vmatpush.msra.mxu0 0.0
        %1388 = vmatpush.msra.mxu0 0.0
        %1389 = vmatpush.msra.mxu0 0.0
        %1390 = vmatpush.msra.mxu0 0.0
        %1391 = vmatpush.msra.mxu0 0.0
        %1392 = vmatpush.msra.mxu0 0.0
        %v1393 = vand.u32 %v511, 4294901760
        %1394 = vmatpush.msra.mxu0 %v1393
        %v1395 = vand.u32 %v509, 4294901760
        %1396 = vmatpush.msra.mxu0 %v1395
        %v1397 = vand.u32 %v507, 4294901760
        %1398 = vmatpush.msra.mxu0 %v1397
        %v1399 = vand.u32 %v505, 4294901760
        %1400 = vmatpush.msra.mxu0 %v1399
        %v1401 = vand.u32 %v503, 4294901760
        %1402 = vmatpush.msra.mxu0 %v1401
        %v1403 = vand.u32 %v501, 4294901760
        %1404 = vmatpush.msra.mxu0 %v1403
        %v1405 = vand.u32 %v499, 4294901760
        %1406 = vmatpush.msra.mxu0 %v1405
        %v1407 = vand.u32 %v497, 4294901760
        %1408 = vmatpush.msra.mxu0 %v1407
        %v1409 = vand.u32 %v551, 4294901760
        %v1410 = vsub.f32 %v551, %v1409
        %v1411 = vand.u32 %v1410, 4294901760
        %1412 = vmatmul.f32.gmra.mxu0 %v1411
        %v1413 = vpop.f32.mrf.mxu0
        %v1414 = vadd.f32 %v1208, %v1413
        %v1415 = vand.u32 %v554, 4294901760
        %v1416 = vsub.f32 %v554, %v1415
        %v1417 = vand.u32 %v1416, 4294901760
        %1418 = vmatmul.f32.gmra.mxu0 %v1417
        %v1419 = vpop.f32.mrf.mxu0
        %v1420 = vadd.f32 %v1213, %v1419
        %v1421 = vand.u32 %v557, 4294901760
        %v1422 = vsub.f32 %v557, %v1421
        %v1423 = vand.u32 %v1422, 4294901760
        %1424 = vmatmul.f32.gmra.mxu0 %v1423
        %v1425 = vpop.f32.mrf.mxu0
        %v1426 = vadd.f32 %v1218, %v1425
        %v1427 = vand.u32 %v560, 4294901760
        %v1428 = vsub.f32 %v560, %v1427
        %v1429 = vand.u32 %v1428, 4294901760
        %1430 = vmatmul.f32.gmra.mxu0 %v1429
        %v1431 = vpop.f32.mrf.mxu0
        %v1432 = vadd.f32 %v1223, %v1431
        %v1433 = vand.u32 %v563, 4294901760
        %v1434 = vsub.f32 %v563, %v1433
        %v1435 = vand.u32 %v1434, 4294901760
        %1436 = vmatmul.f32.gmra.mxu0 %v1435
        %v1437 = vpop.f32.mrf.mxu0
        %v1438 = vadd.f32 %v1228, %v1437
        %v1439 = vand.u32 %v566, 4294901760
        %v1440 = vsub.f32 %v566, %v1439
        %v1441 = vand.u32 %v1440, 4294901760
        %1442 = vmatmul.f32.gmra.mxu0 %v1441
        %v1443 = vpop.f32.mrf.mxu0
        %v1444 = vadd.f32 %v1233, %v1443
        %v1445 = vand.u32 %v569, 4294901760
        %v1446 = vsub.f32 %v569, %v1445
        %v1447 = vand.u32 %v1446, 4294901760
        %1448 = vmatmul.f32.gmra.mxu0 %v1447
        %v1449 = vpop.f32.mrf.mxu0
        %v1450 = vadd.f32 %v1238, %v1449
        %v1451 = vand.u32 %v572, 4294901760
        %v1452 = vsub.f32 %v572, %v1451
        %v1453 = vand.u32 %v1452, 4294901760
        %1454 = vmatmul.f32.gmra.mxu0 %v1453
        %v1455 = vpop.f32.mrf.mxu0
        %v1456 = vadd.f32 %v1243, %v1455
        %v1457 = vand.u32 %v575, 4294901760
        %v1458 = vsub.f32 %v575, %v1457
        %v1459 = vand.u32 %v1458, 4294901760
        %1460 = vmatmul.f32.gmra.mxu0 %v1459
        %v1461 = vpop.f32.mrf.mxu0
        %v1462 = vadd.f32 %v1248, %v1461
        %v1463 = vand.u32 %v578, 4294901760
        %v1464 = vsub.f32 %v578, %v1463
        %v1465 = vand.u32 %v1464, 4294901760
        %1466 = vmatmul.f32.gmra.mxu0 %v1465
        %v1467 = vpop.f32.mrf.mxu0
        %v1468 = vadd.f32 %v1253, %v1467
        %v1469 = vand.u32 %v581, 4294901760
        %v1470 = vsub.f32 %v581, %v1469
        %v1471 = vand.u32 %v1470, 4294901760
        %1472 = vmatmul.f32.gmra.mxu0 %v1471
        %v1473 = vpop.f32.mrf.mxu0
        %v1474 = vadd.f32 %v1258, %v1473
        %v1475 = vand.u32 %v584, 4294901760
        %v1476 = vsub.f32 %v584, %v1475
        %v1477 = vand.u32 %v1476, 4294901760
        %1478 = vmatmul.f32.gmra.mxu0 %v1477
        %v1479 = vpop.f32.mrf.mxu0
        %v1480 = vadd.f32 %v1263, %v1479
        %v1481 = vand.u32 %v587, 4294901760
        %v1482 = vsub.f32 %v587, %v1481
        %v1483 = vand.u32 %v1482, 4294901760
        %1484 = vmatmul.f32.gmra.mxu0 %v1483
        %v1485 = vpop.f32.mrf.mxu0
        %v1486 = vadd.f32 %v1268, %v1485
        %v1487 = vand.u32 %v590, 4294901760
        %v1488 = vsub.f32 %v590, %v1487
        %v1489 = vand.u32 %v1488, 4294901760
        %1490 = vmatmul.f32.gmra.mxu0 %v1489
        %v1491 = vpop.f32.mrf.mxu0
        %v1492 = vadd.f32 %v1273, %v1491
        %v1493 = vand.u32 %v593, 4294901760
        %v1494 = vsub.f32 %v593, %v1493
        %v1495 = vand.u32 %v1494, 4294901760
        %1496 = vmatmul.f32.gmra.mxu0 %v1495
        %v1497 = vpop.f32.mrf.mxu0
        %v1498 = vadd.f32 %v1278, %v1497
        %v1499 = vand.u32 %v596, 4294901760
        %v1500 = vsub.f32 %v596, %v1499
        %v1501 = vand.u32 %v1500, 4294901760
        %1502 = vmatmul.f32.gmra.mxu0 %v1501
        %v1503 = vpop.f32.mrf.mxu0
        %v1504 = vadd.f32 %v1283, %v1503
        %v1505 = vand.u32 %v599, 4294901760
        %v1506 = vsub.f32 %v599, %v1505
        %v1507 = vand.u32 %v1506, 4294901760
        %1508 = vmatmul.f32.gmra.mxu0 %v1507
        %v1509 = vpop.f32.mrf.mxu0
        %v1510 = vadd.f32 %v1288, %v1509
        %v1511 = vand.u32 %v602, 4294901760
        %v1512 = vsub.f32 %v602, %v1511
        %v1513 = vand.u32 %v1512, 4294901760
        %1514 = vmatmul.f32.gmra.mxu0 %v1513
        %v1515 = vpop.f32.mrf.mxu0
        %v1516 = vadd.f32 %v1293, %v1515
        %v1517 = vand.u32 %v605, 4294901760
        %v1518 = vsub.f32 %v605, %v1517
        %v1519 = vand.u32 %v1518, 4294901760
        %1520 = vmatmul.f32.gmra.mxu0 %v1519
        %v1521 = vpop.f32.mrf.mxu0
        %v1522 = vadd.f32 %v1298, %v1521
        %v1523 = vand.u32 %v608, 4294901760
        %v1524 = vsub.f32 %v608, %v1523
        %v1525 = vand.u32 %v1524, 4294901760
        %1526 = vmatmul.f32.gmra.mxu0 %v1525
        %v1527 = vpop.f32.mrf.mxu0
        %v1528 = vadd.f32 %v1303, %v1527
        %v1529 = vand.u32 %v611, 4294901760
        %v1530 = vsub.f32 %v611, %v1529
        %v1531 = vand.u32 %v1530, 4294901760
        %1532 = vmatmul.f32.gmra.mxu0 %v1531
        %v1533 = vpop.f32.mrf.mxu0
        %v1534 = vadd.f32 %v1308, %v1533
        %v1535 = vand.u32 %v614, 4294901760
        %v1536 = vsub.f32 %v614, %v1535
        %v1537 = vand.u32 %v1536, 4294901760
        %1538 = vmatmul.f32.gmra.mxu0 %v1537
        %v1539 = vpop.f32.mrf.mxu0
        %v1540 = vadd.f32 %v1313, %v1539
        %v1541 = vand.u32 %v617, 4294901760
        %v1542 = vsub.f32 %v617, %v1541
        %v1543 = vand.u32 %v1542, 4294901760
        %1544 = vmatmul.f32.gmra.mxu0 %v1543
        %v1545 = vpop.f32.mrf.mxu0
        %v1546 = vadd.f32 %v1318, %v1545
        %v1547 = vand.u32 %v620, 4294901760
        %v1548 = vsub.f32 %v620, %v1547
        %v1549 = vand.u32 %v1548, 4294901760
        %1550 = vmatmul.f32.gmra.mxu0 %v1549
        %v1551 = vpop.f32.mrf.mxu0
        %v1552 = vadd.f32 %v1323, %v1551
        %v1553 = vand.u32 %v623, 4294901760
        %v1554 = vsub.f32 %v623, %v1553
        %v1555 = vand.u32 %v1554, 4294901760
        %1556 = vmatmul.f32.gmra.mxu0 %v1555
        %v1557 = vpop.f32.mrf.mxu0
        %v1558 = vadd.f32 %v1328, %v1557
        %v1559 = vand.u32 %v626, 4294901760
        %v1560 = vsub.f32 %v626, %v1559
        %v1561 = vand.u32 %v1560, 4294901760
        %1562 = vmatmul.f32.gmra.mxu0 %v1561
        %v1563 = vpop.f32.mrf.mxu0
        %v1564 = vadd.f32 %v1333, %v1563
        %v1565 = vand.u32 %v629, 4294901760
        %v1566 = vsub.f32 %v629, %v1565
        %v1567 = vand.u32 %v1566, 4294901760
        %1568 = vmatmul.f32.gmra.mxu0 %v1567
        %v1569 = vpop.f32.mrf.mxu0
        %v1570 = vadd.f32 %v1338, %v1569
        %v1571 = vand.u32 %v632, 4294901760
        %v1572 = vsub.f32 %v632, %v1571
        %v1573 = vand.u32 %v1572, 4294901760
        %1574 = vmatmul.f32.gmra.mxu0 %v1573
        %v1575 = vpop.f32.mrf.mxu0
        %v1576 = vadd.f32 %v1343, %v1575
        %v1577 = vand.u32 %v635, 4294901760
        %v1578 = vsub.f32 %v635, %v1577
        %v1579 = vand.u32 %v1578, 4294901760
        %1580 = vmatmul.f32.gmra.mxu0 %v1579
        %v1581 = vpop.f32.mrf.mxu0
        %v1582 = vadd.f32 %v1348, %v1581
        %v1583 = vand.u32 %v638, 4294901760
        %v1584 = vsub.f32 %v638, %v1583
        %v1585 = vand.u32 %v1584, 4294901760
        %1586 = vmatmul.f32.gmra.mxu0 %v1585
        %v1587 = vpop.f32.mrf.mxu0
        %v1588 = vadd.f32 %v1353, %v1587
        %v1589 = vand.u32 %v641, 4294901760
        %v1590 = vsub.f32 %v641, %v1589
        %v1591 = vand.u32 %v1590, 4294901760
        %1592 = vmatmul.f32.gmra.mxu0 %v1591
        %v1593 = vpop.f32.mrf.mxu0
        %v1594 = vadd.f32 %v1358, %v1593
        %v1595 = vand.u32 %v644, 4294901760
        %v1596 = vsub.f32 %v644, %v1595
        %v1597 = vand.u32 %v1596, 4294901760
        %1598 = vmatmul.f32.gmra.mxu0 %v1597
        %v1599 = vpop.f32.mrf.mxu0
        %v1600 = vadd.f32 %v1363, %v1599
        %v1601 = vand.u32 %v647, 4294901760
        %v1602 = vsub.f32 %v647, %v1601
        %v1603 = vand.u32 %v1602, 4294901760
        %1604 = vmatmul.f32.gmra.mxu0 %v1603
        %v1605 = vpop.f32.mrf.mxu0
        %v1606 = vadd.f32 %v1368, %v1605
        %v1607 = vand.u32 %v650, 4294901760
        %v1608 = vsub.f32 %v650, %v1607
        %v1609 = vand.u32 %v1608, 4294901760
        %1610 = vmatmul.f32.gmra.mxu0 %v1609
        %v1611 = vpop.f32.mrf.mxu0
        %v1612 = vadd.f32 %v1373, %v1611
        %v1613 = vand.u32 %v653, 4294901760
        %v1614 = vsub.f32 %v653, %v1613
        %v1615 = vand.u32 %v1614, 4294901760
        %1616 = vmatmul.f32.gmra.mxu0 %v1615
        %v1617 = vpop.f32.mrf.mxu0
        %v1618 = vadd.f32 %v1378, %v1617
        %v1619 = vand.u32 %v656, 4294901760
        %v1620 = vsub.f32 %v656, %v1619
        %v1621 = vand.u32 %v1620, 4294901760
        %1622 = vmatmul.f32.gmra.mxu0 %v1621
        %v1623 = vpop.f32.mrf.mxu0
        %v1624 = vadd.f32 %v1383, %v1623
        %1625 = vdwg.mxu0
        %1626 = vmatpush.msra.mxu0 0.0
        %1627 = vmatpush.msra.mxu0 0.0
        %1628 = vmatpush.msra.mxu0 0.0
        %1629 = vmatpush.msra.mxu0 0.0
        %1630 = vmatpush.msra.mxu0 0.0
        %1631 = vmatpush.msra.mxu0 0.0
        %1632 = vmatpush.msra.mxu0 0.0
        %1633 = vmatpush.msra.mxu0 0.0
        %v1634 = vand.u32 %v511, 4294901760
        %v1635 = vsub.f32 %v511, %v1634
        %v1636 = vand.u32 %v1635, 4294901760
        %1637 = vmatpush.msra.mxu0 %v1636
        %v1638 = vand.u32 %v509, 4294901760
        %v1639 = vsub.f32 %v509, %v1638
        %v1640 = vand.u32 %v1639, 4294901760
        %1641 = vmatpush.msra.mxu0 %v1640
        %v1642 = vand.u32 %v507, 4294901760
        %v1643 = vsub.f32 %v507, %v1642
        %v1644 = vand.u32 %v1643, 4294901760
        %1645 = vmatpush.msra.mxu0 %v1644
        %v1646 = vand.u32 %v505, 4294901760
        %v1647 = vsub.f32 %v505, %v1646
        %v1648 = vand.u32 %v1647, 4294901760
        %1649 = vmatpush.msra.mxu0 %v1648
        %v1650 = vand.u32 %v503, 4294901760
        %v1651 = vsub.f32 %v503, %v1650
        %v1652 = vand.u32 %v1651, 4294901760
        %1653 = vmatpush.msra.mxu0 %v1652
        %v1654 = vand.u32 %v501, 4294901760
        %v1655 = vsub.f32 %v501, %v1654
        %v1656 = vand.u32 %v1655, 4294901760
        %1657 = vmatpush.msra.mxu0 %v1656
        %v1658 = vand.u32 %v499, 4294901760
        %v1659 = vsub.f32 %v499, %v1658
        %v1660 = vand.u32 %v1659, 4294901760
        %1661 = vmatpush.msra.mxu0 %v1660
        %v1662 = vand.u32 %v497, 4294901760
        %v1663 = vsub.f32 %v497, %v1662
        %v1664 = vand.u32 %v1663, 4294901760
        %1665 = vmatpush.msra.mxu0 %v1664
        %v1666 = vand.u32 %v551, 4294901760
        %1667 = vmatmul.f32.gmra.mxu0 %v1666
        %v1668 = vpop.f32.mrf.mxu0
        %v1669 = vadd.f32 %v1414, %v1668
        %v1670 = vand.u32 %v554, 4294901760
        %1671 = vmatmul.f32.gmra.mxu0 %v1670
        %v1672 = vpop.f32.mrf.mxu0
        %v1673 = vadd.f32 %v1420, %v1672
        %v1674 = vand.u32 %v557, 4294901760
        %1675 = vmatmul.f32.gmra.mxu0 %v1674
        %v1676 = vpop.f32.mrf.mxu0
        %v1677 = vadd.f32 %v1426, %v1676
        %v1678 = vand.u32 %v560, 4294901760
        %1679 = vmatmul.f32.gmra.mxu0 %v1678
        %v1680 = vpop.f32.mrf.mxu0
        %v1681 = vadd.f32 %v1432, %v1680
        %v1682 = vand.u32 %v563, 4294901760
        %1683 = vmatmul.f32.gmra.mxu0 %v1682
        %v1684 = vpop.f32.mrf.mxu0
        %v1685 = vadd.f32 %v1438, %v1684
        %v1686 = vand.u32 %v566, 4294901760
        %1687 = vmatmul.f32.gmra.mxu0 %v1686
        %v1688 = vpop.f32.mrf.mxu0
        %v1689 = vadd.f32 %v1444, %v1688
        %v1690 = vand.u32 %v569, 4294901760
        %1691 = vmatmul.f32.gmra.mxu0 %v1690
        %v1692 = vpop.f32.mrf.mxu0
        %v1693 = vadd.f32 %v1450, %v1692
        %v1694 = vand.u32 %v572, 4294901760
        %1695 = vmatmul.f32.gmra.mxu0 %v1694
        %v1696 = vpop.f32.mrf.mxu0
        %v1697 = vadd.f32 %v1456, %v1696
        %v1698 = vand.u32 %v575, 4294901760
        %1699 = vmatmul.f32.gmra.mxu0 %v1698
        %v1700 = vpop.f32.mrf.mxu0
        %v1701 = vadd.f32 %v1462, %v1700
        %v1702 = vand.u32 %v578, 4294901760
        %1703 = vmatmul.f32.gmra.mxu0 %v1702
        %v1704 = vpop.f32.mrf.mxu0
        %v1705 = vadd.f32 %v1468, %v1704
        %v1706 = vand.u32 %v581, 4294901760
        %1707 = vmatmul.f32.gmra.mxu0 %v1706
        %v1708 = vpop.f32.mrf.mxu0
        %v1709 = vadd.f32 %v1474, %v1708
        %v1710 = vand.u32 %v584, 4294901760
        %1711 = vmatmul.f32.gmra.mxu0 %v1710
        %v1712 = vpop.f32.mrf.mxu0
        %v1713 = vadd.f32 %v1480, %v1712
        %v1714 = vand.u32 %v587, 4294901760
        %1715 = vmatmul.f32.gmra.mxu0 %v1714
        %v1716 = vpop.f32.mrf.mxu0
        %v1717 = vadd.f32 %v1486, %v1716
        %v1718 = vand.u32 %v590, 4294901760
        %1719 = vmatmul.f32.gmra.mxu0 %v1718
        %v1720 = vpop.f32.mrf.mxu0
        %v1721 = vadd.f32 %v1492, %v1720
        %v1722 = vand.u32 %v593, 4294901760
        %1723 = vmatmul.f32.gmra.mxu0 %v1722
        %v1724 = vpop.f32.mrf.mxu0
        %v1725 = vadd.f32 %v1498, %v1724
        %v1726 = vand.u32 %v596, 4294901760
        %1727 = vmatmul.f32.gmra.mxu0 %v1726
        %v1728 = vpop.f32.mrf.mxu0
        %v1729 = vadd.f32 %v1504, %v1728
        %v1730 = vand.u32 %v599, 4294901760
        %1731 = vmatmul.f32.gmra.mxu0 %v1730
        %v1732 = vpop.f32.mrf.mxu0
        %v1733 = vadd.f32 %v1510, %v1732
        %v1734 = vand.u32 %v602, 4294901760
        %1735 = vmatmul.f32.gmra.mxu0 %v1734
        %v1736 = vpop.f32.mrf.mxu0
        %v1737 = vadd.f32 %v1516, %v1736
        %v1738 = vand.u32 %v605, 4294901760
        %1739 = vmatmul.f32.gmra.mxu0 %v1738
        %v1740 = vpop.f32.mrf.mxu0
        %v1741 = vadd.f32 %v1522, %v1740
        %v1742 = vand.u32 %v608, 4294901760
        %1743 = vmatmul.f32.gmra.mxu0 %v1742
        %v1744 = vpop.f32.mrf.mxu0
        %v1745 = vadd.f32 %v1528, %v1744
        %v1746 = vand.u32 %v611, 4294901760
        %1747 = vmatmul.f32.gmra.mxu0 %v1746
        %v1748 = vpop.f32.mrf.mxu0
        %v1749 = vadd.f32 %v1534, %v1748
        %v1750 = vand.u32 %v614, 4294901760
        %1751 = vmatmul.f32.gmra.mxu0 %v1750
        %v1752 = vpop.f32.mrf.mxu0
        %v1753 = vadd.f32 %v1540, %v1752
        %v1754 = vand.u32 %v617, 4294901760
        %1755 = vmatmul.f32.gmra.mxu0 %v1754
        %v1756 = vpop.f32.mrf.mxu0
        %v1757 = vadd.f32 %v1546, %v1756
        %v1758 = vand.u32 %v620, 4294901760
        %1759 = vmatmul.f32.gmra.mxu0 %v1758
        %v1760 = vpop.f32.mrf.mxu0
        %v1761 = vadd.f32 %v1552, %v1760
        %v1762 = vand.u32 %v623, 4294901760
        %1763 = vmatmul.f32.gmra.mxu0 %v1762
        %v1764 = vpop.f32.mrf.mxu0
        %v1765 = vadd.f32 %v1558, %v1764
        %v1766 = vand.u32 %v626, 4294901760
        %1767 = vmatmul.f32.gmra.mxu0 %v1766
        %v1768 = vpop.f32.mrf.mxu0
        %v1769 = vadd.f32 %v1564, %v1768
        %v1770 = vand.u32 %v629, 4294901760
        %1771 = vmatmul.f32.gmra.mxu0 %v1770
        %v1772 = vpop.f32.mrf.mxu0
        %v1773 = vadd.f32 %v1570, %v1772
        %v1774 = vand.u32 %v632, 4294901760
        %1775 = vmatmul.f32.gmra.mxu0 %v1774
        %v1776 = vpop.f32.mrf.mxu0
        %v1777 = vadd.f32 %v1576, %v1776
        %v1778 = vand.u32 %v635, 4294901760
        %1779 = vmatmul.f32.gmra.mxu0 %v1778
        %v1780 = vpop.f32.mrf.mxu0
        %v1781 = vadd.f32 %v1582, %v1780
        %v1782 = vand.u32 %v638, 4294901760
        %1783 = vmatmul.f32.gmra.mxu0 %v1782
        %v1784 = vpop.f32.mrf.mxu0
        %v1785 = vadd.f32 %v1588, %v1784
        %v1786 = vand.u32 %v641, 4294901760
        %1787 = vmatmul.f32.gmra.mxu0 %v1786
        %v1788 = vpop.f32.mrf.mxu0
        %v1789 = vadd.f32 %v1594, %v1788
        %v1790 = vand.u32 %v644, 4294901760
        %1791 = vmatmul.f32.gmra.mxu0 %v1790
        %v1792 = vpop.f32.mrf.mxu0
        %v1793 = vadd.f32 %v1600, %v1792
        %v1794 = vand.u32 %v647, 4294901760
        %1795 = vmatmul.f32.gmra.mxu0 %v1794
        %v1796 = vpop.f32.mrf.mxu0
        %v1797 = vadd.f32 %v1606, %v1796
        %v1798 = vand.u32 %v650, 4294901760
        %1799 = vmatmul.f32.gmra.mxu0 %v1798
        %v1800 = vpop.f32.mrf.mxu0
        %v1801 = vadd.f32 %v1612, %v1800
        %v1802 = vand.u32 %v653, 4294901760
        %1803 = vmatmul.f32.gmra.mxu0 %v1802
        %v1804 = vpop.f32.mrf.mxu0
        %v1805 = vadd.f32 %v1618, %v1804
        %v1806 = vand.u32 %v656, 4294901760
        %1807 = vmatmul.f32.gmra.mxu0 %v1806
        %v1808 = vpop.f32.mrf.mxu0
        %v1809 = vadd.f32 %v1624, %v1808
        %1810 = vdwg.mxu0
        %1811 = vmatpush.msra.mxu0 0.0
        %1812 = vmatpush.msra.mxu0 0.0
        %1813 = vmatpush.msra.mxu0 0.0
        %1814 = vmatpush.msra.mxu0 0.0
        %1815 = vmatpush.msra.mxu0 0.0
        %1816 = vmatpush.msra.mxu0 0.0
        %1817 = vmatpush.msra.mxu0 0.0
        %1818 = vmatpush.msra.mxu0 0.0
        %v1819 = vand.u32 %v511, 4294901760
        %1820 = vmatpush.msra.mxu0 %v1819
        %v1821 = vand.u32 %v509, 4294901760
        %1822 = vmatpush.msra.mxu0 %v1821
        %v1823 = vand.u32 %v507, 4294901760
        %1824 = vmatpush.msra.mxu0 %v1823
        %v1825 = vand.u32 %v505, 4294901760
        %1826 = vmatpush.msra.mxu0 %v1825
        %v1827 = vand.u32 %v503, 4294901760
        %1828 = vmatpush.msra.mxu0 %v1827
        %v1829 = vand.u32 %v501, 4294901760
        %1830 = vmatpush.msra.mxu0 %v1829
        %v1831 = vand.u32 %v499, 4294901760
        %1832 = vmatpush.msra.mxu0 %v1831
        %v1833 = vand.u32 %v497, 4294901760
        %1834 = vmatpush.msra.mxu0 %v1833
        %v1835 = vand.u32 %v551, 4294901760
        %1836 = vmatmul.f32.gmra.mxu0 %v1835
        %v1837 = vpop.f32.mrf.mxu0
        %v1838 = vadd.f32 %v1669, %v1837
        %v1839 = vand.u32 %v554, 4294901760
        %1840 = vmatmul.f32.gmra.mxu0 %v1839
        %v1841 = vpop.f32.mrf.mxu0
        %v1842 = vadd.f32 %v1673, %v1841
        %v1843 = vand.u32 %v557, 4294901760
        %1844 = vmatmul.f32.gmra.mxu0 %v1843
        %v1845 = vpop.f32.mrf.mxu0
        %v1846 = vadd.f32 %v1677, %v1845
        %v1847 = vand.u32 %v560, 4294901760
        %1848 = vmatmul.f32.gmra.mxu0 %v1847
        %v1849 = vpop.f32.mrf.mxu0
        %v1850 = vadd.f32 %v1681, %v1849
        %v1851 = vand.u32 %v563, 4294901760
        %1852 = vmatmul.f32.gmra.mxu0 %v1851
        %v1853 = vpop.f32.mrf.mxu0
        %v1854 = vadd.f32 %v1685, %v1853
        %v1855 = vand.u32 %v566, 4294901760
        %1856 = vmatmul.f32.gmra.mxu0 %v1855
        %v1857 = vpop.f32.mrf.mxu0
        %v1858 = vadd.f32 %v1689, %v1857
        %v1859 = vand.u32 %v569, 4294901760
        %1860 = vmatmul.f32.gmra.mxu0 %v1859
        %v1861 = vpop.f32.mrf.mxu0
        %v1862 = vadd.f32 %v1693, %v1861
        %v1863 = vand.u32 %v572, 4294901760
        %1864 = vmatmul.f32.gmra.mxu0 %v1863
        %v1865 = vpop.f32.mrf.mxu0
        %v1866 = vadd.f32 %v1697, %v1865
        %v1867 = vand.u32 %v575, 4294901760
        %1868 = vmatmul.f32.gmra.mxu0 %v1867
        %v1869 = vpop.f32.mrf.mxu0
        %v1870 = vadd.f32 %v1701, %v1869
        %v1871 = vand.u32 %v578, 4294901760
        %1872 = vmatmul.f32.gmra.mxu0 %v1871
        %v1873 = vpop.f32.mrf.mxu0
        %v1874 = vadd.f32 %v1705, %v1873
        %v1875 = vand.u32 %v581, 4294901760
        %1876 = vmatmul.f32.gmra.mxu0 %v1875
        %v1877 = vpop.f32.mrf.mxu0
        %v1878 = vadd.f32 %v1709, %v1877
        %v1879 = vand.u32 %v584, 4294901760
        %1880 = vmatmul.f32.gmra.mxu0 %v1879
        %v1881 = vpop.f32.mrf.mxu0
        %v1882 = vadd.f32 %v1713, %v1881
        %v1883 = vand.u32 %v587, 4294901760
        %1884 = vmatmul.f32.gmra.mxu0 %v1883
        %v1885 = vpop.f32.mrf.mxu0
        %v1886 = vadd.f32 %v1717, %v1885
        %v1887 = vand.u32 %v590, 4294901760
        %1888 = vmatmul.f32.gmra.mxu0 %v1887
        %v1889 = vpop.f32.mrf.mxu0
        %v1890 = vadd.f32 %v1721, %v1889
        %v1891 = vand.u32 %v593, 4294901760
        %1892 = vmatmul.f32.gmra.mxu0 %v1891
        %v1893 = vpop.f32.mrf.mxu0
        %v1894 = vadd.f32 %v1725, %v1893
        %v1895 = vand.u32 %v596, 4294901760
        %1896 = vmatmul.f32.gmra.mxu0 %v1895
        %v1897 = vpop.f32.mrf.mxu0
        %v1898 = vadd.f32 %v1729, %v1897
        %v1899 = vand.u32 %v599, 4294901760
        %1900 = vmatmul.f32.gmra.mxu0 %v1899
        %v1901 = vpop.f32.mrf.mxu0
        %v1902 = vadd.f32 %v1733, %v1901
        %v1903 = vand.u32 %v602, 4294901760
        %1904 = vmatmul.f32.gmra.mxu0 %v1903
        %v1905 = vpop.f32.mrf.mxu0
        %v1906 = vadd.f32 %v1737, %v1905
        %v1907 = vand.u32 %v605, 4294901760
        %1908 = vmatmul.f32.gmra.mxu0 %v1907
        %v1909 = vpop.f32.mrf.mxu0
        %v1910 = vadd.f32 %v1741, %v1909
        %v1911 = vand.u32 %v608, 4294901760
        %1912 = vmatmul.f32.gmra.mxu0 %v1911
        %v1913 = vpop.f32.mrf.mxu0
        %v1914 = vadd.f32 %v1745, %v1913
        %v1915 = vand.u32 %v611, 4294901760
        %1916 = vmatmul.f32.gmra.mxu0 %v1915
        %v1917 = vpop.f32.mrf.mxu0
        %v1918 = vadd.f32 %v1749, %v1917
        %v1919 = vand.u32 %v614, 4294901760
        %1920 = vmatmul.f32.gmra.mxu0 %v1919
        %v1921 = vpop.f32.mrf.mxu0
        %v1922 = vadd.f32 %v1753, %v1921
        %v1923 = vand.u32 %v617, 4294901760
        %1924 = vmatmul.f32.gmra.mxu0 %v1923
        %v1925 = vpop.f32.mrf.mxu0
        %v1926 = vadd.f32 %v1757, %v1925
        %v1927 = vand.u32 %v620, 4294901760
        %1928 = vmatmul.f32.gmra.mxu0 %v1927
        %v1929 = vpop.f32.mrf.mxu0
        %v1930 = vadd.f32 %v1761, %v1929
        %v1931 = vand.u32 %v623, 4294901760
        %1932 = vmatmul.f32.gmra.mxu0 %v1931
        %v1933 = vpop.f32.mrf.mxu0
        %v1934 = vadd.f32 %v1765, %v1933
        %v1935 = vand.u32 %v626, 4294901760
        %1936 = vmatmul.f32.gmra.mxu0 %v1935
        %v1937 = vpop.f32.mrf.mxu0
        %v1938 = vadd.f32 %v1769, %v1937
        %v1939 = vand.u32 %v629, 4294901760
        %1940 = vmatmul.f32.gmra.mxu0 %v1939
        %v1941 = vpop.f32.mrf.mxu0
        %v1942 = vadd.f32 %v1773, %v1941
        %v1943 = vand.u32 %v632, 4294901760
        %1944 = vmatmul.f32.gmra.mxu0 %v1943
        %v1945 = vpop.f32.mrf.mxu0
        %v1946 = vadd.f32 %v1777, %v1945
        %v1947 = vand.u32 %v635, 4294901760
        %1948 = vmatmul.f32.gmra.mxu0 %v1947
        %v1949 = vpop.f32.mrf.mxu0
        %v1950 = vadd.f32 %v1781, %v1949
        %v1951 = vand.u32 %v638, 4294901760
        %1952 = vmatmul.f32.gmra.mxu0 %v1951
        %v1953 = vpop.f32.mrf.mxu0
        %v1954 = vadd.f32 %v1785, %v1953
        %v1955 = vand.u32 %v641, 4294901760
        %1956 = vmatmul.f32.gmra.mxu0 %v1955
        %v1957 = vpop.f32.mrf.mxu0
        %v1958 = vadd.f32 %v1789, %v1957
        %v1959 = vand.u32 %v644, 4294901760
        %1960 = vmatmul.f32.gmra.mxu0 %v1959
        %v1961 = vpop.f32.mrf.mxu0
        %v1962 = vadd.f32 %v1793, %v1961
        %v1963 = vand.u32 %v647, 4294901760
        %1964 = vmatmul.f32.gmra.mxu0 %v1963
        %v1965 = vpop.f32.mrf.mxu0
        %v1966 = vadd.f32 %v1797, %v1965
        %v1967 = vand.u32 %v650, 4294901760
        %1968 = vmatmul.f32.gmra.mxu0 %v1967
        %v1969 = vpop.f32.mrf.mxu0
        %v1970 = vadd.f32 %v1801, %v1969
        %v1971 = vand.u32 %v653, 4294901760
        %1972 = vmatmul.f32.gmra.mxu0 %v1971
        %v1973 = vpop.f32.mrf.mxu0
        %v1974 = vadd.f32 %v1805, %v1973
        %v1975 = vand.u32 %v656, 4294901760
        %1976 = vmatmul.f32.gmra.mxu0 %v1975
        %v1977 = vpop.f32.mrf.mxu0
        %v1978 = vadd.f32 %v1809, %v1977
        %1979 = vdwg.mxu0
        %1980 = vmatpush.msra.mxu0 0.0
        %1981 = vmatpush.msra.mxu0 0.0
        %1982 = vmatpush.msra.mxu0 0.0
        %1983 = vmatpush.msra.mxu0 0.0
        %1984 = vmatpush.msra.mxu0 0.0
        %1985 = vmatpush.msra.mxu0 0.0
        %1986 = vmatpush.msra.mxu0 0.0
        %1987 = vmatpush.msra.mxu0 0.0
        %v1988 = vand.u32 %v512, 4294901760
        %1989 = vmatpush.msra.mxu0 %v1988
        %v1990 = vand.u32 %v510, 4294901760
        %1991 = vmatpush.msra.mxu0 %v1990
        %v1992 = vand.u32 %v508, 4294901760
        %1993 = vmatpush.msra.mxu0 %v1992
        %v1994 = vand.u32 %v506, 4294901760
        %1995 = vmatpush.msra.mxu0 %v1994
        %v1996 = vand.u32 %v504, 4294901760
        %1997 = vmatpush.msra.mxu0 %v1996
        %v1998 = vand.u32 %v502, 4294901760
        %1999 = vmatpush.msra.mxu0 %v1998
        %v2000 = vand.u32 %v500, 4294901760
        %2001 = vmatpush.msra.mxu0 %v2000
        %v2002 = vand.u32 %v498, 4294901760
        %2003 = vmatpush.msra.mxu0 %v2002
        %v2004 = vand.u32 %v551, 4294901760
        %v2005 = vsub.f32 %v551, %v2004
        %v2006 = vand.u32 %v2005, 4294901760
        %v2007 = vsub.f32 %v2005, %v2006
        %v2008 = vand.u32 %v2007, 4294901760
        %2009 = vmatmul.f32.gmra.mxu0 %v2008
        %v2010 = vpop.f32.mrf.mxu0
        %v2011 = vadd.f32 0.0, %v2010
        %v2012 = vand.u32 %v554, 4294901760
        %v2013 = vsub.f32 %v554, %v2012
        %v2014 = vand.u32 %v2013, 4294901760
        %v2015 = vsub.f32 %v2013, %v2014
        %v2016 = vand.u32 %v2015, 4294901760
        %2017 = vmatmul.f32.gmra.mxu0 %v2016
        %v2018 = vpop.f32.mrf.mxu0
        %v2019 = vadd.f32 0.0, %v2018
        %v2020 = vand.u32 %v557, 4294901760
        %v2021 = vsub.f32 %v557, %v2020
        %v2022 = vand.u32 %v2021, 4294901760
        %v2023 = vsub.f32 %v2021, %v2022
        %v2024 = vand.u32 %v2023, 4294901760
        %2025 = vmatmul.f32.gmra.mxu0 %v2024
        %v2026 = vpop.f32.mrf.mxu0
        %v2027 = vadd.f32 0.0, %v2026
        %v2028 = vand.u32 %v560, 4294901760
        %v2029 = vsub.f32 %v560, %v2028
        %v2030 = vand.u32 %v2029, 4294901760
        %v2031 = vsub.f32 %v2029, %v2030
        %v2032 = vand.u32 %v2031, 4294901760
        %2033 = vmatmul.f32.gmra.mxu0 %v2032
        %v2034 = vpop.f32.mrf.mxu0
        %v2035 = vadd.f32 0.0, %v2034
        %v2036 = vand.u32 %v563, 4294901760
        %v2037 = vsub.f32 %v563, %v2036
        %v2038 = vand.u32 %v2037, 4294901760
        %v2039 = vsub.f32 %v2037, %v2038
        %v2040 = vand.u32 %v2039, 4294901760
        %2041 = vmatmul.f32.gmra.mxu0 %v2040
        %v2042 = vpop.f32.mrf.mxu0
        %v2043 = vadd.f32 0.0, %v2042
        %v2044 = vand.u32 %v566, 4294901760
        %v2045 = vsub.f32 %v566, %v2044
        %v2046 = vand.u32 %v2045, 4294901760
        %v2047 = vsub.f32 %v2045, %v2046
        %v2048 = vand.u32 %v2047, 4294901760
        %2049 = vmatmul.f32.gmra.mxu0 %v2048
        %v2050 = vpop.f32.mrf.mxu0
        %v2051 = vadd.f32 0.0, %v2050
        %v2052 = vand.u32 %v569, 4294901760
        %v2053 = vsub.f32 %v569, %v2052
        %v2054 = vand.u32 %v2053, 4294901760
        %v2055 = vsub.f32 %v2053, %v2054
        %v2056 = vand.u32 %v2055, 4294901760
        %2057 = vmatmul.f32.gmra.mxu0 %v2056
        %v2058 = vpop.f32.mrf.mxu0
        %v2059 = vadd.f32 0.0, %v2058
        %v2060 = vand.u32 %v572, 4294901760
        %v2061 = vsub.f32 %v572, %v2060
        %v2062 = vand.u32 %v2061, 4294901760
        %v2063 = vsub.f32 %v2061, %v2062
        %v2064 = vand.u32 %v2063, 4294901760
        %2065 = vmatmul.f32.gmra.mxu0 %v2064
        %v2066 = vpop.f32.mrf.mxu0
        %v2067 = vadd.f32 0.0, %v2066
        %v2068 = vand.u32 %v575, 4294901760
        %v2069 = vsub.f32 %v575, %v2068
        %v2070 = vand.u32 %v2069, 4294901760
        %v2071 = vsub.f32 %v2069, %v2070
        %v2072 = vand.u32 %v2071, 4294901760
        %2073 = vmatmul.f32.gmra.mxu0 %v2072
        %v2074 = vpop.f32.mrf.mxu0
        %v2075 = vadd.f32 0.0, %v2074
        %v2076 = vand.u32 %v578, 4294901760
        %v2077 = vsub.f32 %v578, %v2076
        %v2078 = vand.u32 %v2077, 4294901760
        %v2079 = vsub.f32 %v2077, %v2078
        %v2080 = vand.u32 %v2079, 4294901760
        %2081 = vmatmul.f32.gmra.mxu0 %v2080
        %v2082 = vpop.f32.mrf.mxu0
        %v2083 = vadd.f32 0.0, %v2082
        %v2084 = vand.u32 %v581, 4294901760
        %v2085 = vsub.f32 %v581, %v2084
        %v2086 = vand.u32 %v2085, 4294901760
        %v2087 = vsub.f32 %v2085, %v2086
        %v2088 = vand.u32 %v2087, 4294901760
        %2089 = vmatmul.f32.gmra.mxu0 %v2088
        %v2090 = vpop.f32.mrf.mxu0
        %v2091 = vadd.f32 0.0, %v2090
        %v2092 = vand.u32 %v584, 4294901760
        %v2093 = vsub.f32 %v584, %v2092
        %v2094 = vand.u32 %v2093, 4294901760
        %v2095 = vsub.f32 %v2093, %v2094
        %v2096 = vand.u32 %v2095, 4294901760
        %2097 = vmatmul.f32.gmra.mxu0 %v2096
        %v2098 = vpop.f32.mrf.mxu0
        %v2099 = vadd.f32 0.0, %v2098
        %v2100 = vand.u32 %v587, 4294901760
        %v2101 = vsub.f32 %v587, %v2100
        %v2102 = vand.u32 %v2101, 4294901760
        %v2103 = vsub.f32 %v2101, %v2102
        %v2104 = vand.u32 %v2103, 4294901760
        %2105 = vmatmul.f32.gmra.mxu0 %v2104
        %v2106 = vpop.f32.mrf.mxu0
        %v2107 = vadd.f32 0.0, %v2106
        %v2108 = vand.u32 %v590, 4294901760
        %v2109 = vsub.f32 %v590, %v2108
        %v2110 = vand.u32 %v2109, 4294901760
        %v2111 = vsub.f32 %v2109, %v2110
        %v2112 = vand.u32 %v2111, 4294901760
        %2113 = vmatmul.f32.gmra.mxu0 %v2112
        %v2114 = vpop.f32.mrf.mxu0
        %v2115 = vadd.f32 0.0, %v2114
        %v2116 = vand.u32 %v593, 4294901760
        %v2117 = vsub.f32 %v593, %v2116
        %v2118 = vand.u32 %v2117, 4294901760
        %v2119 = vsub.f32 %v2117, %v2118
        %v2120 = vand.u32 %v2119, 4294901760
        %2121 = vmatmul.f32.gmra.mxu0 %v2120
        %v2122 = vpop.f32.mrf.mxu0
        %v2123 = vadd.f32 0.0, %v2122
        %v2124 = vand.u32 %v596, 4294901760
        %v2125 = vsub.f32 %v596, %v2124
        %v2126 = vand.u32 %v2125, 4294901760
        %v2127 = vsub.f32 %v2125, %v2126
        %v2128 = vand.u32 %v2127, 4294901760
        %2129 = vmatmul.f32.gmra.mxu0 %v2128
        %v2130 = vpop.f32.mrf.mxu0
        %v2131 = vadd.f32 0.0, %v2130
        %v2132 = vand.u32 %v599, 4294901760
        %v2133 = vsub.f32 %v599, %v2132
        %v2134 = vand.u32 %v2133, 4294901760
        %v2135 = vsub.f32 %v2133, %v2134
        %v2136 = vand.u32 %v2135, 4294901760
        %2137 = vmatmul.f32.gmra.mxu0 %v2136
        %v2138 = vpop.f32.mrf.mxu0
        %v2139 = vadd.f32 0.0, %v2138
        %v2140 = vand.u32 %v602, 4294901760
        %v2141 = vsub.f32 %v602, %v2140
        %v2142 = vand.u32 %v2141, 4294901760
        %v2143 = vsub.f32 %v2141, %v2142
        %v2144 = vand.u32 %v2143, 4294901760
        %2145 = vmatmul.f32.gmra.mxu0 %v2144
        %v2146 = vpop.f32.mrf.mxu0
        %v2147 = vadd.f32 0.0, %v2146
        %v2148 = vand.u32 %v605, 4294901760
        %v2149 = vsub.f32 %v605, %v2148
        %v2150 = vand.u32 %v2149, 4294901760
        %v2151 = vsub.f32 %v2149, %v2150
        %v2152 = vand.u32 %v2151, 4294901760
        %2153 = vmatmul.f32.gmra.mxu0 %v2152
        %v2154 = vpop.f32.mrf.mxu0
        %v2155 = vadd.f32 0.0, %v2154
        %v2156 = vand.u32 %v608, 4294901760
        %v2157 = vsub.f32 %v608, %v2156
        %v2158 = vand.u32 %v2157, 4294901760
        %v2159 = vsub.f32 %v2157, %v2158
        %v2160 = vand.u32 %v2159, 4294901760
        %2161 = vmatmul.f32.gmra.mxu0 %v2160
        %v2162 = vpop.f32.mrf.mxu0
        %v2163 = vadd.f32 0.0, %v2162
        %v2164 = vand.u32 %v611, 4294901760
        %v2165 = vsub.f32 %v611, %v2164
        %v2166 = vand.u32 %v2165, 4294901760
        %v2167 = vsub.f32 %v2165, %v2166
        %v2168 = vand.u32 %v2167, 4294901760
        %2169 = vmatmul.f32.gmra.mxu0 %v2168
        %v2170 = vpop.f32.mrf.mxu0
        %v2171 = vadd.f32 0.0, %v2170
        %v2172 = vand.u32 %v614, 4294901760
        %v2173 = vsub.f32 %v614, %v2172
        %v2174 = vand.u32 %v2173, 4294901760
        %v2175 = vsub.f32 %v2173, %v2174
        %v2176 = vand.u32 %v2175, 4294901760
        %2177 = vmatmul.f32.gmra.mxu0 %v2176
        %v2178 = vpop.f32.mrf.mxu0
        %v2179 = vadd.f32 0.0, %v2178
        %v2180 = vand.u32 %v617, 4294901760
        %v2181 = vsub.f32 %v617, %v2180
        %v2182 = vand.u32 %v2181, 4294901760
        %v2183 = vsub.f32 %v2181, %v2182
        %v2184 = vand.u32 %v2183, 4294901760
        %2185 = vmatmul.f32.gmra.mxu0 %v2184
        %v2186 = vpop.f32.mrf.mxu0
        %v2187 = vadd.f32 0.0, %v2186
        %v2188 = vand.u32 %v620, 4294901760
        %v2189 = vsub.f32 %v620, %v2188
        %v2190 = vand.u32 %v2189, 4294901760
        %v2191 = vsub.f32 %v2189, %v2190
        %v2192 = vand.u32 %v2191, 4294901760
        %2193 = vmatmul.f32.gmra.mxu0 %v2192
        %v2194 = vpop.f32.mrf.mxu0
        %v2195 = vadd.f32 0.0, %v2194
        %v2196 = vand.u32 %v623, 4294901760
        %v2197 = vsub.f32 %v623, %v2196
        %v2198 = vand.u32 %v2197, 4294901760
        %v2199 = vsub.f32 %v2197, %v2198
        %v2200 = vand.u32 %v2199, 4294901760
        %2201 = vmatmul.f32.gmra.mxu0 %v2200
        %v2202 = vpop.f32.mrf.mxu0
        %v2203 = vadd.f32 0.0, %v2202
        %v2204 = vand.u32 %v626, 4294901760
        %v2205 = vsub.f32 %v626, %v2204
        %v2206 = vand.u32 %v2205, 4294901760
        %v2207 = vsub.f32 %v2205, %v2206
        %v2208 = vand.u32 %v2207, 4294901760
        %2209 = vmatmul.f32.gmra.mxu0 %v2208
        %v2210 = vpop.f32.mrf.mxu0
        %v2211 = vadd.f32 0.0, %v2210
        %v2212 = vand.u32 %v629, 4294901760
        %v2213 = vsub.f32 %v629, %v2212
        %v2214 = vand.u32 %v2213, 4294901760
        %v2215 = vsub.f32 %v2213, %v2214
        %v2216 = vand.u32 %v2215, 4294901760
        %2217 = vmatmul.f32.gmra.mxu0 %v2216
        %v2218 = vpop.f32.mrf.mxu0
        %v2219 = vadd.f32 0.0, %v2218
        %v2220 = vand.u32 %v632, 4294901760
        %v2221 = vsub.f32 %v632, %v2220
        %v2222 = vand.u32 %v2221, 4294901760
        %v2223 = vsub.f32 %v2221, %v2222
        %v2224 = vand.u32 %v2223, 4294901760
        %2225 = vmatmul.f32.gmra.mxu0 %v2224
        %v2226 = vpop.f32.mrf.mxu0
        %v2227 = vadd.f32 0.0, %v2226
        %v2228 = vand.u32 %v635, 4294901760
        %v2229 = vsub.f32 %v635, %v2228
        %v2230 = vand.u32 %v2229, 4294901760
        %v2231 = vsub.f32 %v2229, %v2230
        %v2232 = vand.u32 %v2231, 4294901760
        %2233 = vmatmul.f32.gmra.mxu0 %v2232
        %v2234 = vpop.f32.mrf.mxu0
        %v2235 = vadd.f32 0.0, %v2234
        %v2236 = vand.u32 %v638, 4294901760
        %v2237 = vsub.f32 %v638, %v2236
        %v2238 = vand.u32 %v2237, 4294901760
        %v2239 = vsub.f32 %v2237, %v2238
        %v2240 = vand.u32 %v2239, 4294901760
        %2241 = vmatmul.f32.gmra.mxu0 %v2240
        %v2242 = vpop.f32.mrf.mxu0
        %v2243 = vadd.f32 0.0, %v2242
        %v2244 = vand.u32 %v641, 4294901760
        %v2245 = vsub.f32 %v641, %v2244
        %v2246 = vand.u32 %v2245, 4294901760
        %v2247 = vsub.f32 %v2245, %v2246
        %v2248 = vand.u32 %v2247, 4294901760
        %2249 = vmatmul.f32.gmra.mxu0 %v2248
        %v2250 = vpop.f32.mrf.mxu0
        %v2251 = vadd.f32 0.0, %v2250
        %v2252 = vand.u32 %v644, 4294901760
        %v2253 = vsub.f32 %v644, %v2252
        %v2254 = vand.u32 %v2253, 4294901760
        %v2255 = vsub.f32 %v2253, %v2254
        %v2256 = vand.u32 %v2255, 4294901760
        %2257 = vmatmul.f32.gmra.mxu0 %v2256
        %v2258 = vpop.f32.mrf.mxu0
        %v2259 = vadd.f32 0.0, %v2258
        %v2260 = vand.u32 %v647, 4294901760
        %v2261 = vsub.f32 %v647, %v2260
        %v2262 = vand.u32 %v2261, 4294901760
        %v2263 = vsub.f32 %v2261, %v2262
        %v2264 = vand.u32 %v2263, 4294901760
        %2265 = vmatmul.f32.gmra.mxu0 %v2264
        %v2266 = vpop.f32.mrf.mxu0
        %v2267 = vadd.f32 0.0, %v2266
        %v2268 = vand.u32 %v650, 4294901760
        %v2269 = vsub.f32 %v650, %v2268
        %v2270 = vand.u32 %v2269, 4294901760
        %v2271 = vsub.f32 %v2269, %v2270
        %v2272 = vand.u32 %v2271, 4294901760
        %2273 = vmatmul.f32.gmra.mxu0 %v2272
        %v2274 = vpop.f32.mrf.mxu0
        %v2275 = vadd.f32 0.0, %v2274
        %v2276 = vand.u32 %v653, 4294901760
        %v2277 = vsub.f32 %v653, %v2276
        %v2278 = vand.u32 %v2277, 4294901760
        %v2279 = vsub.f32 %v2277, %v2278
        %v2280 = vand.u32 %v2279, 4294901760
        %2281 = vmatmul.f32.gmra.mxu0 %v2280
        %v2282 = vpop.f32.mrf.mxu0
        %v2283 = vadd.f32 0.0, %v2282
        %v2284 = vand.u32 %v656, 4294901760
        %v2285 = vsub.f32 %v656, %v2284
        %v2286 = vand.u32 %v2285, 4294901760
        %v2287 = vsub.f32 %v2285, %v2286
        %v2288 = vand.u32 %v2287, 4294901760
        %2289 = vmatmul.f32.gmra.mxu0 %v2288
        %v2290 = vpop.f32.mrf.mxu0
        %v2291 = vadd.f32 0.0, %v2290
        %2292 = vdwg.mxu0
        %2293 = vmatpush.msra.mxu0 0.0
        %2294 = vmatpush.msra.mxu0 0.0
        %2295 = vmatpush.msra.mxu0 0.0
        %2296 = vmatpush.msra.mxu0 0.0
        %2297 = vmatpush.msra.mxu0 0.0
        %2298 = vmatpush.msra.mxu0 0.0
        %2299 = vmatpush.msra.mxu0 0.0
        %2300 = vmatpush.msra.mxu0 0.0
        %v2301 = vand.u32 %v512, 4294901760
        %v2302 = vsub.f32 %v512, %v2301
        %v2303 = vand.u32 %v2302, 4294901760
        %v2304 = vsub.f32 %v2302, %v2303
        %v2305 = vand.u32 %v2304, 4294901760
        %2306 = vmatpush.msra.mxu0 %v2305
        %v2307 = vand.u32 %v510, 4294901760
        %v2308 = vsub.f32 %v510, %v2307
        %v2309 = vand.u32 %v2308, 4294901760
        %v2310 = vsub.f32 %v2308, %v2309
        %v2311 = vand.u32 %v2310, 4294901760
        %2312 = vmatpush.msra.mxu0 %v2311
        %v2313 = vand.u32 %v508, 4294901760
        %v2314 = vsub.f32 %v508, %v2313
        %v2315 = vand.u32 %v2314, 4294901760
        %v2316 = vsub.f32 %v2314, %v2315
        %v2317 = vand.u32 %v2316, 4294901760
        %2318 = vmatpush.msra.mxu0 %v2317
        %v2319 = vand.u32 %v506, 4294901760
        %v2320 = vsub.f32 %v506, %v2319
        %v2321 = vand.u32 %v2320, 4294901760
        %v2322 = vsub.f32 %v2320, %v2321
        %v2323 = vand.u32 %v2322, 4294901760
        %2324 = vmatpush.msra.mxu0 %v2323
        %v2325 = vand.u32 %v504, 4294901760
        %v2326 = vsub.f32 %v504, %v2325
        %v2327 = vand.u32 %v2326, 4294901760
        %v2328 = vsub.f32 %v2326, %v2327
        %v2329 = vand.u32 %v2328, 4294901760
        %2330 = vmatpush.msra.mxu0 %v2329
        %v2331 = vand.u32 %v502, 4294901760
        %v2332 = vsub.f32 %v502, %v2331
        %v2333 = vand.u32 %v2332, 4294901760
        %v2334 = vsub.f32 %v2332, %v2333
        %v2335 = vand.u32 %v2334, 4294901760
        %2336 = vmatpush.msra.mxu0 %v2335
        %v2337 = vand.u32 %v500, 4294901760
        %v2338 = vsub.f32 %v500, %v2337
        %v2339 = vand.u32 %v2338, 4294901760
        %v2340 = vsub.f32 %v2338, %v2339
        %v2341 = vand.u32 %v2340, 4294901760
        %2342 = vmatpush.msra.mxu0 %v2341
        %v2343 = vand.u32 %v498, 4294901760
        %v2344 = vsub.f32 %v498, %v2343
        %v2345 = vand.u32 %v2344, 4294901760
        %v2346 = vsub.f32 %v2344, %v2345
        %v2347 = vand.u32 %v2346, 4294901760
        %2348 = vmatpush.msra.mxu0 %v2347
        %v2349 = vand.u32 %v551, 4294901760
        %2350 = vmatmul.f32.gmra.mxu0 %v2349
        %v2351 = vpop.f32.mrf.mxu0
        %v2352 = vadd.f32 %v2011, %v2351
        %v2353 = vand.u32 %v554, 4294901760
        %2354 = vmatmul.f32.gmra.mxu0 %v2353
        %v2355 = vpop.f32.mrf.mxu0
        %v2356 = vadd.f32 %v2019, %v2355
        %v2357 = vand.u32 %v557, 4294901760
        %2358 = vmatmul.f32.gmra.mxu0 %v2357
        %v2359 = vpop.f32.mrf.mxu0
        %v2360 = vadd.f32 %v2027, %v2359
        %v2361 = vand.u32 %v560, 4294901760
        %2362 = vmatmul.f32.gmra.mxu0 %v2361
        %v2363 = vpop.f32.mrf.mxu0
        %v2364 = vadd.f32 %v2035, %v2363
        %v2365 = vand.u32 %v563, 4294901760
        %2366 = vmatmul.f32.gmra.mxu0 %v2365
        %v2367 = vpop.f32.mrf.mxu0
        %v2368 = vadd.f32 %v2043, %v2367
        %v2369 = vand.u32 %v566, 4294901760
        %2370 = vmatmul.f32.gmra.mxu0 %v2369
        %v2371 = vpop.f32.mrf.mxu0
        %v2372 = vadd.f32 %v2051, %v2371
        %v2373 = vand.u32 %v569, 4294901760
        %2374 = vmatmul.f32.gmra.mxu0 %v2373
        %v2375 = vpop.f32.mrf.mxu0
        %v2376 = vadd.f32 %v2059, %v2375
        %v2377 = vand.u32 %v572, 4294901760
        %2378 = vmatmul.f32.gmra.mxu0 %v2377
        %v2379 = vpop.f32.mrf.mxu0
        %v2380 = vadd.f32 %v2067, %v2379
        %v2381 = vand.u32 %v575, 4294901760
        %2382 = vmatmul.f32.gmra.mxu0 %v2381
        %v2383 = vpop.f32.mrf.mxu0
        %v2384 = vadd.f32 %v2075, %v2383
        %v2385 = vand.u32 %v578, 4294901760
        %2386 = vmatmul.f32.gmra.mxu0 %v2385
        %v2387 = vpop.f32.mrf.mxu0
        %v2388 = vadd.f32 %v2083, %v2387
        %v2389 = vand.u32 %v581, 4294901760
        %2390 = vmatmul.f32.gmra.mxu0 %v2389
        %v2391 = vpop.f32.mrf.mxu0
        %v2392 = vadd.f32 %v2091, %v2391
        %v2393 = vand.u32 %v584, 4294901760
        %2394 = vmatmul.f32.gmra.mxu0 %v2393
        %v2395 = vpop.f32.mrf.mxu0
        %v2396 = vadd.f32 %v2099, %v2395
        %v2397 = vand.u32 %v587, 4294901760
        %2398 = vmatmul.f32.gmra.mxu0 %v2397
        %v2399 = vpop.f32.mrf.mxu0
        %v2400 = vadd.f32 %v2107, %v2399
        %v2401 = vand.u32 %v590, 4294901760
        %2402 = vmatmul.f32.gmra.mxu0 %v2401
        %v2403 = vpop.f32.mrf.mxu0
        %v2404 = vadd.f32 %v2115, %v2403
        %v2405 = vand.u32 %v593, 4294901760
        %2406 = vmatmul.f32.gmra.mxu0 %v2405
        %v2407 = vpop.f32.mrf.mxu0
        %v2408 = vadd.f32 %v2123, %v2407
        %v2409 = vand.u32 %v596, 4294901760
        %2410 = vmatmul.f32.gmra.mxu0 %v2409
        %v2411 = vpop.f32.mrf.mxu0
        %v2412 = vadd.f32 %v2131, %v2411
        %v2413 = vand.u32 %v599, 4294901760
        %2414 = vmatmul.f32.gmra.mxu0 %v2413
        %v2415 = vpop.f32.mrf.mxu0
        %v2416 = vadd.f32 %v2139, %v2415
        %v2417 = vand.u32 %v602, 4294901760
        %2418 = vmatmul.f32.gmra.mxu0 %v2417
        %v2419 = vpop.f32.mrf.mxu0
        %v2420 = vadd.f32 %v2147, %v2419
        %v2421 = vand.u32 %v605, 4294901760
        %2422 = vmatmul.f32.gmra.mxu0 %v2421
        %v2423 = vpop.f32.mrf.mxu0
        %v2424 = vadd.f32 %v2155, %v2423
        %v2425 = vand.u32 %v608, 4294901760
        %2426 = vmatmul.f32.gmra.mxu0 %v2425
        %v2427 = vpop.f32.mrf.mxu0
        %v2428 = vadd.f32 %v2163, %v2427
        %v2429 = vand.u32 %v611, 4294901760
        %2430 = vmatmul.f32.gmra.mxu0 %v2429
        %v2431 = vpop.f32.mrf.mxu0
        %v2432 = vadd.f32 %v2171, %v2431
        %v2433 = vand.u32 %v614, 4294901760
        %2434 = vmatmul.f32.gmra.mxu0 %v2433
        %v2435 = vpop.f32.mrf.mxu0
        %v2436 = vadd.f32 %v2179, %v2435
        %v2437 = vand.u32 %v617, 4294901760
        %2438 = vmatmul.f32.gmra.mxu0 %v2437
        %v2439 = vpop.f32.mrf.mxu0
        %v2440 = vadd.f32 %v2187, %v2439
        %v2441 = vand.u32 %v620, 4294901760
        %2442 = vmatmul.f32.gmra.mxu0 %v2441
        %v2443 = vpop.f32.mrf.mxu0
        %v2444 = vadd.f32 %v2195, %v2443
        %v2445 = vand.u32 %v623, 4294901760
        %2446 = vmatmul.f32.gmra.mxu0 %v2445
        %v2447 = vpop.f32.mrf.mxu0
        %v2448 = vadd.f32 %v2203, %v2447
        %v2449 = vand.u32 %v626, 4294901760
        %2450 = vmatmul.f32.gmra.mxu0 %v2449
        %v2451 = vpop.f32.mrf.mxu0
        %v2452 = vadd.f32 %v2211, %v2451
        %v2453 = vand.u32 %v629, 4294901760
        %2454 = vmatmul.f32.gmra.mxu0 %v2453
        %v2455 = vpop.f32.mrf.mxu0
        %v2456 = vadd.f32 %v2219, %v2455
        %v2457 = vand.u32 %v632, 4294901760
        %2458 = vmatmul.f32.gmra.mxu0 %v2457
        %v2459 = vpop.f32.mrf.mxu0
        %v2460 = vadd.f32 %v2227, %v2459
        %v2461 = vand.u32 %v635, 4294901760
        %2462 = vmatmul.f32.gmra.mxu0 %v2461
        %v2463 = vpop.f32.mrf.mxu0
        %v2464 = vadd.f32 %v2235, %v2463
        %v2465 = vand.u32 %v638, 4294901760
        %2466 = vmatmul.f32.gmra.mxu0 %v2465
        %v2467 = vpop.f32.mrf.mxu0
        %v2468 = vadd.f32 %v2243, %v2467
        %v2469 = vand.u32 %v641, 4294901760
        %2470 = vmatmul.f32.gmra.mxu0 %v2469
        %v2471 = vpop.f32.mrf.mxu0
        %v2472 = vadd.f32 %v2251, %v2471
        %v2473 = vand.u32 %v644, 4294901760
        %2474 = vmatmul.f32.gmra.mxu0 %v2473
        %v2475 = vpop.f32.mrf.mxu0
        %v2476 = vadd.f32 %v2259, %v2475
        %v2477 = vand.u32 %v647, 4294901760
        %2478 = vmatmul.f32.gmra.mxu0 %v2477
        %v2479 = vpop.f32.mrf.mxu0
        %v2480 = vadd.f32 %v2267, %v2479
        %v2481 = vand.u32 %v650, 4294901760
        %2482 = vmatmul.f32.gmra.mxu0 %v2481
        %v2483 = vpop.f32.mrf.mxu0
        %v2484 = vadd.f32 %v2275, %v2483
        %v2485 = vand.u32 %v653, 4294901760
        %2486 = vmatmul.f32.gmra.mxu0 %v2485
        %v2487 = vpop.f32.mrf.mxu0
        %v2488 = vadd.f32 %v2283, %v2487
        %v2489 = vand.u32 %v656, 4294901760
        %2490 = vmatmul.f32.gmra.mxu0 %v2489
        %v2491 = vpop.f32.mrf.mxu0
        %v2492 = vadd.f32 %v2291, %v2491
        %2493 = vdwg.mxu0
        %2494 = vmatpush.msra.mxu0 0.0
        %2495 = vmatpush.msra.mxu0 0.0
        %2496 = vmatpush.msra.mxu0 0.0
        %2497 = vmatpush.msra.mxu0 0.0
        %2498 = vmatpush.msra.mxu0 0.0
        %2499 = vmatpush.msra.mxu0 0.0
        %2500 = vmatpush.msra.mxu0 0.0
        %2501 = vmatpush.msra.mxu0 0.0
        %v2502 = vand.u32 %v512, 4294901760
        %v2503 = vsub.f32 %v512, %v2502
        %2504 = vmatpush.msra.mxu0 %v2503
        %v2505 = vand.u32 %v510, 4294901760
        %v2506 = vsub.f32 %v510, %v2505
        %2507 = vmatpush.msra.mxu0 %v2506
        %v2508 = vand.u32 %v508, 4294901760
        %v2509 = vsub.f32 %v508, %v2508
        %2510 = vmatpush.msra.mxu0 %v2509
        %v2511 = vand.u32 %v506, 4294901760
        %v2512 = vsub.f32 %v506, %v2511
        %2513 = vmatpush.msra.mxu0 %v2512
        %v2514 = vand.u32 %v504, 4294901760
        %v2515 = vsub.f32 %v504, %v2514
        %2516 = vmatpush.msra.mxu0 %v2515
        %v2517 = vand.u32 %v502, 4294901760
        %v2518 = vsub.f32 %v502, %v2517
        %2519 = vmatpush.msra.mxu0 %v2518
        %v2520 = vand.u32 %v500, 4294901760
        %v2521 = vsub.f32 %v500, %v2520
        %2522 = vmatpush.msra.mxu0 %v2521
        %v2523 = vand.u32 %v498, 4294901760
        %v2524 = vsub.f32 %v498, %v2523
        %2525 = vmatpush.msra.mxu0 %v2524
        %v2526 = vand.u32 %v551, 4294901760
        %v2527 = vsub.f32 %v551, %v2526
        %2528 = vmatmul.f32.gmra.mxu0 %v2527
        %v2529 = vpop.f32.mrf.mxu0
        %v2530 = vadd.f32 %v2352, %v2529
        %v2531 = vand.u32 %v554, 4294901760
        %v2532 = vsub.f32 %v554, %v2531
        %2533 = vmatmul.f32.gmra.mxu0 %v2532
        %v2534 = vpop.f32.mrf.mxu0
        %v2535 = vadd.f32 %v2356, %v2534
        %v2536 = vand.u32 %v557, 4294901760
        %v2537 = vsub.f32 %v557, %v2536
        %2538 = vmatmul.f32.gmra.mxu0 %v2537
        %v2539 = vpop.f32.mrf.mxu0
        %v2540 = vadd.f32 %v2360, %v2539
        %v2541 = vand.u32 %v560, 4294901760
        %v2542 = vsub.f32 %v560, %v2541
        %2543 = vmatmul.f32.gmra.mxu0 %v2542
        %v2544 = vpop.f32.mrf.mxu0
        %v2545 = vadd.f32 %v2364, %v2544
        %v2546 = vand.u32 %v563, 4294901760
        %v2547 = vsub.f32 %v563, %v2546
        %2548 = vmatmul.f32.gmra.mxu0 %v2547
        %v2549 = vpop.f32.mrf.mxu0
        %v2550 = vadd.f32 %v2368, %v2549
        %v2551 = vand.u32 %v566, 4294901760
        %v2552 = vsub.f32 %v566, %v2551
        %2553 = vmatmul.f32.gmra.mxu0 %v2552
        %v2554 = vpop.f32.mrf.mxu0
        %v2555 = vadd.f32 %v2372, %v2554
        %v2556 = vand.u32 %v569, 4294901760
        %v2557 = vsub.f32 %v569, %v2556
        %2558 = vmatmul.f32.gmra.mxu0 %v2557
        %v2559 = vpop.f32.mrf.mxu0
        %v2560 = vadd.f32 %v2376, %v2559
        %v2561 = vand.u32 %v572, 4294901760
        %v2562 = vsub.f32 %v572, %v2561
        %2563 = vmatmul.f32.gmra.mxu0 %v2562
        %v2564 = vpop.f32.mrf.mxu0
        %v2565 = vadd.f32 %v2380, %v2564
        %v2566 = vand.u32 %v575, 4294901760
        %v2567 = vsub.f32 %v575, %v2566
        %2568 = vmatmul.f32.gmra.mxu0 %v2567
        %v2569 = vpop.f32.mrf.mxu0
        %v2570 = vadd.f32 %v2384, %v2569
        %v2571 = vand.u32 %v578, 4294901760
        %v2572 = vsub.f32 %v578, %v2571
        %2573 = vmatmul.f32.gmra.mxu0 %v2572
        %v2574 = vpop.f32.mrf.mxu0
        %v2575 = vadd.f32 %v2388, %v2574
        %v2576 = vand.u32 %v581, 4294901760
        %v2577 = vsub.f32 %v581, %v2576
        %2578 = vmatmul.f32.gmra.mxu0 %v2577
        %v2579 = vpop.f32.mrf.mxu0
        %v2580 = vadd.f32 %v2392, %v2579
        %v2581 = vand.u32 %v584, 4294901760
        %v2582 = vsub.f32 %v584, %v2581
        %2583 = vmatmul.f32.gmra.mxu0 %v2582
        %v2584 = vpop.f32.mrf.mxu0
        %v2585 = vadd.f32 %v2396, %v2584
        %v2586 = vand.u32 %v587, 4294901760
        %v2587 = vsub.f32 %v587, %v2586
        %2588 = vmatmul.f32.gmra.mxu0 %v2587
        %v2589 = vpop.f32.mrf.mxu0
        %v2590 = vadd.f32 %v2400, %v2589
        %v2591 = vand.u32 %v590, 4294901760
        %v2592 = vsub.f32 %v590, %v2591
        %2593 = vmatmul.f32.gmra.mxu0 %v2592
        %v2594 = vpop.f32.mrf.mxu0
        %v2595 = vadd.f32 %v2404, %v2594
        %v2596 = vand.u32 %v593, 4294901760
        %v2597 = vsub.f32 %v593, %v2596
        %2598 = vmatmul.f32.gmra.mxu0 %v2597
        %v2599 = vpop.f32.mrf.mxu0
        %v2600 = vadd.f32 %v2408, %v2599
        %v2601 = vand.u32 %v596, 4294901760
        %v2602 = vsub.f32 %v596, %v2601
        %2603 = vmatmul.f32.gmra.mxu0 %v2602
        %v2604 = vpop.f32.mrf.mxu0
        %v2605 = vadd.f32 %v2412, %v2604
        %v2606 = vand.u32 %v599, 4294901760
        %v2607 = vsub.f32 %v599, %v2606
        %2608 = vmatmul.f32.gmra.mxu0 %v2607
        %v2609 = vpop.f32.mrf.mxu0
        %v2610 = vadd.f32 %v2416, %v2609
        %v2611 = vand.u32 %v602, 4294901760
        %v2612 = vsub.f32 %v602, %v2611
        %2613 = vmatmul.f32.gmra.mxu0 %v2612
        %v2614 = vpop.f32.mrf.mxu0
        %v2615 = vadd.f32 %v2420, %v2614
        %v2616 = vand.u32 %v605, 4294901760
        %v2617 = vsub.f32 %v605, %v2616
        %2618 = vmatmul.f32.gmra.mxu0 %v2617
        %v2619 = vpop.f32.mrf.mxu0
        %v2620 = vadd.f32 %v2424, %v2619
        %v2621 = vand.u32 %v608, 4294901760
        %v2622 = vsub.f32 %v608, %v2621
        %2623 = vmatmul.f32.gmra.mxu0 %v2622
        %v2624 = vpop.f32.mrf.mxu0
        %v2625 = vadd.f32 %v2428, %v2624
        %v2626 = vand.u32 %v611, 4294901760
        %v2627 = vsub.f32 %v611, %v2626
        %2628 = vmatmul.f32.gmra.mxu0 %v2627
        %v2629 = vpop.f32.mrf.mxu0
        %v2630 = vadd.f32 %v2432, %v2629
        %v2631 = vand.u32 %v614, 4294901760
        %v2632 = vsub.f32 %v614, %v2631
        %2633 = vmatmul.f32.gmra.mxu0 %v2632
        %v2634 = vpop.f32.mrf.mxu0
        %v2635 = vadd.f32 %v2436, %v2634
        %v2636 = vand.u32 %v617, 4294901760
        %v2637 = vsub.f32 %v617, %v2636
        %2638 = vmatmul.f32.gmra.mxu0 %v2637
        %v2639 = vpop.f32.mrf.mxu0
        %v2640 = vadd.f32 %v2440, %v2639
        %v2641 = vand.u32 %v620, 4294901760
        %v2642 = vsub.f32 %v620, %v2641
        %2643 = vmatmul.f32.gmra.mxu0 %v2642
        %v2644 = vpop.f32.mrf.mxu0
        %v2645 = vadd.f32 %v2444, %v2644
        %v2646 = vand.u32 %v623, 4294901760
        %v2647 = vsub.f32 %v623, %v2646
        %2648 = vmatmul.f32.gmra.mxu0 %v2647
        %v2649 = vpop.f32.mrf.mxu0
        %v2650 = vadd.f32 %v2448, %v2649
        %v2651 = vand.u32 %v626, 4294901760
        %v2652 = vsub.f32 %v626, %v2651
        %2653 = vmatmul.f32.gmra.mxu0 %v2652
        %v2654 = vpop.f32.mrf.mxu0
        %v2655 = vadd.f32 %v2452, %v2654
        %v2656 = vand.u32 %v629, 4294901760
        %v2657 = vsub.f32 %v629, %v2656
        %2658 = vmatmul.f32.gmra.mxu0 %v2657
        %v2659 = vpop.f32.mrf.mxu0
        %v2660 = vadd.f32 %v2456, %v2659
        %v2661 = vand.u32 %v632, 4294901760
        %v2662 = vsub.f32 %v632, %v2661
        %2663 = vmatmul.f32.gmra.mxu0 %v2662
        %v2664 = vpop.f32.mrf.mxu0
        %v2665 = vadd.f32 %v2460, %v2664
        %v2666 = vand.u32 %v635, 4294901760
        %v2667 = vsub.f32 %v635, %v2666
        %2668 = vmatmul.f32.gmra.mxu0 %v2667
        %v2669 = vpop.f32.mrf.mxu0
        %v2670 = vadd.f32 %v2464, %v2669
        %v2671 = vand.u32 %v638, 4294901760
        %v2672 = vsub.f32 %v638, %v2671
        %2673 = vmatmul.f32.gmra.mxu0 %v2672
        %v2674 = vpop.f32.mrf.mxu0
        %v2675 = vadd.f32 %v2468, %v2674
        %v2676 = vand.u32 %v641, 4294901760
        %v2677 = vsub.f32 %v641, %v2676
        %2678 = vmatmul.f32.gmra.mxu0 %v2677
        %v2679 = vpop.f32.mrf.mxu0
        %v2680 = vadd.f32 %v2472, %v2679
        %v2681 = vand.u32 %v644, 4294901760
        %v2682 = vsub.f32 %v644, %v2681
        %2683 = vmatmul.f32.gmra.mxu0 %v2682
        %v2684 = vpop.f32.mrf.mxu0
        %v2685 = vadd.f32 %v2476, %v2684
        %v2686 = vand.u32 %v647, 4294901760
        %v2687 = vsub.f32 %v647, %v2686
        %2688 = vmatmul.f32.gmra.mxu0 %v2687
        %v2689 = vpop.f32.mrf.mxu0
        %v2690 = vadd.f32 %v2480, %v2689
        %v2691 = vand.u32 %v650, 4294901760
        %v2692 = vsub.f32 %v650, %v2691
        %2693 = vmatmul.f32.gmra.mxu0 %v2692
        %v2694 = vpop.f32.mrf.mxu0
        %v2695 = vadd.f32 %v2484, %v2694
        %v2696 = vand.u32 %v653, 4294901760
        %v2697 = vsub.f32 %v653, %v2696
        %2698 = vmatmul.f32.gmra.mxu0 %v2697
        %v2699 = vpop.f32.mrf.mxu0
        %v2700 = vadd.f32 %v2488, %v2699
        %v2701 = vand.u32 %v656, 4294901760
        %v2702 = vsub.f32 %v656, %v2701
        %2703 = vmatmul.f32.gmra.mxu0 %v2702
        %v2704 = vpop.f32.mrf.mxu0
        %v2705 = vadd.f32 %v2492, %v2704
        %2706 = vdwg.mxu0
        %2707 = vmatpush.msra.mxu0 0.0
        %2708 = vmatpush.msra.mxu0 0.0
        %2709 = vmatpush.msra.mxu0 0.0
        %2710 = vmatpush.msra.mxu0 0.0
        %2711 = vmatpush.msra.mxu0 0.0
        %2712 = vmatpush.msra.mxu0 0.0
        %2713 = vmatpush.msra.mxu0 0.0
        %2714 = vmatpush.msra.mxu0 0.0
        %v2715 = vand.u32 %v512, 4294901760
        %2716 = vmatpush.msra.mxu0 %v2715
        %v2717 = vand.u32 %v510, 4294901760
        %2718 = vmatpush.msra.mxu0 %v2717
        %v2719 = vand.u32 %v508, 4294901760
        %2720 = vmatpush.msra.mxu0 %v2719
        %v2721 = vand.u32 %v506, 4294901760
        %2722 = vmatpush.msra.mxu0 %v2721
        %v2723 = vand.u32 %v504, 4294901760
        %2724 = vmatpush.msra.mxu0 %v2723
        %v2725 = vand.u32 %v502, 4294901760
        %2726 = vmatpush.msra.mxu0 %v2725
        %v2727 = vand.u32 %v500, 4294901760
        %2728 = vmatpush.msra.mxu0 %v2727
        %v2729 = vand.u32 %v498, 4294901760
        %2730 = vmatpush.msra.mxu0 %v2729
        %v2731 = vand.u32 %v551, 4294901760
        %v2732 = vsub.f32 %v551, %v2731
        %v2733 = vand.u32 %v2732, 4294901760
        %2734 = vmatmul.f32.gmra.mxu0 %v2733
        %v2735 = vpop.f32.mrf.mxu0
        %v2736 = vadd.f32 %v2530, %v2735
        %v2737 = vand.u32 %v554, 4294901760
        %v2738 = vsub.f32 %v554, %v2737
        %v2739 = vand.u32 %v2738, 4294901760
        %2740 = vmatmul.f32.gmra.mxu0 %v2739
        %v2741 = vpop.f32.mrf.mxu0
        %v2742 = vadd.f32 %v2535, %v2741
        %v2743 = vand.u32 %v557, 4294901760
        %v2744 = vsub.f32 %v557, %v2743
        %v2745 = vand.u32 %v2744, 4294901760
        %2746 = vmatmul.f32.gmra.mxu0 %v2745
        %v2747 = vpop.f32.mrf.mxu0
        %v2748 = vadd.f32 %v2540, %v2747
        %v2749 = vand.u32 %v560, 4294901760
        %v2750 = vsub.f32 %v560, %v2749
        %v2751 = vand.u32 %v2750, 4294901760
        %2752 = vmatmul.f32.gmra.mxu0 %v2751
        %v2753 = vpop.f32.mrf.mxu0
        %v2754 = vadd.f32 %v2545, %v2753
        %v2755 = vand.u32 %v563, 4294901760
        %v2756 = vsub.f32 %v563, %v2755
        %v2757 = vand.u32 %v2756, 4294901760
        %2758 = vmatmul.f32.gmra.mxu0 %v2757
        %v2759 = vpop.f32.mrf.mxu0
        %v2760 = vadd.f32 %v2550, %v2759
        %v2761 = vand.u32 %v566, 4294901760
        %v2762 = vsub.f32 %v566, %v2761
        %v2763 = vand.u32 %v2762, 4294901760
        %2764 = vmatmul.f32.gmra.mxu0 %v2763
        %v2765 = vpop.f32.mrf.mxu0
        %v2766 = vadd.f32 %v2555, %v2765
        %v2767 = vand.u32 %v569, 4294901760
        %v2768 = vsub.f32 %v569, %v2767
        %v2769 = vand.u32 %v2768, 4294901760
        %2770 = vmatmul.f32.gmra.mxu0 %v2769
        %v2771 = vpop.f32.mrf.mxu0
        %v2772 = vadd.f32 %v2560, %v2771
        %v2773 = vand.u32 %v572, 4294901760
        %v2774 = vsub.f32 %v572, %v2773
        %v2775 = vand.u32 %v2774, 4294901760
        %2776 = vmatmul.f32.gmra.mxu0 %v2775
        %v2777 = vpop.f32.mrf.mxu0
        %v2778 = vadd.f32 %v2565, %v2777
        %v2779 = vand.u32 %v575, 4294901760
        %v2780 = vsub.f32 %v575, %v2779
        %v2781 = vand.u32 %v2780, 4294901760
        %2782 = vmatmul.f32.gmra.mxu0 %v2781
        %v2783 = vpop.f32.mrf.mxu0
        %v2784 = vadd.f32 %v2570, %v2783
        %v2785 = vand.u32 %v578, 4294901760
        %v2786 = vsub.f32 %v578, %v2785
        %v2787 = vand.u32 %v2786, 4294901760
        %2788 = vmatmul.f32.gmra.mxu0 %v2787
        %v2789 = vpop.f32.mrf.mxu0
        %v2790 = vadd.f32 %v2575, %v2789
        %v2791 = vand.u32 %v581, 4294901760
        %v2792 = vsub.f32 %v581, %v2791
        %v2793 = vand.u32 %v2792, 4294901760
        %2794 = vmatmul.f32.gmra.mxu0 %v2793
        %v2795 = vpop.f32.mrf.mxu0
        %v2796 = vadd.f32 %v2580, %v2795
        %v2797 = vand.u32 %v584, 4294901760
        %v2798 = vsub.f32 %v584, %v2797
        %v2799 = vand.u32 %v2798, 4294901760
        %2800 = vmatmul.f32.gmra.mxu0 %v2799
        %v2801 = vpop.f32.mrf.mxu0
        %v2802 = vadd.f32 %v2585, %v2801
        %v2803 = vand.u32 %v587, 4294901760
        %v2804 = vsub.f32 %v587, %v2803
        %v2805 = vand.u32 %v2804, 4294901760
        %2806 = vmatmul.f32.gmra.mxu0 %v2805
        %v2807 = vpop.f32.mrf.mxu0
        %v2808 = vadd.f32 %v2590, %v2807
        %v2809 = vand.u32 %v590, 4294901760
        %v2810 = vsub.f32 %v590, %v2809
        %v2811 = vand.u32 %v2810, 4294901760
        %2812 = vmatmul.f32.gmra.mxu0 %v2811
        %v2813 = vpop.f32.mrf.mxu0
        %v2814 = vadd.f32 %v2595, %v2813
        %v2815 = vand.u32 %v593, 4294901760
        %v2816 = vsub.f32 %v593, %v2815
        %v2817 = vand.u32 %v2816, 4294901760
        %2818 = vmatmul.f32.gmra.mxu0 %v2817
        %v2819 = vpop.f32.mrf.mxu0
        %v2820 = vadd.f32 %v2600, %v2819
        %v2821 = vand.u32 %v596, 4294901760
        %v2822 = vsub.f32 %v596, %v2821
        %v2823 = vand.u32 %v2822, 4294901760
        %2824 = vmatmul.f32.gmra.mxu0 %v2823
        %v2825 = vpop.f32.mrf.mxu0
        %v2826 = vadd.f32 %v2605, %v2825
        %v2827 = vand.u32 %v599, 4294901760
        %v2828 = vsub.f32 %v599, %v2827
        %v2829 = vand.u32 %v2828, 4294901760
        %2830 = vmatmul.f32.gmra.mxu0 %v2829
        %v2831 = vpop.f32.mrf.mxu0
        %v2832 = vadd.f32 %v2610, %v2831
        %v2833 = vand.u32 %v602, 4294901760
        %v2834 = vsub.f32 %v602, %v2833
        %v2835 = vand.u32 %v2834, 4294901760
        %2836 = vmatmul.f32.gmra.mxu0 %v2835
        %v2837 = vpop.f32.mrf.mxu0
        %v2838 = vadd.f32 %v2615, %v2837
        %v2839 = vand.u32 %v605, 4294901760
        %v2840 = vsub.f32 %v605, %v2839
        %v2841 = vand.u32 %v2840, 4294901760
        %2842 = vmatmul.f32.gmra.mxu0 %v2841
        %v2843 = vpop.f32.mrf.mxu0
        %v2844 = vadd.f32 %v2620, %v2843
        %v2845 = vand.u32 %v608, 4294901760
        %v2846 = vsub.f32 %v608, %v2845
        %v2847 = vand.u32 %v2846, 4294901760
        %2848 = vmatmul.f32.gmra.mxu0 %v2847
        %v2849 = vpop.f32.mrf.mxu0
        %v2850 = vadd.f32 %v2625, %v2849
        %v2851 = vand.u32 %v611, 4294901760
        %v2852 = vsub.f32 %v611, %v2851
        %v2853 = vand.u32 %v2852, 4294901760
        %2854 = vmatmul.f32.gmra.mxu0 %v2853
        %v2855 = vpop.f32.mrf.mxu0
        %v2856 = vadd.f32 %v2630, %v2855
        %v2857 = vand.u32 %v614, 4294901760
        %v2858 = vsub.f32 %v614, %v2857
        %v2859 = vand.u32 %v2858, 4294901760
        %2860 = vmatmul.f32.gmra.mxu0 %v2859
        %v2861 = vpop.f32.mrf.mxu0
        %v2862 = vadd.f32 %v2635, %v2861
        %v2863 = vand.u32 %v617, 4294901760
        %v2864 = vsub.f32 %v617, %v2863
        %v2865 = vand.u32 %v2864, 4294901760
        %2866 = vmatmul.f32.gmra.mxu0 %v2865
        %v2867 = vpop.f32.mrf.mxu0
        %v2868 = vadd.f32 %v2640, %v2867
        %v2869 = vand.u32 %v620, 4294901760
        %v2870 = vsub.f32 %v620, %v2869
        %v2871 = vand.u32 %v2870, 4294901760
        %2872 = vmatmul.f32.gmra.mxu0 %v2871
        %v2873 = vpop.f32.mrf.mxu0
        %v2874 = vadd.f32 %v2645, %v2873
        %v2875 = vand.u32 %v623, 4294901760
        %v2876 = vsub.f32 %v623, %v2875
        %v2877 = vand.u32 %v2876, 4294901760
        %2878 = vmatmul.f32.gmra.mxu0 %v2877
        %v2879 = vpop.f32.mrf.mxu0
        %v2880 = vadd.f32 %v2650, %v2879
        %v2881 = vand.u32 %v626, 4294901760
        %v2882 = vsub.f32 %v626, %v2881
        %v2883 = vand.u32 %v2882, 4294901760
        %2884 = vmatmul.f32.gmra.mxu0 %v2883
        %v2885 = vpop.f32.mrf.mxu0
        %v2886 = vadd.f32 %v2655, %v2885
        %v2887 = vand.u32 %v629, 4294901760
        %v2888 = vsub.f32 %v629, %v2887
        %v2889 = vand.u32 %v2888, 4294901760
        %2890 = vmatmul.f32.gmra.mxu0 %v2889
        %v2891 = vpop.f32.mrf.mxu0
        %v2892 = vadd.f32 %v2660, %v2891
        %v2893 = vand.u32 %v632, 4294901760
        %v2894 = vsub.f32 %v632, %v2893
        %v2895 = vand.u32 %v2894, 4294901760
        %2896 = vmatmul.f32.gmra.mxu0 %v2895
        %v2897 = vpop.f32.mrf.mxu0
        %v2898 = vadd.f32 %v2665, %v2897
        %v2899 = vand.u32 %v635, 4294901760
        %v2900 = vsub.f32 %v635, %v2899
        %v2901 = vand.u32 %v2900, 4294901760
        %2902 = vmatmul.f32.gmra.mxu0 %v2901
        %v2903 = vpop.f32.mrf.mxu0
        %v2904 = vadd.f32 %v2670, %v2903
        %v2905 = vand.u32 %v638, 4294901760
        %v2906 = vsub.f32 %v638, %v2905
        %v2907 = vand.u32 %v2906, 4294901760
        %2908 = vmatmul.f32.gmra.mxu0 %v2907
        %v2909 = vpop.f32.mrf.mxu0
        %v2910 = vadd.f32 %v2675, %v2909
        %v2911 = vand.u32 %v641, 4294901760
        %v2912 = vsub.f32 %v641, %v2911
        %v2913 = vand.u32 %v2912, 4294901760
        %2914 = vmatmul.f32.gmra.mxu0 %v2913
        %v2915 = vpop.f32.mrf.mxu0
        %v2916 = vadd.f32 %v2680, %v2915
        %v2917 = vand.u32 %v644, 4294901760
        %v2918 = vsub.f32 %v644, %v2917
        %v2919 = vand.u32 %v2918, 4294901760
        %2920 = vmatmul.f32.gmra.mxu0 %v2919
        %v2921 = vpop.f32.mrf.mxu0
        %v2922 = vadd.f32 %v2685, %v2921
        %v2923 = vand.u32 %v647, 4294901760
        %v2924 = vsub.f32 %v647, %v2923
        %v2925 = vand.u32 %v2924, 4294901760
        %2926 = vmatmul.f32.gmra.mxu0 %v2925
        %v2927 = vpop.f32.mrf.mxu0
        %v2928 = vadd.f32 %v2690, %v2927
        %v2929 = vand.u32 %v650, 4294901760
        %v2930 = vsub.f32 %v650, %v2929
        %v2931 = vand.u32 %v2930, 4294901760
        %2932 = vmatmul.f32.gmra.mxu0 %v2931
        %v2933 = vpop.f32.mrf.mxu0
        %v2934 = vadd.f32 %v2695, %v2933
        %v2935 = vand.u32 %v653, 4294901760
        %v2936 = vsub.f32 %v653, %v2935
        %v2937 = vand.u32 %v2936, 4294901760
        %2938 = vmatmul.f32.gmra.mxu0 %v2937
        %v2939 = vpop.f32.mrf.mxu0
        %v2940 = vadd.f32 %v2700, %v2939
        %v2941 = vand.u32 %v656, 4294901760
        %v2942 = vsub.f32 %v656, %v2941
        %v2943 = vand.u32 %v2942, 4294901760
        %2944 = vmatmul.f32.gmra.mxu0 %v2943
        %v2945 = vpop.f32.mrf.mxu0
        %v2946 = vadd.f32 %v2705, %v2945
        %2947 = vdwg.mxu0
        %2948 = vmatpush.msra.mxu0 0.0
        %2949 = vmatpush.msra.mxu0 0.0
        %2950 = vmatpush.msra.mxu0 0.0
        %2951 = vmatpush.msra.mxu0 0.0
        %2952 = vmatpush.msra.mxu0 0.0
        %2953 = vmatpush.msra.mxu0 0.0
        %2954 = vmatpush.msra.mxu0 0.0
        %2955 = vmatpush.msra.mxu0 0.0
        %v2956 = vand.u32 %v512, 4294901760
        %v2957 = vsub.f32 %v512, %v2956
        %v2958 = vand.u32 %v2957, 4294901760
        %2959 = vmatpush.msra.mxu0 %v2958
        %v2960 = vand.u32 %v510, 4294901760
        %v2961 = vsub.f32 %v510, %v2960
        %v2962 = vand.u32 %v2961, 4294901760
        %2963 = vmatpush.msra.mxu0 %v2962
        %v2964 = vand.u32 %v508, 4294901760
        %v2965 = vsub.f32 %v508, %v2964
        %v2966 = vand.u32 %v2965, 4294901760
        %2967 = vmatpush.msra.mxu0 %v2966
        %v2968 = vand.u32 %v506, 4294901760
        %v2969 = vsub.f32 %v506, %v2968
        %v2970 = vand.u32 %v2969, 4294901760
        %2971 = vmatpush.msra.mxu0 %v2970
        %v2972 = vand.u32 %v504, 4294901760
        %v2973 = vsub.f32 %v504, %v2972
        %v2974 = vand.u32 %v2973, 4294901760
        %2975 = vmatpush.msra.mxu0 %v2974
        %v2976 = vand.u32 %v502, 4294901760
        %v2977 = vsub.f32 %v502, %v2976
        %v2978 = vand.u32 %v2977, 4294901760
        %2979 = vmatpush.msra.mxu0 %v2978
        %v2980 = vand.u32 %v500, 4294901760
        %v2981 = vsub.f32 %v500, %v2980
        %v2982 = vand.u32 %v2981, 4294901760
        %2983 = vmatpush.msra.mxu0 %v2982
        %v2984 = vand.u32 %v498, 4294901760
        %v2985 = vsub.f32 %v498, %v2984
        %v2986 = vand.u32 %v2985, 4294901760
        %2987 = vmatpush.msra.mxu0 %v2986
        %v2988 = vand.u32 %v551, 4294901760
        %2989 = vmatmul.f32.gmra.mxu0 %v2988
        %v2990 = vpop.f32.mrf.mxu0
        %v2991 = vadd.f32 %v2736, %v2990
        %v2992 = vand.u32 %v554, 4294901760
        %2993 = vmatmul.f32.gmra.mxu0 %v2992
        %v2994 = vpop.f32.mrf.mxu0
        %v2995 = vadd.f32 %v2742, %v2994
        %v2996 = vand.u32 %v557, 4294901760
        %2997 = vmatmul.f32.gmra.mxu0 %v2996
        %v2998 = vpop.f32.mrf.mxu0
        %v2999 = vadd.f32 %v2748, %v2998
        %v3000 = vand.u32 %v560, 4294901760
        %3001 = vmatmul.f32.gmra.mxu0 %v3000
        %v3002 = vpop.f32.mrf.mxu0
        %v3003 = vadd.f32 %v2754, %v3002
        %v3004 = vand.u32 %v563, 4294901760
        %3005 = vmatmul.f32.gmra.mxu0 %v3004
        %v3006 = vpop.f32.mrf.mxu0
        %v3007 = vadd.f32 %v2760, %v3006
        %v3008 = vand.u32 %v566, 4294901760
        %3009 = vmatmul.f32.gmra.mxu0 %v3008
        %v3010 = vpop.f32.mrf.mxu0
        %v3011 = vadd.f32 %v2766, %v3010
        %v3012 = vand.u32 %v569, 4294901760
        %3013 = vmatmul.f32.gmra.mxu0 %v3012
        %v3014 = vpop.f32.mrf.mxu0
        %v3015 = vadd.f32 %v2772, %v3014
        %v3016 = vand.u32 %v572, 4294901760
        %3017 = vmatmul.f32.gmra.mxu0 %v3016
        %v3018 = vpop.f32.mrf.mxu0
        %v3019 = vadd.f32 %v2778, %v3018
        %v3020 = vand.u32 %v575, 4294901760
        %3021 = vmatmul.f32.gmra.mxu0 %v3020
        %v3022 = vpop.f32.mrf.mxu0
        %v3023 = vadd.f32 %v2784, %v3022
        %v3024 = vand.u32 %v578, 4294901760
        %3025 = vmatmul.f32.gmra.mxu0 %v3024
        %v3026 = vpop.f32.mrf.mxu0
        %v3027 = vadd.f32 %v2790, %v3026
        %v3028 = vand.u32 %v581, 4294901760
        %3029 = vmatmul.f32.gmra.mxu0 %v3028
        %v3030 = vpop.f32.mrf.mxu0
        %v3031 = vadd.f32 %v2796, %v3030
        %v3032 = vand.u32 %v584, 4294901760
        %3033 = vmatmul.f32.gmra.mxu0 %v3032
        %v3034 = vpop.f32.mrf.mxu0
        %v3035 = vadd.f32 %v2802, %v3034
        %v3036 = vand.u32 %v587, 4294901760
        %3037 = vmatmul.f32.gmra.mxu0 %v3036
        %v3038 = vpop.f32.mrf.mxu0
        %v3039 = vadd.f32 %v2808, %v3038
        %v3040 = vand.u32 %v590, 4294901760
        %3041 = vmatmul.f32.gmra.mxu0 %v3040
        %v3042 = vpop.f32.mrf.mxu0
        %v3043 = vadd.f32 %v2814, %v3042
        %v3044 = vand.u32 %v593, 4294901760
        %3045 = vmatmul.f32.gmra.mxu0 %v3044
        %v3046 = vpop.f32.mrf.mxu0
        %v3047 = vadd.f32 %v2820, %v3046
        %v3048 = vand.u32 %v596, 4294901760
        %3049 = vmatmul.f32.gmra.mxu0 %v3048
        %v3050 = vpop.f32.mrf.mxu0
        %v3051 = vadd.f32 %v2826, %v3050
        %v3052 = vand.u32 %v599, 4294901760
        %3053 = vmatmul.f32.gmra.mxu0 %v3052
        %v3054 = vpop.f32.mrf.mxu0
        %v3055 = vadd.f32 %v2832, %v3054
        %v3056 = vand.u32 %v602, 4294901760
        %3057 = vmatmul.f32.gmra.mxu0 %v3056
        %v3058 = vpop.f32.mrf.mxu0
        %v3059 = vadd.f32 %v2838, %v3058
        %v3060 = vand.u32 %v605, 4294901760
        %3061 = vmatmul.f32.gmra.mxu0 %v3060
        %v3062 = vpop.f32.mrf.mxu0
        %v3063 = vadd.f32 %v2844, %v3062
        %v3064 = vand.u32 %v608, 4294901760
        %3065 = vmatmul.f32.gmra.mxu0 %v3064
        %v3066 = vpop.f32.mrf.mxu0
        %v3067 = vadd.f32 %v2850, %v3066
        %v3068 = vand.u32 %v611, 4294901760
        %3069 = vmatmul.f32.gmra.mxu0 %v3068
        %v3070 = vpop.f32.mrf.mxu0
        %v3071 = vadd.f32 %v2856, %v3070
        %v3072 = vand.u32 %v614, 4294901760
        %3073 = vmatmul.f32.gmra.mxu0 %v3072
        %v3074 = vpop.f32.mrf.mxu0
        %v3075 = vadd.f32 %v2862, %v3074
        %v3076 = vand.u32 %v617, 4294901760
        %3077 = vmatmul.f32.gmra.mxu0 %v3076
        %v3078 = vpop.f32.mrf.mxu0
        %v3079 = vadd.f32 %v2868, %v3078
        %v3080 = vand.u32 %v620, 4294901760
        %3081 = vmatmul.f32.gmra.mxu0 %v3080
        %v3082 = vpop.f32.mrf.mxu0
        %v3083 = vadd.f32 %v2874, %v3082
        %v3084 = vand.u32 %v623, 4294901760
        %3085 = vmatmul.f32.gmra.mxu0 %v3084
        %v3086 = vpop.f32.mrf.mxu0
        %v3087 = vadd.f32 %v2880, %v3086
        %v3088 = vand.u32 %v626, 4294901760
        %3089 = vmatmul.f32.gmra.mxu0 %v3088
        %v3090 = vpop.f32.mrf.mxu0
        %v3091 = vadd.f32 %v2886, %v3090
        %v3092 = vand.u32 %v629, 4294901760
        %3093 = vmatmul.f32.gmra.mxu0 %v3092
        %v3094 = vpop.f32.mrf.mxu0
        %v3095 = vadd.f32 %v2892, %v3094
        %v3096 = vand.u32 %v632, 4294901760
        %3097 = vmatmul.f32.gmra.mxu0 %v3096
        %v3098 = vpop.f32.mrf.mxu0
        %v3099 = vadd.f32 %v2898, %v3098
        %v3100 = vand.u32 %v635, 4294901760
        %3101 = vmatmul.f32.gmra.mxu0 %v3100
        %v3102 = vpop.f32.mrf.mxu0
        %v3103 = vadd.f32 %v2904, %v3102
        %v3104 = vand.u32 %v638, 4294901760
        %3105 = vmatmul.f32.gmra.mxu0 %v3104
        %v3106 = vpop.f32.mrf.mxu0
        %v3107 = vadd.f32 %v2910, %v3106
        %v3108 = vand.u32 %v641, 4294901760
        %3109 = vmatmul.f32.gmra.mxu0 %v3108
        %v3110 = vpop.f32.mrf.mxu0
        %v3111 = vadd.f32 %v2916, %v3110
        %v3112 = vand.u32 %v644, 4294901760
        %3113 = vmatmul.f32.gmra.mxu0 %v3112
        %v3114 = vpop.f32.mrf.mxu0
        %v3115 = vadd.f32 %v2922, %v3114
        %v3116 = vand.u32 %v647, 4294901760
        %3117 = vmatmul.f32.gmra.mxu0 %v3116
        %v3118 = vpop.f32.mrf.mxu0
        %v3119 = vadd.f32 %v2928, %v3118
        %v3120 = vand.u32 %v650, 4294901760
        %3121 = vmatmul.f32.gmra.mxu0 %v3120
        %v3122 = vpop.f32.mrf.mxu0
        %v3123 = vadd.f32 %v2934, %v3122
        %v3124 = vand.u32 %v653, 4294901760
        %3125 = vmatmul.f32.gmra.mxu0 %v3124
        %v3126 = vpop.f32.mrf.mxu0
        %v3127 = vadd.f32 %v2940, %v3126
        %v3128 = vand.u32 %v656, 4294901760
        %3129 = vmatmul.f32.gmra.mxu0 %v3128
        %v3130 = vpop.f32.mrf.mxu0
        %v3131 = vadd.f32 %v2946, %v3130
        %3132 = vdwg.mxu0
        %3133 = vmatpush.msra.mxu0 0.0
        %3134 = vmatpush.msra.mxu0 0.0
        %3135 = vmatpush.msra.mxu0 0.0
        %3136 = vmatpush.msra.mxu0 0.0
        %3137 = vmatpush.msra.mxu0 0.0
        %3138 = vmatpush.msra.mxu0 0.0
        %3139 = vmatpush.msra.mxu0 0.0
        %3140 = vmatpush.msra.mxu0 0.0
        %v3141 = vand.u32 %v512, 4294901760
        %3142 = vmatpush.msra.mxu0 %v3141
        %v3143 = vand.u32 %v510, 4294901760
        %3144 = vmatpush.msra.mxu0 %v3143
        %v3145 = vand.u32 %v508, 4294901760
        %3146 = vmatpush.msra.mxu0 %v3145
        %v3147 = vand.u32 %v506, 4294901760
        %3148 = vmatpush.msra.mxu0 %v3147
        %v3149 = vand.u32 %v504, 4294901760
        %3150 = vmatpush.msra.mxu0 %v3149
        %v3151 = vand.u32 %v502, 4294901760
        %3152 = vmatpush.msra.mxu0 %v3151
        %v3153 = vand.u32 %v500, 4294901760
        %3154 = vmatpush.msra.mxu0 %v3153
        %v3155 = vand.u32 %v498, 4294901760
        %3156 = vmatpush.msra.mxu0 %v3155
        %v3157 = vand.u32 %v551, 4294901760
        %3158 = vmatmul.f32.gmra.mxu0 %v3157
        %v3159 = vpop.f32.mrf.mxu0
        %v3160 = vadd.f32 %v2991, %v3159
        %v3161 = vand.u32 %v554, 4294901760
        %3162 = vmatmul.f32.gmra.mxu0 %v3161
        %v3163 = vpop.f32.mrf.mxu0
        %v3164 = vadd.f32 %v2995, %v3163
        %v3165 = vand.u32 %v557, 4294901760
        %3166 = vmatmul.f32.gmra.mxu0 %v3165
        %v3167 = vpop.f32.mrf.mxu0
        %v3168 = vadd.f32 %v2999, %v3167
        %v3169 = vand.u32 %v560, 4294901760
        %3170 = vmatmul.f32.gmra.mxu0 %v3169
        %v3171 = vpop.f32.mrf.mxu0
        %v3172 = vadd.f32 %v3003, %v3171
        %v3173 = vand.u32 %v563, 4294901760
        %3174 = vmatmul.f32.gmra.mxu0 %v3173
        %v3175 = vpop.f32.mrf.mxu0
        %v3176 = vadd.f32 %v3007, %v3175
        %v3177 = vand.u32 %v566, 4294901760
        %3178 = vmatmul.f32.gmra.mxu0 %v3177
        %v3179 = vpop.f32.mrf.mxu0
        %v3180 = vadd.f32 %v3011, %v3179
        %v3181 = vand.u32 %v569, 4294901760
        %3182 = vmatmul.f32.gmra.mxu0 %v3181
        %v3183 = vpop.f32.mrf.mxu0
        %v3184 = vadd.f32 %v3015, %v3183
        %v3185 = vand.u32 %v572, 4294901760
        %3186 = vmatmul.f32.gmra.mxu0 %v3185
        %v3187 = vpop.f32.mrf.mxu0
        %v3188 = vadd.f32 %v3019, %v3187
        %v3189 = vand.u32 %v575, 4294901760
        %3190 = vmatmul.f32.gmra.mxu0 %v3189
        %v3191 = vpop.f32.mrf.mxu0
        %v3192 = vadd.f32 %v3023, %v3191
        %v3193 = vand.u32 %v578, 4294901760
        %3194 = vmatmul.f32.gmra.mxu0 %v3193
        %v3195 = vpop.f32.mrf.mxu0
        %v3196 = vadd.f32 %v3027, %v3195
        %v3197 = vand.u32 %v581, 4294901760
        %3198 = vmatmul.f32.gmra.mxu0 %v3197
        %v3199 = vpop.f32.mrf.mxu0
        %v3200 = vadd.f32 %v3031, %v3199
        %v3201 = vand.u32 %v584, 4294901760
        %3202 = vmatmul.f32.gmra.mxu0 %v3201
        %v3203 = vpop.f32.mrf.mxu0
        %v3204 = vadd.f32 %v3035, %v3203
        %v3205 = vand.u32 %v587, 4294901760
        %3206 = vmatmul.f32.gmra.mxu0 %v3205
        %v3207 = vpop.f32.mrf.mxu0
        %v3208 = vadd.f32 %v3039, %v3207
        %v3209 = vand.u32 %v590, 4294901760
        %3210 = vmatmul.f32.gmra.mxu0 %v3209
        %v3211 = vpop.f32.mrf.mxu0
        %v3212 = vadd.f32 %v3043, %v3211
        %v3213 = vand.u32 %v593, 4294901760
        %3214 = vmatmul.f32.gmra.mxu0 %v3213
        %v3215 = vpop.f32.mrf.mxu0
        %v3216 = vadd.f32 %v3047, %v3215
        %v3217 = vand.u32 %v596, 4294901760
        %3218 = vmatmul.f32.gmra.mxu0 %v3217
        %v3219 = vpop.f32.mrf.mxu0
        %v3220 = vadd.f32 %v3051, %v3219
        %v3221 = vand.u32 %v599, 4294901760
        %3222 = vmatmul.f32.gmra.mxu0 %v3221
        %v3223 = vpop.f32.mrf.mxu0
        %v3224 = vadd.f32 %v3055, %v3223
        %v3225 = vand.u32 %v602, 4294901760
        %3226 = vmatmul.f32.gmra.mxu0 %v3225
        %v3227 = vpop.f32.mrf.mxu0
        %v3228 = vadd.f32 %v3059, %v3227
        %v3229 = vand.u32 %v605, 4294901760
        %3230 = vmatmul.f32.gmra.mxu0 %v3229
        %v3231 = vpop.f32.mrf.mxu0
        %v3232 = vadd.f32 %v3063, %v3231
        %v3233 = vand.u32 %v608, 4294901760
        %3234 = vmatmul.f32.gmra.mxu0 %v3233
        %v3235 = vpop.f32.mrf.mxu0
        %v3236 = vadd.f32 %v3067, %v3235
        %v3237 = vand.u32 %v611, 4294901760
        %3238 = vmatmul.f32.gmra.mxu0 %v3237
        %v3239 = vpop.f32.mrf.mxu0
        %v3240 = vadd.f32 %v3071, %v3239
        %v3241 = vand.u32 %v614, 4294901760
        %3242 = vmatmul.f32.gmra.mxu0 %v3241
        %v3243 = vpop.f32.mrf.mxu0
        %v3244 = vadd.f32 %v3075, %v3243
        %v3245 = vand.u32 %v617, 4294901760
        %3246 = vmatmul.f32.gmra.mxu0 %v3245
        %v3247 = vpop.f32.mrf.mxu0
        %v3248 = vadd.f32 %v3079, %v3247
        %v3249 = vand.u32 %v620, 4294901760
        %3250 = vmatmul.f32.gmra.mxu0 %v3249
        %v3251 = vpop.f32.mrf.mxu0
        %v3252 = vadd.f32 %v3083, %v3251
        %v3253 = vand.u32 %v623, 4294901760
        %3254 = vmatmul.f32.gmra.mxu0 %v3253
        %v3255 = vpop.f32.mrf.mxu0
        %v3256 = vadd.f32 %v3087, %v3255
        %v3257 = vand.u32 %v626, 4294901760
        %3258 = vmatmul.f32.gmra.mxu0 %v3257
        %v3259 = vpop.f32.mrf.mxu0
        %v3260 = vadd.f32 %v3091, %v3259
        %v3261 = vand.u32 %v629, 4294901760
        %3262 = vmatmul.f32.gmra.mxu0 %v3261
        %v3263 = vpop.f32.mrf.mxu0
        %v3264 = vadd.f32 %v3095, %v3263
        %v3265 = vand.u32 %v632, 4294901760
        %3266 = vmatmul.f32.gmra.mxu0 %v3265
        %v3267 = vpop.f32.mrf.mxu0
        %v3268 = vadd.f32 %v3099, %v3267
        %v3269 = vand.u32 %v635, 4294901760
        %3270 = vmatmul.f32.gmra.mxu0 %v3269
        %v3271 = vpop.f32.mrf.mxu0
        %v3272 = vadd.f32 %v3103, %v3271
        %v3273 = vand.u32 %v638, 4294901760
        %3274 = vmatmul.f32.gmra.mxu0 %v3273
        %v3275 = vpop.f32.mrf.mxu0
        %v3276 = vadd.f32 %v3107, %v3275
        %v3277 = vand.u32 %v641, 4294901760
        %3278 = vmatmul.f32.gmra.mxu0 %v3277
        %v3279 = vpop.f32.mrf.mxu0
        %v3280 = vadd.f32 %v3111, %v3279
        %v3281 = vand.u32 %v644, 4294901760
        %3282 = vmatmul.f32.gmra.mxu0 %v3281
        %v3283 = vpop.f32.mrf.mxu0
        %v3284 = vadd.f32 %v3115, %v3283
        %v3285 = vand.u32 %v647, 4294901760
        %3286 = vmatmul.f32.gmra.mxu0 %v3285
        %v3287 = vpop.f32.mrf.mxu0
        %v3288 = vadd.f32 %v3119, %v3287
        %v3289 = vand.u32 %v650, 4294901760
        %3290 = vmatmul.f32.gmra.mxu0 %v3289
        %v3291 = vpop.f32.mrf.mxu0
        %v3292 = vadd.f32 %v3123, %v3291
        %v3293 = vand.u32 %v653, 4294901760
        %3294 = vmatmul.f32.gmra.mxu0 %v3293
        %v3295 = vpop.f32.mrf.mxu0
        %v3296 = vadd.f32 %v3127, %v3295
        %v3297 = vand.u32 %v656, 4294901760
        %3298 = vmatmul.f32.gmra.mxu0 %v3297
        %v3299 = vpop.f32.mrf.mxu0
        %v3300 = vadd.f32 %v3131, %v3299
        %3301 = vdwg.mxu0
        %v3302 = vmul.f32 %v1838, %v1966
        %v3303 = vmul.f32 %v3160, %v3288
        %v3304 = vmul.f32 %v1842, %v1966
        %v3305 = vmul.f32 %v3164, %v3288
        %v3306 = vmul.f32 %v1846, %v1966
        %v3307 = vmul.f32 %v3168, %v3288
        %v3308 = vmul.f32 %v1850, %v1966
        %v3309 = vmul.f32 %v3172, %v3288
        %v3310 = vmul.f32 %v1854, %v1966
        %v3311 = vmul.f32 %v3176, %v3288
        %v3312 = vmul.f32 %v1858, %v1966
        %v3313 = vmul.f32 %v3180, %v3288
        %v3314 = vmul.f32 %v1862, %v1966
        %v3315 = vmul.f32 %v3184, %v3288
        %v3316 = vmul.f32 %v1866, %v1966
        %v3317 = vmul.f32 %v3188, %v3288
        %v3318 = vadd.f32 %v3302, 0.0
        %v3319 = vadd.f32 %v3303, 0.0
        %v3320 = vadd.f32 %v3304, 0.0
        %v3321 = vadd.f32 %v3305, 0.0
        %v3322 = vadd.f32 %v3306, 0.0
        %v3323 = vadd.f32 %v3307, 0.0
        %v3324 = vadd.f32 %v3308, 0.0
        %v3325 = vadd.f32 %v3309, 0.0
        %v3326 = vadd.f32 %v3310, 0.0
        %v3327 = vadd.f32 %v3311, 0.0
        %v3328 = vadd.f32 %v3312, 0.0
        %v3329 = vadd.f32 %v3313, 0.0
        %v3330 = vadd.f32 %v3314, 0.0
        %v3331 = vadd.f32 %v3315, 0.0
        %v3332 = vadd.f32 %v3316, 0.0
        %v3333 = vadd.f32 %v3317, 0.0
        %v3334 = vmul.f32 %v1870, %v1970
        %v3335 = vmul.f32 %v3192, %v3292
        %v3336 = vmul.f32 %v1874, %v1970
        %v3337 = vmul.f32 %v3196, %v3292
        %v3338 = vmul.f32 %v1878, %v1970
        %v3339 = vmul.f32 %v3200, %v3292
        %v3340 = vmul.f32 %v1882, %v1970
        %v3341 = vmul.f32 %v3204, %v3292
        %v3342 = vmul.f32 %v1886, %v1970
        %v3343 = vmul.f32 %v3208, %v3292
        %v3344 = vmul.f32 %v1890, %v1970
        %v3345 = vmul.f32 %v3212, %v3292
        %v3346 = vmul.f32 %v1894, %v1970
        %v3347 = vmul.f32 %v3216, %v3292
        %v3348 = vmul.f32 %v1898, %v1970
        %v3349 = vmul.f32 %v3220, %v3292
        %v3350 = vadd.f32 %v3318, %v3334
        %v3351 = vadd.f32 %v3319, %v3335
        %v3352 = vadd.f32 %v3320, %v3336
        %v3353 = vadd.f32 %v3321, %v3337
        %v3354 = vadd.f32 %v3322, %v3338
        %v3355 = vadd.f32 %v3323, %v3339
        %v3356 = vadd.f32 %v3324, %v3340
        %v3357 = vadd.f32 %v3325, %v3341
        %v3358 = vadd.f32 %v3326, %v3342
        %v3359 = vadd.f32 %v3327, %v3343
        %v3360 = vadd.f32 %v3328, %v3344
        %v3361 = vadd.f32 %v3329, %v3345
        %v3362 = vadd.f32 %v3330, %v3346
        %v3363 = vadd.f32 %v3331, %v3347
        %v3364 = vadd.f32 %v3332, %v3348
        %v3365 = vadd.f32 %v3333, %v3349
        %v3366 = vmul.f32 %v1902, %v1974
        %v3367 = vmul.f32 %v3224, %v3296
        %v3368 = vmul.f32 %v1906, %v1974
        %v3369 = vmul.f32 %v3228, %v3296
        %v3370 = vmul.f32 %v1910, %v1974
        %v3371 = vmul.f32 %v3232, %v3296
        %v3372 = vmul.f32 %v1914, %v1974
        %v3373 = vmul.f32 %v3236, %v3296
        %v3374 = vmul.f32 %v1918, %v1974
        %v3375 = vmul.f32 %v3240, %v3296
        %v3376 = vmul.f32 %v1922, %v1974
        %v3377 = vmul.f32 %v3244, %v3296
        %v3378 = vmul.f32 %v1926, %v1974
        %v3379 = vmul.f32 %v3248, %v3296
        %v3380 = vmul.f32 %v1930, %v1974
        %v3381 = vmul.f32 %v3252, %v3296
        %v3382 = vadd.f32 %v3350, %v3366
        %v3383 = vadd.f32 %v3351, %v3367
        %v3384 = vadd.f32 %v3352, %v3368
        %v3385 = vadd.f32 %v3353, %v3369
        %v3386 = vadd.f32 %v3354, %v3370
        %v3387 = vadd.f32 %v3355, %v3371
        %v3388 = vadd.f32 %v3356, %v3372
        %v3389 = vadd.f32 %v3357, %v3373
        %v3390 = vadd.f32 %v3358, %v3374
        %v3391 = vadd.f32 %v3359, %v3375
        %v3392 = vadd.f32 %v3360, %v3376
        %v3393 = vadd.f32 %v3361, %v3377
        %v3394 = vadd.f32 %v3362, %v3378
        %v3395 = vadd.f32 %v3363, %v3379
        %v3396 = vadd.f32 %v3364, %v3380
        %v3397 = vadd.f32 %v3365, %v3381
        %v3398 = vmul.f32 %v1934, %v1978
        %v3399 = vmul.f32 %v3256, %v3300
        %v3400 = vmul.f32 %v1938, %v1978
        %v3401 = vmul.f32 %v3260, %v3300
        %v3402 = vmul.f32 %v1942, %v1978
        %v3403 = vmul.f32 %v3264, %v3300
        %v3404 = vmul.f32 %v1946, %v1978
        %v3405 = vmul.f32 %v3268, %v3300
        %v3406 = vmul.f32 %v1950, %v1978
        %v3407 = vmul.f32 %v3272, %v3300
        %v3408 = vmul.f32 %v1954, %v1978
        %v3409 = vmul.f32 %v3276, %v3300
        %v3410 = vmul.f32 %v1958, %v1978
        %v3411 = vmul.f32 %v3280, %v3300
        %v3412 = vmul.f32 %v1962, %v1978
        %v3413 = vmul.f32 %v3284, %v3300
        %v3414 = vadd.f32 %v3382, %v3398
        %v3415 = vadd.f32 %v3383, %v3399
        %v3416 = vadd.f32 %v3384, %v3400
        %v3417 = vadd.f32 %v3385, %v3401
        %v3418 = vadd.f32 %v3386, %v3402
        %v3419 = vadd.f32 %v3387, %v3403
        %v3420 = vadd.f32 %v3388, %v3404
        %v3421 = vadd.f32 %v3389, %v3405
        %v3422 = vadd.f32 %v3390, %v3406
        %v3423 = vadd.f32 %v3391, %v3407
        %v3424 = vadd.f32 %v3392, %v3408
        %v3425 = vadd.f32 %v3393, %v3409
        %v3426 = vadd.f32 %v3394, %v3410
        %v3427 = vadd.f32 %v3395, %v3411
        %v3428 = vadd.f32 %v3396, %v3412
        %v3429 = vadd.f32 %v3397, %v3413
        %3430 = vst [vmem:[%s486] sm:$0xff] %v3414
        %3431 = vst [vmem:[%s486 + $0x8] sm:$0xff] %v3415
        %3432 = vst [vmem:[%s486 + $0x10] sm:$0xff] %v3416
        %3433 = vst [vmem:[%s486 + $0x18] sm:$0xff] %v3417
        %3434 = vst [vmem:[%s486 + $0x20] sm:$0xff] %v3418
        %3435 = vst [vmem:[%s486 + $0x28] sm:$0xff] %v3419
        %3436 = vst [vmem:[%s486 + $0x30] sm:$0xff] %v3420
        %3437 = vst [vmem:[%s486 + $0x38] sm:$0xff] %v3421
        %3438 = vst [vmem:[%s486 + $0x40] sm:$0xff] %v3422
        %3439 = vst [vmem:[%s486 + $0x48] sm:$0xff] %v3423
        %3440 = vst [vmem:[%s486 + $0x50] sm:$0xff] %v3424
        %3441 = vst [vmem:[%s486 + $0x58] sm:$0xff] %v3425
        %3442 = vst [vmem:[%s486 + $0x60] sm:$0xff] %v3426
        %3443 = vst [vmem:[%s486 + $0x68] sm:$0xff] %v3427
        %3444 = vst [vmem:[%s486 + $0x70] sm:$0xff] %v3428
        %3445 = vst [vmem:[%s486 + $0x78] sm:$0xff] %v3429
        %s3446 = sand.u32 %s87, 1
        %s3447 = scalar_lea.sflag [#allocation4], %s3446
        %s3448 = sand.u32 %s87, 1
        %s3449 = smul.addr %s3448, 128
        %s3450 = scalar_lea.vmem [#allocation3], %s3449
        // Predicated region
        $region95: #{rp_gaussian_pooling.1} parent=89 // pred_check
          %p3451 = pneg %p97
        $region96: #{rp_gaussian_pooling.1} parent=89 // pred_check_branch
          %3453 = sbr.rel (%p3451) target = $region98
        $region97: #{rp_gaussian_pooling.1} parent=89 // pred_region
          %s3454 = smul.u32 2, %s21
          %s3455 = ssub.s32 3, %s3454
          %p3456 = scmp.lt.s32.totalorder %s3455, 2
          %s3457 = scalar_select %p3456, %s3455, 2
          %s3458 = smul.u32 64, %s3457
          %s3459 = ssub.s32 128, %s3458
          %s3460 = sshll.u32 %s3459, 4
          %3461 = vsyncadd %s3447, %s3460
          %p3462 = scmp.ne.s32.totalorder 0, %s3458
          %s3463 = smul.addr %s20, 24
          %s3464 = sadd.s32 %s3454, %s3463
          %s3465 = smul.addr %s3464, 8
          %s3466 = scalar_lea.hbm %s2, %s3465
          %s3467 = smul.u32 %s3457, 8
          %s3468 = smul.u32 %s3467, 8
          %s3469 = sshll.u32 %s3450, 4
          %s3470 = int_to_ptr.vmem [resolvable:$true] %s3469
          %s3471 = sshll.u32 %s3466, 4
          %s3472 = int_to_ptr.hbm [resolvable:$true] %s3471
          %s3473 = sshll.u32 %s3468, 4
          %3477 = dma.vmem_to_hbm [thread:$0]  (%p3462), %s3470, %s3473, %s3472, %s3447, 256, 384, %s3467
        $region98: #{rp_gaussian_pooling.1} parent=89 // pred_fallthru
          _
      $region90: #{rp_gaussian_pooling.1} parent=5 // pred_fallthru
        _
      %p3478 = scmp.le.s32.totalorder 2, %s11
      // Predicated region
      $region99: #{rp_gaussian_pooling.1} parent=5 // pred_check
        %p3479 = pneg %p3478
      $region100: #{rp_gaussian_pooling.1} parent=5 // pred_check_branch
        %3481 = sbr.rel (%p3479) target = $region102
      $region101: #{rp_gaussian_pooling.1} parent=5 // pred_region
        %s3482 = ssub.s32 %s11, 2
        // Predicated region
        $region103: #{rp_gaussian_pooling.1} parent=101 // pred_check
          %p3483 = pneg %p103
        $region104: #{rp_gaussian_pooling.1} parent=101 // pred_check_branch
          %3485 = sbr.rel (%p3483) target = $region106
        $region105: #{rp_gaussian_pooling.1} parent=101 // pred_region
          %s3486 = sand.u32 %s88, 1
          %s3487 = scalar_lea.sflag [#allocation4], %s3486
          %s3488 = sand.u32 %s88, 1
          %s3489 = smul.addr %s3488, 128
          %s3490 = scalar_lea.vmem [#allocation3], %s3489
          %3492 = dma.done %s3487, 2048
        $region106: #{rp_gaussian_pooling.1} parent=101 // pred_fallthru
          _
      $region102: #{rp_gaussian_pooling.1} parent=5 // pred_fallthru
        _
    $region6: #{rp_gaussian_pooling.1} parent=1 // loop_footer
      %s15 = sadd.s32 1, %s11
    $region7: #{rp_gaussian_pooling.1} parent=1 // loop_footer_branch
      %10 = sbr.rel target = $region3
    $region8: #{rp_gaussian_pooling.1} parent=1 // loop_exit
      _
    %3493 = vsyncpa [#allocation4], 1
    %s3494 = scalar_lea.sflag [#allocation4], 1
    %3495 = vsyncpa %s3494, 1

</llo_original>
